<compile_context>
chip_gen: v7x
topology: tpu7x:2x2x1
jax: 0.10.0
libtpu: 0.0.40
codegen_flags: <defaults>
</compile_context>

<pallas_src>
import functools

import jax
import jax.numpy as jnp
from jax.experimental import pallas as pl
from jax.experimental.pallas import tpu as pltpu


# ----------------------------------------------------------------------------
# Tiling helpers
# ----------------------------------------------------------------------------
def _tile(total, desired, quantum):
    """Largest t <= max(desired, quantum) with total % t == 0 and t % quantum == 0.

    Falls back to `total` (full dim — always a legal BlockSpec dim)."""
    desired = max(quantum, min(total, desired))
    for t in range(desired, quantum - 1, -1):
        if total % t == 0 and t % quantum == 0:
            return t
    return total


# ----------------------------------------------------------------------------
# Encoder kernel: chain of 1x1-conv (matmul) + folded-BN + ReLU over a tile of
# (bt batch elems) x (nt points), then running max over the point tiles.
# ----------------------------------------------------------------------------
def encoder_kernel(x_ref, w1_ref, b1_ref, w2_ref, b2_ref, w3_ref, b3_ref,
                   w4_ref, b4_ref, w5_ref, b5_ref, out_ref):
    bt, nt, _ = x_ref.shape
    x = x_ref[...].reshape(bt * nt, 3)          # points as rows

    # Layer 1 (Cin=3): VPU, avoids a K=3-padded-to-128 MXU matmul.
    w1 = w1_ref[...]                            # (3, 64) f32
    h = (x[:, 0:1] * w1[0:1, :]
         + x[:, 1:2] * w1[1:2, :]
         + x[:, 2:3] * w1[2:3, :]
         + b1_ref[...])
    h = jnp.maximum(h, 0.0)                     # (bt*nt, 64) f32

    def lin_relu(h, w_ref, b_ref):
        w = w_ref[...]                          # bf16 weight
        y = jnp.dot(h.astype(w.dtype), w,
                    preferred_element_type=jnp.float32) + b_ref[...]
        return jnp.maximum(y, 0.0)

    h = lin_relu(h, w2_ref, b2_ref)             # (rows, 128)
    h = lin_relu(h, w3_ref, b3_ref)             # (rows, 128)
    h = lin_relu(h, w4_ref, b4_ref)             # (rows, 256)
    h = lin_relu(h, w5_ref, b5_ref)             # (rows, 512)

    m = jnp.max(h.reshape(bt, nt, 512), axis=1)  # (bt, 512) partial max

    r = pl.program_id(1)

    @pl.when(r == 0)
    def _():
        out_ref[...] = m

    @pl.when(r > 0)
    def _():
        out_ref[...] = jnp.maximum(out_ref[...], m)


# ----------------------------------------------------------------------------
# Decoder kernel: fc1+BN+ReLU -> fc2+BN+ReLU computed once per row tile into a
# VMEM scratch; fc3 computed per output-column tile.
# ----------------------------------------------------------------------------
def decoder_kernel(z_ref, w1_ref, b1_ref, w2_ref, b2_ref, w3_ref, b3_ref,
                   out_ref, h_ref):
    @pl.when(pl.program_id(1) == 0)
    def _():
        z = z_ref[...]                          # (bt, input_size) f32
        w1 = w1_ref[...]
        h = jnp.dot(z.astype(w1.dtype), w1,
                    preferred_element_type=jnp.float32) + b1_ref[...]
        h = jnp.maximum(h, 0.0)
        w2 = w2_ref[...]
        h = jnp.dot(h.astype(w2.dtype), w2,
                    preferred_element_type=jnp.float32) + b2_ref[...]
        h_ref[...] = jnp.maximum(h, 0.0)        # (bt, hidden) f32

    w3 = w3_ref[...]                            # (hidden, ct) bf16
    out_ref[...] = (jnp.dot(h_ref[...].astype(w3.dtype), w3,
                            preferred_element_type=jnp.float32) + b3_ref[...])


# ----------------------------------------------------------------------------
# Parameter init / BN folding (plain JAX glue)
# ----------------------------------------------------------------------------
def _linear_init(key, cin, cout):
    kw, kb = jax.random.split(key)
    w = jax.random.normal(kw, (cin, cout), jnp.float32) * 0.05
    b = jax.random.normal(kb, (cout,), jnp.float32) * 0.05
    return w, b


def _bn_init(key, c):
    kg, kb, km, kv = jax.random.split(key, 4)
    gamma = 1.0 + 0.1 * jax.random.normal(kg, (c,), jnp.float32)
    beta = 0.1 * jax.random.normal(kb, (c,), jnp.float32)
    mean = 0.1 * jax.random.normal(km, (c,), jnp.float32)
    var = jax.random.uniform(kv, (c,), jnp.float32, minval=0.5, maxval=1.5)
    return gamma, beta, mean, var


def _fold_bn(w, b, bn, eps=1e-5):
    gamma, beta, mean, var = bn
    scale = gamma / jnp.sqrt(var + eps)
    w_eff = w * scale[None, :]
    b_eff = b * scale + (beta - mean * scale)
    return w_eff, b_eff.reshape(1, -1)


def init_autoencoder_params(key, input_size, hidden_size, output_size,
                            mxu_dtype=jnp.bfloat16):
    keys = jax.random.split(key, 16)
    # Encoder: conv channels 3 -> 64 -> 128 -> 128 -> 256 -> 512, each with BN.
    enc_ch = [3, 64, 128, 128, 256, 512]
    enc = []
    for i in range(5):
        w, b = _linear_init(keys[i], enc_ch[i], enc_ch[i + 1])
        bn = _bn_init(keys[5 + i], enc_ch[i + 1])
        w_eff, b_eff = _fold_bn(w, b, bn)
        if i > 0:  # first layer stays f32 (runs on the VPU); MXU layers -> bf16
            w_eff = w_eff.astype(mxu_dtype)
        enc += [w_eff, b_eff]
    # Decoder: fc1 (+bn1), fc2 (+bn2), fc3 (no bn, bnorm_final=False).
    w1, b1 = _linear_init(keys[10], input_size, hidden_size)
    bn1 = _bn_init(keys[11], hidden_size)
    w2, b2 = _linear_init(keys[12], hidden_size, hidden_size)
    bn2 = _bn_init(keys[13], hidden_size)
    w3, b3 = _linear_init(keys[14], hidden_size, output_size)
    d1w, d1b = _fold_bn(w1, b1, bn1)
    d2w, d2b = _fold_bn(w2, b2, bn2)
    dec = [d1w.astype(mxu_dtype), d1b,
           d2w.astype(mxu_dtype), d2b,
           w3.astype(mxu_dtype), b3.reshape(1, -1)]
    return enc, dec


# ----------------------------------------------------------------------------
# Wrappers calling pallas_call
# ----------------------------------------------------------------------------
def encoder_forward(x_ncl, enc_params):
    """x_ncl: (B, 3, N) float32  ->  (B, 512) float32."""
    B, C, N = x_ncl.shape
    assert C == 3
    x = jnp.transpose(x_ncl, (0, 2, 1))  # (B, N, 3): points as matmul rows

    nt = _tile(N, 256, 8)                       # point-chunk per step
    bt = _tile(B, max(1, 2048 // nt), 8)        # batch elems per step
    grid = (B // bt, N // nt)

    in_specs = [pl.BlockSpec((bt, nt, 3), lambda i, r: (i, r, 0))]
    # Weights / biases: full blocks, constant index -> stay resident in VMEM.
    in_specs += [pl.BlockSpec(p.shape, lambda i, r: (0, 0)) for p in enc_params]

    out = pl.pallas_call(
        encoder_kernel,
        out_shape=jax.ShapeDtypeStruct((B, 512), jnp.float32),
        grid=grid,
        in_specs=in_specs,
        out_specs=pl.BlockSpec((bt, 512), lambda i, r: (i, 0)),
        compiler_params=pltpu.CompilerParams(
            dimension_semantics=("parallel", "arbitrary")),
    )(x, *enc_params)
    return out  # (B, 512)


def decoder_forward(z, dec_params, output_size):
    """z: (B, input_size) -> (B, 3, 2048) (matches x.view(-1, 3, 2048))."""
    B, input_size = z.shape
    hidden = dec_params[0].shape[1]
    assert output_size == 3 * 2048, (
        "final view(-1, 3, 2048) requires output_size == 6144")

    bt = _tile(B, 256, 8)                        # rows per step
    ct = _tile(output_size, 1024, 128)           # lane-dense fc3 column tile
    grid = (B // bt, output_size // ct)

    in_specs = [
        pl.BlockSpec((bt, input_size), lambda i, j: (i, 0)),      # z
        pl.BlockSpec((input_size, hidden), lambda i, j: (0, 0)),  # fc1 w
        pl.BlockSpec((1, hidden), lambda i, j: (0, 0)),           # fc1 b
        pl.BlockSpec((hidden, hidden), lambda i, j: (0, 0)),      # fc2 w
        pl.BlockSpec((1, hidden), lambda i, j: (0, 0)),           # fc2 b
        pl.BlockSpec((hidden, ct), lambda i, j: (0, j)),          # fc3 w block
        pl.BlockSpec((1, ct), lambda i, j: (0, j)),               # fc3 b block
    ]

    out = pl.pallas_call(
        decoder_kernel,
        out_shape=jax.ShapeDtypeStruct((B, output_size), jnp.float32),
        grid=grid,
        in_specs=in_specs,
        out_specs=pl.BlockSpec((bt, ct), lambda i, j: (i, j)),
        scratch_shapes=[pltpu.VMEM((bt, hidden), jnp.float32)],
        compiler_params=pltpu.CompilerParams(
            dimension_semantics=("parallel", "arbitrary")),
    )(z, *dec_params)
    return out.reshape(-1, 3, 2048)


def autoencoder_forward(x_ncl, enc_params, dec_params, output_size):
    z = encoder_forward(x_ncl, enc_params)
    return decoder_forward(z, dec_params, output_size)


# ----------------------------------------------------------------------------
if __name__ == "__main__":
    # Small shapes consistent with the module:
    #   encoder input is a point cloud (B, 3, N); latent is always 512;
    #   decoder output must be 3*2048 = 6144 for the final view(-1, 3, 2048).
    B, N = 2, 64
    input_size, hidden_size, output_size = 512, 256, 3 * 2048

    key = jax.random.PRNGKey(0)
    k_x, k_p = jax.random.split(key)
    x = jax.random.normal(k_x, (B, 3, N), jnp.float32)

    enc_params, dec_params = init_autoencoder_params(
        k_p, input_size, hidden_size, output_size)

    fwd = jax.jit(functools.partial(
        autoencoder_forward, output_size=output_size))
    y = fwd(x, enc_params, dec_params)
    jax.block_until_ready(y)

    assert y.shape == (B, 3, 2048), y.shape
    assert y.dtype == jnp.float32
    assert bool(jnp.all(jnp.isfinite(y)))
    print("KERNEL_OK")
</pallas_src>

<mosaic_0001>
module attributes {stable_mosaic.version = 11 : i64} {
  func.func @decoder_kernel(%arg0: i32, %arg1: i32, %arg2: memref<2x512xf32, #tpu.memory_space<vmem>>, %arg3: memref<512x256xbf16, #tpu.memory_space<vmem>>, %arg4: memref<1x256xf32, #tpu.memory_space<vmem>>, %arg5: memref<256x256xbf16, #tpu.memory_space<vmem>>, %arg6: memref<1x256xf32, #tpu.memory_space<vmem>>, %arg7: memref<256x1024xbf16, #tpu.memory_space<vmem>>, %arg8: memref<1x1024xf32, #tpu.memory_space<vmem>>, %arg9: memref<2x1024xf32, #tpu.memory_space<vmem>>, %arg10: memref<2x256xf32, #tpu.memory_space<vmem>>) attributes {dimension_semantics = [#tpu.dimension_semantics<parallel>, #tpu.dimension_semantics<arbitrary>], iteration_bounds = array<i64: 1, 6>, scalar_prefetch = 0 : i64, scratch_operands = 1 : i64, tpu.core_type = #tpu.core_type<tc>, window_params = [{transform_indices = @transform_0, window_bounds = array<i64: 2, 512>}, {pipeline_mode = #tpu.pipeline_mode<synchronous>, transform_indices = @transform_1, window_bounds = array<i64: 512, 256>}, {pipeline_mode = #tpu.pipeline_mode<synchronous>, transform_indices = @transform_2, window_bounds = array<i64: 1, 256>}, {pipeline_mode = #tpu.pipeline_mode<synchronous>, transform_indices = @transform_3, window_bounds = array<i64: 256, 256>}, {pipeline_mode = #tpu.pipeline_mode<synchronous>, transform_indices = @transform_4, window_bounds = array<i64: 1, 256>}, {transform_indices = @transform_5, window_bounds = array<i64: 256, 1024>}, {transform_indices = @transform_6, window_bounds = array<i64: 1, 1024>}, {transform_indices = @transform_7, window_bounds = array<i64: 2, 1024>}]} {
    %c0_i32 = arith.constant 0 : i32
    %0 = arith.cmpi eq, %arg1, %c0_i32 : i32
    %1 = arith.extui %0 : i1 to i32
    %c0_i32_0 = arith.constant 0 : i32
    %2 = arith.cmpi ne, %1, %c0_i32_0 : i32
    scf.if %2 {
      %c0_8 = arith.constant 0 : index
      %c0_9 = arith.constant 0 : index
      %11 = vector.load %arg2[%c0_8, %c0_9] : memref<2x512xf32, #tpu.memory_space<vmem>>, vector<2x512xf32>
      %c0_10 = arith.constant 0 : index
      %c0_11 = arith.constant 0 : index
      %12 = vector.load %arg3[%c0_10, %c0_11] : memref<512x256xbf16, #tpu.memory_space<vmem>>, vector<512x256xbf16>
      %13 = arith.truncf %11 : vector<2x512xf32> to vector<2x512xbf16>
      %cst_12 = arith.constant dense<0.000000e+00> : vector<2x256xf32>
      %14 = tpu.matmul %13, %12, %cst_12 {dimension_numbers = #tpu.dot_dimension_numbers<[1], [0], [0], [1], [0, 0, 1, 1], [], []>} : vector<2x512xbf16>, vector<512x256xbf16>, vector<2x256xf32> -> vector<2x256xf32>
      %c0_13 = arith.constant 0 : index
      %c0_14 = arith.constant 0 : index
      %15 = vector.load %arg4[%c0_13, %c0_14] : memref<1x256xf32, #tpu.memory_space<vmem>>, vector<1x256xf32>
      %16 = vector.broadcast %15 : vector<1x256xf32> to vector<2x256xf32>
      %17 = arith.addf %14, %16 : vector<2x256xf32>
      %cst_15 = arith.constant 0.000000e+00 : f32
      %18 = vector.broadcast %cst_15 : f32 to vector<2x256xf32>
      %19 = arith.maximumf %17, %18 : vector<2x256xf32>
      %c0_16 = arith.constant 0 : index
      %c0_17 = arith.constant 0 : index
      %20 = vector.load %arg5[%c0_16, %c0_17] : memref<256x256xbf16, #tpu.memory_space<vmem>>, vector<256x256xbf16>
      %21 = arith.truncf %19 : vector<2x256xf32> to vector<2x256xbf16>
      %cst_18 = arith.constant dense<0.000000e+00> : vector<2x256xf32>
      %22 = tpu.matmul %21, %20, %cst_18 {dimension_numbers = #tpu.dot_dimension_numbers<[1], [0], [0], [1], [0, 0, 1, 1], [], []>} : vector<2x256xbf16>, vector<256x256xbf16>, vector<2x256xf32> -> vector<2x256xf32>
      %c0_19 = arith.constant 0 : index
      %c0_20 = arith.constant 0 : index
      %23 = vector.load %arg6[%c0_19, %c0_20] : memref<1x256xf32, #tpu.memory_space<vmem>>, vector<1x256xf32>
      %24 = vector.broadcast %23 : vector<1x256xf32> to vector<2x256xf32>
      %25 = arith.addf %22, %24 : vector<2x256xf32>
      %cst_21 = arith.constant 0.000000e+00 : f32
      %26 = vector.broadcast %cst_21 : f32 to vector<2x256xf32>
      %27 = arith.maximumf %25, %26 : vector<2x256xf32>
      %c0_22 = arith.constant 0 : index
      %c0_23 = arith.constant 0 : index
      %28 = vector.load %arg10[%c0_22, %c0_23] : memref<2x256xf32, #tpu.memory_space<vmem>>, vector<2x256xf32>
      tpu.vector_store %arg10[%c0_22, %c0_23], %27 {strides = array<i32>} : memref<2x256xf32, #tpu.memory_space<vmem>>, vector<2x256xf32>,
    } else {
    }
    %c0 = arith.constant 0 : index
    %c0_1 = arith.constant 0 : index
    %3 = vector.load %arg7[%c0, %c0_1] : memref<256x1024xbf16, #tpu.memory_space<vmem>>, vector<256x1024xbf16>
    %c0_2 = arith.constant 0 : index
    %c0_3 = arith.constant 0 : index
    %4 = vector.load %arg10[%c0_2, %c0_3] : memref<2x256xf32, #tpu.memory_space<vmem>>, vector<2x256xf32>
    %5 = arith.truncf %4 : vector<2x256xf32> to vector<2x256xbf16>
    %cst = arith.constant dense<0.000000e+00> : vector<2x1024xf32>
    %6 = tpu.matmul %5, %3, %cst {dimension_numbers = #tpu.dot_dimension_numbers<[1], [0], [0], [1], [0, 0, 1, 1], [], []>} : vector<2x256xbf16>, vector<256x1024xbf16>, vector<2x1024xf32> -> vector<2x1024xf32>
    %c0_4 = arith.constant 0 : index
    %c0_5 = arith.constant 0 : index
    %7 = vector.load %arg8[%c0_4, %c0_5] : memref<1x1024xf32, #tpu.memory_space<vmem>>, vector<1x1024xf32>
    %8 = vector.broadcast %7 : vector<1x1024xf32> to vector<2x1024xf32>
    %9 = arith.addf %6, %8 : vector<2x1024xf32>
    %c0_6 = arith.constant 0 : index
    %c0_7 = arith.constant 0 : index
    %10 = vector.load %arg9[%c0_6, %c0_7] : memref<2x1024xf32, #tpu.memory_space<vmem>>, vector<2x1024xf32>
    tpu.vector_store %arg9[%c0_6, %c0_7], %9 {strides = array<i32>} : memref<2x1024xf32, #tpu.memory_space<vmem>>, vector<2x1024xf32>,
    return
  }
  func.func @transform_0(%arg0: i32, %arg1: i32) -> (i32, i32) {
    %c0_i32 = arith.constant 0 : i32
    %c0_i32_0 = arith.constant 0 : i32
    return %arg0, %c0_i32 : i32, i32
  }
  func.func @transform_1(%arg0: i32, %arg1: i32) -> (i32, i32) {
    %c0_i32 = arith.constant 0 : i32
    %c0_i32_0 = arith.constant 0 : i32
    %c0_i32_1 = arith.constant 0 : i32
    return %c0_i32, %c0_i32_0 : i32, i32
  }
  func.func @transform_2(%arg0: i32, %arg1: i32) -> (i32, i32) {
    %c0_i32 = arith.constant 0 : i32
    %c0_i32_0 = arith.constant 0 : i32
    %c0_i32_1 = arith.constant 0 : i32
    return %c0_i32, %c0_i32_0 : i32, i32
  }
  func.func @transform_3(%arg0: i32, %arg1: i32) -> (i32, i32) {
    %c0_i32 = arith.constant 0 : i32
    %c0_i32_0 = arith.constant 0 : i32
    %c0_i32_1 = arith.constant 0 : i32
    return %c0_i32, %c0_i32_0 : i32, i32
  }
  func.func @transform_4(%arg0: i32, %arg1: i32) -> (i32, i32) {
    %c0_i32 = arith.constant 0 : i32
    %c0_i32_0 = arith.constant 0 : i32
    %c0_i32_1 = arith.constant 0 : i32
    return %c0_i32, %c0_i32_0 : i32, i32
  }
  func.func @transform_5(%arg0: i32, %arg1: i32) -> (i32, i32) {
    %c0_i32 = arith.constant 0 : i32
    %c0_i32_0 = arith.constant 0 : i32
    return %c0_i32, %arg1 : i32, i32
  }
  func.func @transform_6(%arg0: i32, %arg1: i32) -> (i32, i32) {
    %c0_i32 = arith.constant 0 : i32
    %c0_i32_0 = arith.constant 0 : i32
    return %c0_i32, %arg1 : i32, i32
  }
  func.func @transform_7(%arg0: i32, %arg1: i32) -> (i32, i32) {
    %c0_i32 = arith.constant 0 : i32
    return %arg0, %arg1 : i32, i32
  }
}

module attributes {stable_mosaic.version = 11 : i64} {
  func.func @encoder_kernel(%arg0: i32, %arg1: i32, %arg2: memref<2x64x3xf32, #tpu.memory_space<vmem>>, %arg3: memref<3x64xf32, #tpu.memory_space<vmem>>, %arg4: memref<1x64xf32, #tpu.memory_space<vmem>>, %arg5: memref<64x128xbf16, #tpu.memory_space<vmem>>, %arg6: memref<1x128xf32, #tpu.memory_space<vmem>>, %arg7: memref<128x128xbf16, #tpu.memory_space<vmem>>, %arg8: memref<1x128xf32, #tpu.memory_space<vmem>>, %arg9: memref<128x256xbf16, #tpu.memory_space<vmem>>, %arg10: memref<1x256xf32, #tpu.memory_space<vmem>>, %arg11: memref<256x512xbf16, #tpu.memory_space<vmem>>, %arg12: memref<1x512xf32, #tpu.memory_space<vmem>>, %arg13: memref<2x512xf32, #tpu.memory_space<vmem>>) attributes {dimension_semantics = [#tpu.dimension_semantics<parallel>, #tpu.dimension_semantics<arbitrary>], iteration_bounds = array<i64: 1, 1>, scalar_prefetch = 0 : i64, scratch_operands = 0 : i64, tpu.core_type = #tpu.core_type<tc>, window_params = [{transform_indices = @transform_0, window_bounds = array<i64: 2, 64, 3>}, {pipeline_mode = #tpu.pipeline_mode<synchronous>, transform_indices = @transform_1, window_bounds = array<i64: 3, 64>}, {pipeline_mode = #tpu.pipeline_mode<synchronous>, transform_indices = @transform_2, window_bounds = array<i64: 1, 64>}, {pipeline_mode = #tpu.pipeline_mode<synchronous>, transform_indices = @transform_3, window_bounds = array<i64: 64, 128>}, {pipeline_mode = #tpu.pipeline_mode<synchronous>, transform_indices = @transform_4, window_bounds = array<i64: 1, 128>}, {pipeline_mode = #tpu.pipeline_mode<synchronous>, transform_indices = @transform_5, window_bounds = array<i64: 128, 128>}, {pipeline_mode = #tpu.pipeline_mode<synchronous>, transform_indices = @transform_6, window_bounds = array<i64: 1, 128>}, {pipeline_mode = #tpu.pipeline_mode<synchronous>, transform_indices = @transform_7, window_bounds = array<i64: 128, 256>}, {pipeline_mode = #tpu.pipeline_mode<synchronous>, transform_indices = @transform_8, window_bounds = array<i64: 1, 256>}, {pipeline_mode = #tpu.pipeline_mode<synchronous>, transform_indices = @transform_9, window_bounds = array<i64: 256, 512>}, {pipeline_mode = #tpu.pipeline_mode<synchronous>, transform_indices = @transform_10, window_bounds = array<i64: 1, 512>}, {transform_indices = @transform_11, window_bounds = array<i64: 2, 512>}]} {
    %c0 = arith.constant 0 : index
    %c0_0 = arith.constant 0 : index
    %c0_1 = arith.constant 0 : index
    %0 = vector.load %arg2[%c0, %c0_0, %c0_1] : memref<2x64x3xf32, #tpu.memory_space<vmem>>, vector<2x64x3xf32>
    %1 = vector.shape_cast %0 : vector<2x64x3xf32> to vector<128x3xf32>
    %c0_2 = arith.constant 0 : index
    %c0_3 = arith.constant 0 : index
    %2 = vector.load %arg3[%c0_2, %c0_3] : memref<3x64xf32, #tpu.memory_space<vmem>>, vector<3x64xf32>
    %3 = vector.extract_strided_slice %1 {offsets = [0, 0], sizes = [128, 1], strides = [1, 1]} : vector<128x3xf32> to vector<128x1xf32>
    %4 = vector.extract_strided_slice %2 {offsets = [0, 0], sizes = [1, 64], strides = [1, 1]} : vector<3x64xf32> to vector<1x64xf32>
    %5 = vector.broadcast %3 : vector<128x1xf32> to vector<128x64xf32>
    %6 = vector.broadcast %4 : vector<1x64xf32> to vector<128x64xf32>
    %7 = arith.mulf %5, %6 : vector<128x64xf32>
    %8 = vector.extract_strided_slice %1 {offsets = [0, 1], sizes = [128, 1], strides = [1, 1]} : vector<128x3xf32> to vector<128x1xf32>
    %9 = vector.extract_strided_slice %2 {offsets = [1, 0], sizes = [1, 64], strides = [1, 1]} : vector<3x64xf32> to vector<1x64xf32>
    %10 = vector.broadcast %8 : vector<128x1xf32> to vector<128x64xf32>
    %11 = vector.broadcast %9 : vector<1x64xf32> to vector<128x64xf32>
    %12 = arith.mulf %10, %11 : vector<128x64xf32>
    %13 = arith.addf %7, %12 : vector<128x64xf32>
    %14 = vector.extract_strided_slice %1 {offsets = [0, 2], sizes = [128, 1], strides = [1, 1]} : vector<128x3xf32> to vector<128x1xf32>
    %15 = vector.extract_strided_slice %2 {offsets = [2, 0], sizes = [1, 64], strides = [1, 1]} : vector<3x64xf32> to vector<1x64xf32>
    %16 = vector.broadcast %14 : vector<128x1xf32> to vector<128x64xf32>
    %17 = vector.broadcast %15 : vector<1x64xf32> to vector<128x64xf32>
    %18 = arith.mulf %16, %17 : vector<128x64xf32>
    %19 = arith.addf %13, %18 : vector<128x64xf32>
    %c0_4 = arith.constant 0 : index
    %c0_5 = arith.constant 0 : index
    %20 = vector.load %arg4[%c0_4, %c0_5] : memref<1x64xf32, #tpu.memory_space<vmem>>, vector<1x64xf32>
    %21 = vector.broadcast %20 : vector<1x64xf32> to vector<128x64xf32>
    %22 = arith.addf %19, %21 : vector<128x64xf32>
    %cst = arith.constant 0.000000e+00 : f32
    %23 = vector.broadcast %cst : f32 to vector<128x64xf32>
    %24 = arith.maximumf %22, %23 : vector<128x64xf32>
    %c0_6 = arith.constant 0 : index
    %c0_7 = arith.constant 0 : index
    %25 = vector.load %arg5[%c0_6, %c0_7] : memref<64x128xbf16, #tpu.memory_space<vmem>>, vector<64x128xbf16>
    %26 = arith.truncf %24 : vector<128x64xf32> to vector<128x64xbf16>
    %cst_8 = arith.constant dense<0.000000e+00> : vector<128x128xf32>
    %27 = tpu.matmul %26, %25, %cst_8 {dimension_numbers = #tpu.dot_dimension_numbers<[1], [0], [0], [1], [0, 0, 1, 1], [], []>} : vector<128x64xbf16>, vector<64x128xbf16>, vector<128x128xf32> -> vector<128x128xf32>
    %c0_9 = arith.constant 0 : index
    %c0_10 = arith.constant 0 : index
    %28 = vector.load %arg6[%c0_9, %c0_10] : memref<1x128xf32, #tpu.memory_space<vmem>>, vector<1x128xf32>
    %29 = vector.broadcast %28 : vector<1x128xf32> to vector<128x128xf32>
    %30 = arith.addf %27, %29 : vector<128x128xf32>
    %cst_11 = arith.constant 0.000000e+00 : f32
    %31 = vector.broadcast %cst_11 : f32 to vector<128x128xf32>
    %32 = arith.maximumf %30, %31 : vector<128x128xf32>
    %c0_12 = arith.constant 0 : index
    %c0_13 = arith.constant 0 : index
    %33 = vector.load %arg7[%c0_12, %c0_13] : memref<128x128xbf16, #tpu.memory_space<vmem>>, vector<128x128xbf16>
    %34 = arith.truncf %32 : vector<128x128xf32> to vector<128x128xbf16>
    %cst_14 = arith.constant dense<0.000000e+00> : vector<128x128xf32>
    %35 = tpu.matmul %34, %33, %cst_14 {dimension_numbers = #tpu.dot_dimension_numbers<[1], [0], [0], [1], [0, 0, 1, 1], [], []>} : vector<128x128xbf16>, vector<128x128xbf16>, vector<128x128xf32> -> vector<128x128xf32>
    %c0_15 = arith.constant 0 : index
    %c0_16 = arith.constant 0 : index
    %36 = vector.load %arg8[%c0_15, %c0_16] : memref<1x128xf32, #tpu.memory_space<vmem>>, vector<1x128xf32>
    %37 = vector.broadcast %36 : vector<1x128xf32> to vector<128x128xf32>
    %38 = arith.addf %35, %37 : vector<128x128xf32>
    %cst_17 = arith.constant 0.000000e+00 : f32
    %39 = vector.broadcast %cst_17 : f32 to vector<128x128xf32>
    %40 = arith.maximumf %38, %39 : vector<128x128xf32>
    %c0_18 = arith.constant 0 : index
    %c0_19 = arith.constant 0 : index
    %41 = vector.load %arg9[%c0_18, %c0_19] : memref<128x256xbf16, #tpu.memory_space<vmem>>, vector<128x256xbf16>
    %42 = arith.truncf %40 : vector<128x128xf32> to vector<128x128xbf16>
    %cst_20 = arith.constant dense<0.000000e+00> : vector<128x256xf32>
    %43 = tpu.matmul %42, %41, %cst_20 {dimension_numbers = #tpu.dot_dimension_numbers<[1], [0], [0], [1], [0, 0, 1, 1], [], []>} : vector<128x128xbf16>, vector<128x256xbf16>, vector<128x256xf32> -> vector<128x256xf32>
    %c0_21 = arith.constant 0 : index
    %c0_22 = arith.constant 0 : index
    %44 = vector.load %arg10[%c0_21, %c0_22] : memref<1x256xf32, #tpu.memory_space<vmem>>, vector<1x256xf32>
    %45 = vector.broadcast %44 : vector<1x256xf32> to vector<128x256xf32>
    %46 = arith.addf %43, %45 : vector<128x256xf32>
    %cst_23 = arith.constant 0.000000e+00 : f32
    %47 = vector.broadcast %cst_23 : f32 to vector<128x256xf32>
    %48 = arith.maximumf %46, %47 : vector<128x256xf32>
    %c0_24 = arith.constant 0 : index
    %c0_25 = arith.constant 0 : index
    %49 = vector.load %arg11[%c0_24, %c0_25] : memref<256x512xbf16, #tpu.memory_space<vmem>>, vector<256x512xbf16>
    %50 = arith.truncf %48 : vector<128x256xf32> to vector<128x256xbf16>
    %cst_26 = arith.constant dense<0.000000e+00> : vector<128x512xf32>
    %51 = tpu.matmul %50, %49, %cst_26 {dimension_numbers = #tpu.dot_dimension_numbers<[1], [0], [0], [1], [0, 0, 1, 1], [], []>} : vector<128x256xbf16>, vector<256x512xbf16>, vector<128x512xf32> -> vector<128x512xf32>
    %c0_27 = arith.constant 0 : index
    %c0_28 = arith.constant 0 : index
    %52 = vector.load %arg12[%c0_27, %c0_28] : memref<1x512xf32, #tpu.memory_space<vmem>>, vector<1x512xf32>
    %53 = vector.broadcast %52 : vector<1x512xf32> to vector<128x512xf32>
    %54 = arith.addf %51, %53 : vector<128x512xf32>
    %cst_29 = arith.constant 0.000000e+00 : f32
    %55 = vector.broadcast %cst_29 : f32 to vector<128x512xf32>
    %56 = arith.maximumf %54, %55 : vector<128x512xf32>
    %57 = vector.shape_cast %56 : vector<128x512xf32> to vector<2x64x512xf32>
    %cst_30 = arith.constant dense<0xFF800000> : vector<2x512xf32>
    %58 = vector.multi_reduction <maximumf>, %57, %cst_30 [1] : vector<2x64x512xf32> to vector<2x512xf32>
    %c0_i32 = arith.constant 0 : i32
    %59 = arith.cmpi eq, %arg1, %c0_i32 : i32
    %60 = arith.extui %59 : i1 to i32
    %c0_i32_31 = arith.constant 0 : i32
    %61 = arith.cmpi ne, %60, %c0_i32_31 : i32
    scf.if %61 {
      %c0_34 = arith.constant 0 : index
      %c0_35 = arith.constant 0 : index
      %65 = vector.load %arg13[%c0_34, %c0_35] : memref<2x512xf32, #tpu.memory_space<vmem>>, vector<2x512xf32>
      tpu.vector_store %arg13[%c0_34, %c0_35], %58 {strides = array<i32>} : memref<2x512xf32, #tpu.memory_space<vmem>>, vector<2x512xf32>,
    } else {
    }
    %c0_i32_32 = arith.constant 0 : i32
    %62 = arith.cmpi sgt, %arg1, %c0_i32_32 : i32
    %63 = arith.extui %62 : i1 to i32
    %c0_i32_33 = arith.constant 0 : i32
    %64 = arith.cmpi ne, %63, %c0_i32_33 : i32
    scf.if %64 {
      %c0_34 = arith.constant 0 : index
      %c0_35 = arith.constant 0 : index
      %65 = vector.load %arg13[%c0_34, %c0_35] : memref<2x512xf32, #tpu.memory_space<vmem>>, vector<2x512xf32>
      %66 = arith.maximumf %65, %58 : vector<2x512xf32>
      %c0_36 = arith.constant 0 : index
      %c0_37 = arith.constant 0 : index
      %67 = vector.load %arg13[%c0_36, %c0_37] : memref<2x512xf32, #tpu.memory_space<vmem>>, vector<2x512xf32>
      tpu.vector_store %arg13[%c0_36, %c0_37], %66 {strides = array<i32>} : memref<2x512xf32, #tpu.memory_space<vmem>>, vector<2x512xf32>,
    } else {
    }
    return
  }
  func.func @transform_0(%arg0: i32, %arg1: i32) -> (i32, i32, i32) {
    %c0_i32 = arith.constant 0 : i32
    %c0_i32_0 = arith.constant 0 : i32
    return %arg0, %arg1, %c0_i32 : i32, i32, i32
  }
  func.func @transform_1(%arg0: i32, %arg1: i32) -> (i32, i32) {
    %c0_i32 = arith.constant 0 : i32
    %c0_i32_0 = arith.constant 0 : i32
    %c0_i32_1 = arith.constant 0 : i32
    return %c0_i32, %c0_i32_0 : i32, i32
  }
  func.func @transform_2(%arg0: i32, %arg1: i32) -> (i32, i32) {
    %c0_i32 = arith.constant 0 : i32
    %c0_i32_0 = arith.constant 0 : i32
    %c0_i32_1 = arith.constant 0 : i32
    return %c0_i32, %c0_i32_0 : i32, i32
  }
  func.func @transform_3(%arg0: i32, %arg1: i32) -> (i32, i32) {
    %c0_i32 = arith.constant 0 : i32
    %c0_i32_0 = arith.constant 0 : i32
    %c0_i32_1 = arith.constant 0 : i32
    return %c0_i32, %c0_i32_0 : i32, i32
  }
  func.func @transform_4(%arg0: i32, %arg1: i32) -> (i32, i32) {
    %c0_i32 = arith.constant 0 : i32
    %c0_i32_0 = arith.constant 0 : i32
    %c0_i32_1 = arith.constant 0 : i32
    return %c0_i32, %c0_i32_0 : i32, i32
  }
  func.func @transform_5(%arg0: i32, %arg1: i32) -> (i32, i32) {
    %c0_i32 = arith.constant 0 : i32
    %c0_i32_0 = arith.constant 0 : i32
    %c0_i32_1 = arith.constant 0 : i32
    return %c0_i32, %c0_i32_0 : i32, i32
  }
  func.func @transform_6(%arg0: i32, %arg1: i32) -> (i32, i32) {
    %c0_i32 = arith.constant 0 : i32
    %c0_i32_0 = arith.constant 0 : i32
    %c0_i32_1 = arith.constant 0 : i32
    return %c0_i32, %c0_i32_0 : i32, i32
  }
  func.func @transform_7(%arg0: i32, %arg1: i32) -> (i32, i32) {
    %c0_i32 = arith.constant 0 : i32
    %c0_i32_0 = arith.constant 0 : i32
    %c0_i32_1 = arith.constant 0 : i32
    return %c0_i32, %c0_i32_0 : i32, i32
  }
  func.func @transform_8(%arg0: i32, %arg1: i32) -> (i32, i32) {
    %c0_i32 = arith.constant 0 : i32
    %c0_i32_0 = arith.constant 0 : i32
    %c0_i32_1 = arith.constant 0 : i32
    return %c0_i32, %c0_i32_0 : i32, i32
  }
  func.func @transform_9(%arg0: i32, %arg1: i32) -> (i32, i32) {
    %c0_i32 = arith.constant 0 : i32
    %c0_i32_0 = arith.constant 0 : i32
    %c0_i32_1 = arith.constant 0 : i32
    return %c0_i32, %c0_i32_0 : i32, i32
  }
  func.func @transform_10(%arg0: i32, %arg1: i32) -> (i32, i32) {
    %c0_i32 = arith.constant 0 : i32
    %c0_i32_0 = arith.constant 0 : i32
    %c0_i32_1 = arith.constant 0 : i32
    return %c0_i32, %c0_i32_0 : i32, i32
  }
  func.func @transform_11(%arg0: i32, %arg1: i32) -> (i32, i32) {
    %c0_i32 = arith.constant 0 : i32
    %c0_i32_0 = arith.constant 0 : i32
    return %arg0, %c0_i32 : i32, i32
  }
}

</mosaic_0001>

<llo_original>
// kernel: autoencoder_forward.3
$region0: #{autoencoder_forward.3}
  #allocation0 [shape = 'u32[]', space=smem, size = 0x4, offset = 0x4, fixed_abs, tag = 'smem constant byte address 0x4 - core index']
  #allocation1 [shape = 'u32[144,128]{1,0:T(1,128)}', space=vmem, size = 0x12000, scoped, tag = 'internal scratch']
  #allocation2 [shape = 'f32[2,256]{1,0:T(2,128)}', space=vmem, size = 0x800, scoped, tag = 'scratch operand']
  %s0 = inlined_call_operand.vmem [shape: f32[2,512], index: 0, kind: input, shape index: {}]
  %s1 = inlined_call_operand.hbm [shape: bf16[512,256], index: 1, kind: input, shape index: {}]
  %s2 = inlined_call_operand.hbm [shape: f32[1,256], index: 2, kind: input, shape index: {}]
  %s3 = inlined_call_operand.hbm [shape: bf16[256,256], index: 3, kind: input, shape index: {}]
  %s4 = inlined_call_operand.hbm [shape: f32[1,256], index: 4, kind: input, shape index: {}]
  %s5 = inlined_call_operand.hbm [shape: bf16[256,6144], index: 5, kind: input, shape index: {}]
  %s6 = inlined_call_operand.hbm [shape: f32[1,6144], index: 6, kind: input, shape index: {}]
  %s7 = inlined_call_operand.hbm [shape: f32[2,6144], index: 7, kind: output, shape index: {}]
  %s8 = sld [smem:[#allocation0]]
  $region89: #{autoencoder_forward.3} parent=0
    _
  %s10 = ssub.s32 1, %s8
  %s11 = scalar_select 0, %s10, %s8
  $region1: #{autoencoder_forward.3} parent=0
    #allocation3 [shape = 'u8[262144]{0}', space=vmem, size = 0x40000, scoped, tag = 'input window, operand 1, single buffered']
    #allocation4 [shape = 's32[2]{0}', space=sflag, size = 0x8, scoped, tag = 'scoped memory for autoencoder_forward.3']
    #allocation5 [shape = 's32[2]{0}', space=sflag, size = 0x8, scoped, tag = 'scoped memory for autoencoder_forward.3']
    #allocation6 [shape = 'u8[1024]{0}', space=vmem, size = 0x400, scoped, tag = 'input window, operand 2, single buffered']
    #allocation7 [shape = 's32[1]{0}', space=sflag, size = 0x4, scoped, tag = 'scoped memory for autoencoder_forward.3']
    #allocation8 [shape = 'u8[131072]{0}', space=vmem, size = 0x20000, scoped, tag = 'input window, operand 3, single buffered']
    #allocation9 [shape = 'u8[1024]{0}', space=vmem, size = 0x400, scoped, tag = 'input window, operand 4, single buffered']
    #allocation10 [shape = 's32[1]{0}', space=sflag, size = 0x4, scoped, tag = 'scoped memory for autoencoder_forward.3']
    #allocation11 [shape = 'u8[1048576]{0}', space=vmem, size = 0x100000, scoped, tag = 'input window, operand 5']
    #allocation12 [shape = 'u8[8192]{0}', space=vmem, size = 0x2000, scoped, tag = 'input window, operand 6']
    #allocation13 [shape = 'u8[16384]{0}', space=vmem, size = 0x4000, scoped, tag = 'output window, operand 0']
    %12 = vsyncpa [#allocation4], 0
    %13 = vsyncpa [#allocation7], 0
    %14 = vsyncpa [#allocation10], 0
    %15 = vsyncpa [#allocation5], 0
    %s16 = scalar_lea.sflag [#allocation5], 1
    %17 = vsyncpa %s16, 0
    loop: start=0, step=1, limit=8
    $region2: #{autoencoder_forward.3} parent=1 // loop_pre_header
      _
    $region3: #{autoencoder_forward.3} parent=1 // loop_header
      %s19 = sphi 0, %s23
      %p20 = scmp.ge.s32.totalorder %s19, 8
      %s26 = sphi 0, %s38
      %s27 = sphi 0, %s34
      %s28 = sphi 0, %s26
      %s29 = sphi 0, %s27
      %s30 = sphi 0, %s28
      %s31 = sphi 0, %s29
      %s41 = sphi 0, %s43
      %s44 = sphi 0, %s41
      %s45 = sphi 0, %s44
      %s61 = sphi 0, %s45
      %s65 = sphi 0, %s65
      %s67 = sphi 0, %s65
      %s68 = sphi 0, %s67
      %s82 = sphi 0, %s68
      %s86 = sphi 0, %s86
      %s88 = sphi 0, %s86
      %s89 = sphi 0, %s88
      %s103 = sphi 0, %s89
      %s107 = sphi 0, %s107
      %s109 = sphi 0, %s107
      %s110 = sphi 0, %s109
      %s124 = sphi 0, %s110
      %s128 = sphi 0, %s128
      %s130 = sphi 0, %s128
      %s131 = sphi 0, %s130
      %s145 = sphi 0, %s131
      %s151 = sphi 0, %s153
      %s154 = sphi 0, %s151
      %s155 = sphi 0, %s154
      %s171 = sphi 0, %s155
      %s177 = sphi 0, %s179
      %s180 = sphi 0, %s177
      %s181 = sphi 0, %s180
      %s197 = sphi 0, %s181
      %s205 = sphi 0, %s207
      %s208 = sphi 0, %s205
      %s209 = sphi 0, %s208
      %s225 = sphi 0, %s209
    $region4: #{autoencoder_forward.3} parent=1 // loop_header_branch
      %22 = sbr.rel (%p20) target = $region8
    $region5: #{autoencoder_forward.3} parent=1 // loop_body
      %s24 = ssub.s32 %s19, 1
      %s25 = ssub.s32 %s19, 2
      %s32 = sadd.s32 1, %s27
      %p33 = scmp.ge.s32.totalorder %s32, 6
      %s34 = scalar_select %p33, 0, %s32
      %s35 = sadd.s32 1, %s26
      %s36 = scalar_select %p33, %s35, %s26
      %p37 = scmp.ge.s32.totalorder %s36, 1
      %s38 = scalar_select %p37, 0, %s36
      %s39 = ssub.s32 %s26, %s38
      %p40 = scmp.eq.s32.totalorder %s39, 0
      %s42 = sadd.s32 %s41, 1
      %s43 = scalar_select %p40, %s41, %s42
      %p46 = pneg %p40
      %p47 = scmp.eq.s32.totalorder %s19, 5
      %p48 = por %p46, %p47
      %p49 = scmp.ne.s32.totalorder %s41, %s44
      %p50 = scmp.eq.s32.totalorder %s19, 0
      %p51 = por %p49, %p50
      %p52 = scmp.ne.s32.totalorder %s41, %s44
      %p53 = scmp.eq.s32.totalorder %s24, 5
      %p54 = por %p52, %p53
      %p55 = scmp.ne.s32.totalorder %s44, %s45
      %p56 = scmp.eq.s32.totalorder %s24, 0
      %p57 = por %p55, %p56
      %p58 = scmp.ne.s32.totalorder %s44, %s45
      %p59 = scmp.eq.s32.totalorder %s25, 5
      %p60 = por %p58, %p59
      %p62 = scmp.ne.s32.totalorder %s45, %s61
      %p63 = scmp.eq.s32.totalorder %s25, 0
      %p64 = por %p62, %p63
      %s66 = sadd.s32 %s65, 1
      %p69 = scmp.eq.s32.totalorder %s19, 5
      %p70 = scmp.ne.s32.totalorder %s65, %s67
      %p71 = scmp.eq.s32.totalorder %s19, 0
      %p72 = por %p70, %p71
      %p73 = scmp.ne.s32.totalorder %s65, %s67
      %p74 = scmp.eq.s32.totalorder %s24, 5
      %p75 = por %p73, %p74
      %p76 = scmp.ne.s32.totalorder %s67, %s68
      %p77 = scmp.eq.s32.totalorder %s24, 0
      %p78 = por %p76, %p77
      %p79 = scmp.ne.s32.totalorder %s67, %s68
      %p80 = scmp.eq.s32.totalorder %s25, 5
      %p81 = por %p79, %p80
      %p83 = scmp.ne.s32.totalorder %s68, %s82
      %p84 = scmp.eq.s32.totalorder %s25, 0
      %p85 = por %p83, %p84
      %s87 = sadd.s32 %s86, 1
      %p90 = scmp.eq.s32.totalorder %s19, 5
      %p91 = scmp.ne.s32.totalorder %s86, %s88
      %p92 = scmp.eq.s32.totalorder %s19, 0
      %p93 = por %p91, %p92
      %p94 = scmp.ne.s32.totalorder %s86, %s88
      %p95 = scmp.eq.s32.totalorder %s24, 5
      %p96 = por %p94, %p95
      %p97 = scmp.ne.s32.totalorder %s88, %s89
      %p98 = scmp.eq.s32.totalorder %s24, 0
      %p99 = por %p97, %p98
      %p100 = scmp.ne.s32.totalorder %s88, %s89
      %p101 = scmp.eq.s32.totalorder %s25, 5
      %p102 = por %p100, %p101
      %p104 = scmp.ne.s32.totalorder %s89, %s103
      %p105 = scmp.eq.s32.totalorder %s25, 0
      %p106 = por %p104, %p105
      %s108 = sadd.s32 %s107, 1
      %p111 = scmp.eq.s32.totalorder %s19, 5
      %p112 = scmp.ne.s32.totalorder %s107, %s109
      %p113 = scmp.eq.s32.totalorder %s19, 0
      %p114 = por %p112, %p113
      %p115 = scmp.ne.s32.totalorder %s107, %s109
      %p116 = scmp.eq.s32.totalorder %s24, 5
      %p117 = por %p115, %p116
      %p118 = scmp.ne.s32.totalorder %s109, %s110
      %p119 = scmp.eq.s32.totalorder %s24, 0
      %p120 = por %p118, %p119
      %p121 = scmp.ne.s32.totalorder %s109, %s110
      %p122 = scmp.eq.s32.totalorder %s25, 5
      %p123 = por %p121, %p122
      %p125 = scmp.ne.s32.totalorder %s110, %s124
      %p126 = scmp.eq.s32.totalorder %s25, 0
      %p127 = por %p125, %p126
      %s129 = sadd.s32 %s128, 1
      %p132 = scmp.eq.s32.totalorder %s19, 5
      %p133 = scmp.ne.s32.totalorder %s128, %s130
      %p134 = scmp.eq.s32.totalorder %s19, 0
      %p135 = por %p133, %p134
      %p136 = scmp.ne.s32.totalorder %s128, %s130
      %p137 = scmp.eq.s32.totalorder %s24, 5
      %p138 = por %p136, %p137
      %p139 = scmp.ne.s32.totalorder %s130, %s131
      %p140 = scmp.eq.s32.totalorder %s24, 0
      %p141 = por %p139, %p140
      %p142 = scmp.ne.s32.totalorder %s130, %s131
      %p143 = scmp.eq.s32.totalorder %s25, 5
      %p144 = por %p142, %p143
      %p146 = scmp.ne.s32.totalorder %s131, %s145
      %p147 = scmp.eq.s32.totalorder %s25, 0
      %p148 = por %p146, %p147
      %s149 = ssub.s32 %s27, %s34
      %p150 = scmp.eq.s32.totalorder %s149, 0
      %s152 = sadd.s32 %s151, 1
      %s153 = scalar_select %p150, %s151, %s152
      %p156 = pneg %p150
      %p157 = scmp.eq.s32.totalorder %s19, 5
      %p158 = por %p156, %p157
      %p159 = scmp.ne.s32.totalorder %s151, %s154
      %p160 = scmp.eq.s32.totalorder %s19, 0
      %p161 = por %p159, %p160
      %p162 = scmp.ne.s32.totalorder %s151, %s154
      %p163 = scmp.eq.s32.totalorder %s24, 5
      %p164 = por %p162, %p163
      %p165 = scmp.ne.s32.totalorder %s154, %s155
      %p166 = scmp.eq.s32.totalorder %s24, 0
      %p167 = por %p165, %p166
      %p168 = scmp.ne.s32.totalorder %s154, %s155
      %p169 = scmp.eq.s32.totalorder %s25, 5
      %p170 = por %p168, %p169
      %p172 = scmp.ne.s32.totalorder %s155, %s171
      %p173 = scmp.eq.s32.totalorder %s25, 0
      %p174 = por %p172, %p173
      %s175 = ssub.s32 %s27, %s34
      %p176 = scmp.eq.s32.totalorder %s175, 0
      %s178 = sadd.s32 %s177, 1
      %s179 = scalar_select %p176, %s177, %s178
      %p182 = pneg %p176
      %p183 = scmp.eq.s32.totalorder %s19, 5
      %p184 = por %p182, %p183
      %p185 = scmp.ne.s32.totalorder %s177, %s180
      %p186 = scmp.eq.s32.totalorder %s19, 0
      %p187 = por %p185, %p186
      %p188 = scmp.ne.s32.totalorder %s177, %s180
      %p189 = scmp.eq.s32.totalorder %s24, 5
      %p190 = por %p188, %p189
      %p191 = scmp.ne.s32.totalorder %s180, %s181
      %p192 = scmp.eq.s32.totalorder %s24, 0
      %p193 = por %p191, %p192
      %p194 = scmp.ne.s32.totalorder %s180, %s181
      %p195 = scmp.eq.s32.totalorder %s25, 5
      %p196 = por %p194, %p195
      %p198 = scmp.ne.s32.totalorder %s181, %s197
      %p199 = scmp.eq.s32.totalorder %s25, 0
      %p200 = por %p198, %p199
      %s201 = ssub.s32 %s26, %s38
      %s202 = ssub.s32 %s27, %s34
      %s203 = sor.u32 %s201, %s202
      %p204 = scmp.eq.s32.totalorder %s203, 0
      %s206 = sadd.s32 %s205, 1
      %s207 = scalar_select %p204, %s205, %s206
      %p210 = pneg %p204
      %p211 = scmp.eq.s32.totalorder %s19, 5
      %p212 = por %p210, %p211
      %p213 = scmp.ne.s32.totalorder %s205, %s208
      %p214 = scmp.eq.s32.totalorder %s19, 0
      %p215 = por %p213, %p214
      %p216 = scmp.ne.s32.totalorder %s205, %s208
      %p217 = scmp.eq.s32.totalorder %s24, 5
      %p218 = por %p216, %p217
      %p219 = scmp.ne.s32.totalorder %s208, %s209
      %p220 = scmp.eq.s32.totalorder %s24, 0
      %p221 = por %p219, %p220
      %p222 = scmp.ne.s32.totalorder %s208, %s209
      %p223 = scmp.eq.s32.totalorder %s25, 5
      %p224 = por %p222, %p223
      %p226 = scmp.ne.s32.totalorder %s209, %s225
      %p227 = scmp.eq.s32.totalorder %s25, 0
      %p228 = por %p226, %p227
      %p229 = scmp.le.s32.totalorder 1, %s19
      %p230 = scmp.lt.s32.totalorder %s19, 7
      %p231 = pnand %p229, %p230
      %p232 = pneg %p231
      // Predicated region
      $region9: #{autoencoder_forward.3} parent=5 // pred_check
        _
      $region10: #{autoencoder_forward.3} parent=5 // pred_check_branch
        %234 = sbr.rel (%p231) target = $region12
      $region11: #{autoencoder_forward.3} parent=5 // pred_region
        %s235 = ssub.s32 %s19, 1
        // Predicated region
        $region13: #{autoencoder_forward.3} parent=11 // pred_check
          %p236 = pneg %p57
        $region14: #{autoencoder_forward.3} parent=11 // pred_check_branch
          %238 = sbr.rel (%p236) target = $region16
        $region15: #{autoencoder_forward.3} parent=11 // pred_region
          %p239 = scmp.lt.s32.totalorder %s28, 0
          %s240 = scalar_select %p239, %s28, 0
          %s241 = smul.addr %s240, 4
          %s242 = smul.addr %s241, 2
          %s243 = scalar_lea.vmem %s0, %s242
        $region16: #{autoencoder_forward.3} parent=11 // pred_fallthru
          _
        // Predicated region
        $region17: #{autoencoder_forward.3} parent=11 // pred_check
          %p244 = pneg %p78
        $region18: #{autoencoder_forward.3} parent=11 // pred_check_branch
          %246 = sbr.rel (%p244) target = $region20
        $region19: #{autoencoder_forward.3} parent=11 // pred_region
          %s248 = ssub.s32 8192, 8192
          %249 = vsyncadd [#allocation4], %s248
          %s250 = sshll.u32 [#allocation3], 4
          %s251 = int_to_ptr.vmem [resolvable:$true] %s250
          %256 = dma.hbm_to_vmem [thread:$0]  %s1, 8192, %s251, [#allocation4], 128, 128, 8
        $region20: #{autoencoder_forward.3} parent=11 // pred_fallthru
          _
        // Predicated region
        $region21: #{autoencoder_forward.3} parent=11 // pred_check
          %p257 = pneg %p99
        $region22: #{autoencoder_forward.3} parent=11 // pred_check_branch
          %259 = sbr.rel (%p257) target = $region24
        $region23: #{autoencoder_forward.3} parent=11 // pred_region
          %s261 = ssub.s32 32, 32
          %262 = vsyncadd [#allocation7], %s261
          %s264 = sshll.u32 [#allocation6], 4
          %s265 = int_to_ptr.vmem [resolvable:$true] %s264
          %267 = dma.hbm_to_vmem [thread:$0]  %s2, 32, %s265, [#allocation7]
        $region24: #{autoencoder_forward.3} parent=11 // pred_fallthru
          _
        // Predicated region
        $region25: #{autoencoder_forward.3} parent=11 // pred_check
          %p268 = pneg %p120
        $region26: #{autoencoder_forward.3} parent=11 // pred_check_branch
          %270 = sbr.rel (%p268) target = $region28
        $region27: #{autoencoder_forward.3} parent=11 // pred_region
          %s272 = ssub.s32 4096, 4096
          %273 = vsyncadd [#allocation7], %s272
          %s274 = sshll.u32 [#allocation8], 4
          %s275 = int_to_ptr.vmem [resolvable:$true] %s274
          %280 = dma.hbm_to_vmem [thread:$0]  %s3, 4096, %s275, [#allocation7], 128, 128, 8
        $region28: #{autoencoder_forward.3} parent=11 // pred_fallthru
          _
        // Predicated region
        $region29: #{autoencoder_forward.3} parent=11 // pred_check
          %p281 = pneg %p141
        $region30: #{autoencoder_forward.3} parent=11 // pred_check_branch
          %283 = sbr.rel (%p281) target = $region32
        $region31: #{autoencoder_forward.3} parent=11 // pred_region
          %s285 = ssub.s32 32, 32
          %286 = vsyncadd [#allocation10], %s285
          %s288 = sshll.u32 [#allocation9], 4
          %s289 = int_to_ptr.vmem [resolvable:$true] %s288
          %291 = dma.hbm_to_vmem [thread:$0]  %s4, 32, %s289, [#allocation10]
        $region32: #{autoencoder_forward.3} parent=11 // pred_fallthru
          _
      $region12: #{autoencoder_forward.3} parent=5 // pred_fallthru
        _
      %p292 = scmp.lt.s32.totalorder %s19, 6
      // Predicated region
      $region33: #{autoencoder_forward.3} parent=5 // pred_check
        %p293 = pneg %p292
      $region34: #{autoencoder_forward.3} parent=5 // pred_check_branch
        %295 = sbr.rel (%p293) target = $region36
      $region35: #{autoencoder_forward.3} parent=5 // pred_region
        // Predicated region
        $region37: #{autoencoder_forward.3} parent=35 // pred_check
          %p296 = pneg %p161
        $region38: #{autoencoder_forward.3} parent=35 // pred_check_branch
          %298 = sbr.rel (%p296) target = $region40
        $region39: #{autoencoder_forward.3} parent=35 // pred_region
          %s299 = sand.u32 %s19, 1
          %s300 = scalar_lea.sflag [#allocation4], %s299
          %s301 = sand.u32 %s151, 1
          %s302 = smul.addr %s301, 1024
          %s303 = scalar_lea.vmem [#allocation11], %s302
          %s304 = smul.u32 8, %s27
          %s306 = ssub.s32 16384, 16384
          %307 = vsyncadd %s300, %s306
          %s308 = smul.addr %s304, 64
          %s309 = scalar_lea.hbm %s5, %s308
          %s310 = sshll.u32 %s303, 4
          %s311 = int_to_ptr.vmem [resolvable:$true] %s310
          %316 = dma.hbm_to_vmem [thread:$0]  %s309, 16384, %s311, %s300, 3072, 512, 32
        $region40: #{autoencoder_forward.3} parent=35 // pred_fallthru
          _
        // Predicated region
        $region41: #{autoencoder_forward.3} parent=35 // pred_check
          %p317 = pneg %p187
        $region42: #{autoencoder_forward.3} parent=35 // pred_check_branch
          %319 = sbr.rel (%p317) target = $region44
        $region43: #{autoencoder_forward.3} parent=35 // pred_region
          %s320 = sand.u32 %s19, 1
          %s321 = scalar_lea.sflag [#allocation4], %s320
          %s322 = sand.u32 %s177, 1
          %s323 = smul.addr %s322, 8
          %s324 = scalar_lea.vmem [#allocation12], %s323
          %s325 = smul.u32 8, %s27
          %s327 = ssub.s32 128, 128
          %328 = vsyncadd %s321, %s327
          %s329 = smul.addr %s325, 16
          %s330 = scalar_lea.hbm %s6, %s329
          %s332 = sshll.u32 %s324, 4
          %s333 = int_to_ptr.vmem [resolvable:$true] %s332
          %335 = dma.hbm_to_vmem [thread:$0]  %s330, 128, %s333, %s321
        $region44: #{autoencoder_forward.3} parent=35 // pred_fallthru
          _
      $region36: #{autoencoder_forward.3} parent=5 // pred_fallthru
        _
      %p336 = scmp.le.s32.totalorder 1, %s19
      %p337 = scmp.lt.s32.totalorder %s19, 7
      %p338 = pnand %p336, %p337
      %p339 = pneg %p338
      // Predicated region
      $region45: #{autoencoder_forward.3} parent=5 // pred_check
        _
      $region46: #{autoencoder_forward.3} parent=5 // pred_check_branch
        %341 = sbr.rel (%p338) target = $region48
      $region47: #{autoencoder_forward.3} parent=5 // pred_region
        %s342 = ssub.s32 %s19, 1
        // Predicated region
        $region49: #{autoencoder_forward.3} parent=47 // pred_check
          %p343 = pneg %p78
        $region50: #{autoencoder_forward.3} parent=47 // pred_check_branch
          %345 = sbr.rel (%p343) target = $region52
        $region51: #{autoencoder_forward.3} parent=47 // pred_region
          %346 = dma.done [#allocation4], 8192
        $region52: #{autoencoder_forward.3} parent=47 // pred_fallthru
          _
        // Predicated region
        $region53: #{autoencoder_forward.3} parent=47 // pred_check
          %p347 = pneg %p99
        $region54: #{autoencoder_forward.3} parent=47 // pred_check_branch
          %349 = sbr.rel (%p347) target = $region56
        $region55: #{autoencoder_forward.3} parent=47 // pred_region
          %350 = dma.done [#allocation7], 32
        $region56: #{autoencoder_forward.3} parent=47 // pred_fallthru
          _
        // Predicated region
        $region57: #{autoencoder_forward.3} parent=47 // pred_check
          %p351 = pneg %p120
        $region58: #{autoencoder_forward.3} parent=47 // pred_check_branch
          %353 = sbr.rel (%p351) target = $region60
        $region59: #{autoencoder_forward.3} parent=47 // pred_region
          %354 = dma.done [#allocation7], 4096
        $region60: #{autoencoder_forward.3} parent=47 // pred_fallthru
          _
        // Predicated region
        $region61: #{autoencoder_forward.3} parent=47 // pred_check
          %p355 = pneg %p141
        $region62: #{autoencoder_forward.3} parent=47 // pred_check_branch
          %357 = sbr.rel (%p355) target = $region64
        $region63: #{autoencoder_forward.3} parent=47 // pred_region
          %358 = dma.done [#allocation10], 32
        $region64: #{autoencoder_forward.3} parent=47 // pred_fallthru
          _
        %s359 = sand.u32 %s24, 1
        %s360 = scalar_lea.sflag [#allocation4], %s359
        %s361 = sand.u32 %s154, 1
        %s362 = smul.addr %s361, 1024
        %s363 = scalar_lea.vmem [#allocation11], %s362
        // Predicated region
        $region65: #{autoencoder_forward.3} parent=47 // pred_check
          %p364 = pneg %p167
        $region66: #{autoencoder_forward.3} parent=47 // pred_check_branch
          %366 = sbr.rel (%p364) target = $region68
        $region67: #{autoencoder_forward.3} parent=47 // pred_region
          %367 = dma.done %s360, 16384
        $region68: #{autoencoder_forward.3} parent=47 // pred_fallthru
          _
        %s368 = sand.u32 %s24, 1
        %s369 = scalar_lea.sflag [#allocation4], %s368
        %s370 = sand.u32 %s180, 1
        %s371 = smul.addr %s370, 8
        %s372 = scalar_lea.vmem [#allocation12], %s371
        // Predicated region
        $region69: #{autoencoder_forward.3} parent=47 // pred_check
          %p373 = pneg %p193
        $region70: #{autoencoder_forward.3} parent=47 // pred_check_branch
          %375 = sbr.rel (%p373) target = $region72
        $region71: #{autoencoder_forward.3} parent=47 // pred_region
          %376 = dma.done %s369, 128
        $region72: #{autoencoder_forward.3} parent=47 // pred_fallthru
          _
        %p377 = scmp.lt.s32.totalorder %s28, 0
        %s378 = scalar_select %p377, %s28, 0
        %s379 = smul.addr %s378, 4
        %s380 = smul.addr %s379, 2
        %s381 = scalar_lea.vmem %s0, %s380
        %p382 = pneg %p57
        %p383 = pneg %p54
        %p384 = pneg %p78
        %p385 = pneg %p75
        %p386 = pneg %p99
        %p387 = pneg %p96
        %p388 = pneg %p120
        %p389 = pneg %p117
        %p390 = pneg %p141
        %p391 = pneg %p138
        %s392 = sand.u32 %s24, 1
        %s393 = scalar_lea.sflag [#allocation4], %s392
        %s394 = sand.u32 %s154, 1
        %s395 = smul.addr %s394, 1024
        %s396 = scalar_lea.vmem [#allocation11], %s395
        %p397 = pneg %p167
        %p398 = pneg %p164
        %s399 = sand.u32 %s24, 1
        %s400 = scalar_lea.sflag [#allocation4], %s399
        %s401 = sand.u32 %s180, 1
        %s402 = smul.addr %s401, 8
        %s403 = scalar_lea.vmem [#allocation12], %s402
        %p404 = pneg %p193
        %p405 = pneg %p190
        %p406 = pneg %p221
        %p407 = pneg %p218
        %s408 = sand.u32 %s208, 1
        %s409 = scalar_lea.sflag [#allocation5], %s408
        %s410 = sand.u32 %s208, 1
        %s411 = smul.addr %s410, 16
        %s412 = scalar_lea.vmem [#allocation13], %s411
        %p413 = scmp.lt.s32.totalorder %s28, 0
        %s414 = scalar_select %p413, %s28, 0
        %s415 = smul.addr %s414, 4
        %s416 = smul.addr %s415, 2
        %s417 = scalar_lea.vmem %s0, %s416
        %s418 = smul.u32 8, %s29
        %s419 = smul.u32 8, %s29
        %s420 = smul.u32 8, %s29
        %p421 = scmp.eq.s32.totalorder %s29, 0
        // Predicated region
        $region73: #{autoencoder_forward.3} parent=47 // pred_check
          %p422 = pneg %p421
        $region74: #{autoencoder_forward.3} parent=47 // pred_check_branch
          %424 = sbr.rel (%p422) target = $region76
        $region75: #{autoencoder_forward.3} parent=47 // pred_region
          %v425 = vld [vmem:[%s417] sm:$0xff]
          %v426 = vld [vmem:[#allocation3] sm:$0xff]
          %v427 = vld [vmem:[#allocation3 + $0x8] sm:$0xff]
          %v428 = vld [vmem:[#allocation3 + $0x10] sm:$0xff]
          %v429 = vld [vmem:[#allocation3 + $0x18] sm:$0xff]
          %v430 = vld [vmem:[#allocation3 + $0x20] sm:$0xff]
          %v431 = vld [vmem:[#allocation3 + $0x28] sm:$0xff]
          %v432 = vld [vmem:[#allocation3 + $0x30] sm:$0xff]
          %v433 = vld [vmem:[#allocation3 + $0x38] sm:$0xff]
          %v434 = vld [vmem:[#allocation3 + $0x40] sm:$0xff]
          %v435 = vld [vmem:[#allocation3 + $0x48] sm:$0xff]
          %v436 = vld [vmem:[#allocation3 + $0x50] sm:$0xff]
          %v437 = vld [vmem:[#allocation3 + $0x58] sm:$0xff]
          %v438 = vld [vmem:[#allocation3 + $0x60] sm:$0xff]
          %v439 = vld [vmem:[#allocation3 + $0x68] sm:$0xff]
          %v440 = vld [vmem:[#allocation3 + $0x70] sm:$0xff]
          %v441 = vld [vmem:[#allocation3 + $0x78] sm:$0xff]
          %v442 = vld [vmem:[#allocation3 + $0x80] sm:$0xff]
          %v443 = vld [vmem:[#allocation3 + $0x88] sm:$0xff]
          %v444 = vld [vmem:[#allocation3 + $0x90] sm:$0xff]
          %v445 = vld [vmem:[#allocation3 + $0x98] sm:$0xff]
          %v446 = vld [vmem:[#allocation3 + $0xa0] sm:$0xff]
          %v447 = vld [vmem:[#allocation3 + $0xa8] sm:$0xff]
          %v448 = vld [vmem:[#allocation3 + $0xb0] sm:$0xff]
          %v449 = vld [vmem:[#allocation3 + $0xb8] sm:$0xff]
          %v450 = vld [vmem:[#allocation3 + $0xc0] sm:$0xff]
          %v451 = vld [vmem:[#allocation3 + $0xc8] sm:$0xff]
          %v452 = vld [vmem:[#allocation3 + $0xd0] sm:$0xff]
          %v453 = vld [vmem:[#allocation3 + $0xd8] sm:$0xff]
          %v454 = vld [vmem:[#allocation3 + $0xe0] sm:$0xff]
          %v455 = vld [vmem:[#allocation3 + $0xe8] sm:$0xff]
          %v456 = vld [vmem:[#allocation3 + $0xf0] sm:$0xff]
          %v457 = vld [vmem:[#allocation3 + $0xf8] sm:$0xff]
          %v458 = vld [vmem:[#allocation3 + $0x100] sm:$0xff]
          %v459 = vld [vmem:[#allocation3 + $0x108] sm:$0xff]
          %v460 = vld [vmem:[#allocation3 + $0x110] sm:$0xff]
          %v461 = vld [vmem:[#allocation3 + $0x118] sm:$0xff]
          %v462 = vld [vmem:[#allocation3 + $0x120] sm:$0xff]
          %v463 = vld [vmem:[#allocation3 + $0x128] sm:$0xff]
          %v464 = vld [vmem:[#allocation3 + $0x130] sm:$0xff]
          %v465 = vld [vmem:[#allocation3 + $0x138] sm:$0xff]
          %v466 = vld [vmem:[#allocation3 + $0x140] sm:$0xff]
          %v467 = vld [vmem:[#allocation3 + $0x148] sm:$0xff]
          %v468 = vld [vmem:[#allocation3 + $0x150] sm:$0xff]
          %v469 = vld [vmem:[#allocation3 + $0x158] sm:$0xff]
          %v470 = vld [vmem:[#allocation3 + $0x160] sm:$0xff]
          %v471 = vld [vmem:[#allocation3 + $0x168] sm:$0xff]
          %v472 = vld [vmem:[#allocation3 + $0x170] sm:$0xff]
          %v473 = vld [vmem:[#allocation3 + $0x178] sm:$0xff]
          %v474 = vld [vmem:[#allocation3 + $0x180] sm:$0xff]
          %v475 = vld [vmem:[#allocation3 + $0x188] sm:$0xff]
          %v476 = vld [vmem:[#allocation3 + $0x190] sm:$0xff]
          %v477 = vld [vmem:[#allocation3 + $0x198] sm:$0xff]
          %v478 = vld [vmem:[#allocation3 + $0x1a0] sm:$0xff]
          %v479 = vld [vmem:[#allocation3 + $0x1a8] sm:$0xff]
          %v480 = vld [vmem:[#allocation3 + $0x1b0] sm:$0xff]
          %v481 = vld [vmem:[#allocation3 + $0x1b8] sm:$0xff]
          %v482 = vld [vmem:[#allocation3 + $0x1c0] sm:$0xff]
          %v483 = vld [vmem:[#allocation3 + $0x1c8] sm:$0xff]
          %v484 = vld [vmem:[#allocation3 + $0x1d0] sm:$0xff]
          %v485 = vld [vmem:[#allocation3 + $0x1d8] sm:$0xff]
          %v486 = vld [vmem:[#allocation3 + $0x1e0] sm:$0xff]
          %v487 = vld [vmem:[#allocation3 + $0x1e8] sm:$0xff]
          %v488 = vld [vmem:[#allocation3 + $0x1f0] sm:$0xff]
          %v489 = vld [vmem:[#allocation3 + $0x1f8] sm:$0xff]
          %v491 = vcombine.high %v425, %v425
          %v493 = vunpack.c.l.s4 1983009808
          %v494 = vunpack.c.0.s8 %v493
          %v495 = vlaneseq
          %v496 = vshrl.u32 %v495, 7
          %v497 = vsub.s32 %v494, %v496
          %v498 = vrot.slane %v425, %v497
          %v500 = vunpack.c.l.s4 1983009808
          %v501 = vunpack.c.0.s8 %v500
          %v502 = vlaneseq
          %v503 = vshrl.u32 %v502, 7
          %v504 = vsub.s32 %v501, %v503
          %v505 = vrot.slane %v491, %v504
          %v506 = vcombine.high %v498, %v498
          %v507 = vcombine.high %v505, %v505
          %v512 = vpack.c.bf16 %v498, %v498
          %v513 = vpack.c.bf16 %v506, %v506
          %v514 = vpack.c.bf16 %v505, %v505
          %v515 = vpack.c.bf16 %v507, %v507
          %v516 = vld [vmem:[#allocation6] sm:$0x3]
          %v518 = vlaneseq
          %v519 = vshrl.u32 %v518, 7
          %v520 = vsub.s32 0, %v519
          %v521 = vrot.slane %v516, %v520
          %v522 = vlaneseq
          %v523 = vshrl.u32 %v522, 7
          %v524 = vsub.s32 1, %v523
          %v525 = vrot.slane %v516, %v524
          %v592 = vunpack.c.l.b16 %v426
          %v593 = vunpack.c.h.b16 %v426
          %v594 = vunpack.c.l.b16 %v427
          %v595 = vunpack.c.h.b16 %v427
          %v596 = vunpack.c.l.b16 %v428
          %v597 = vunpack.c.h.b16 %v428
          %v598 = vunpack.c.l.b16 %v429
          %v599 = vunpack.c.h.b16 %v429
          %v600 = vunpack.c.l.b16 %v430
          %v601 = vunpack.c.h.b16 %v430
          %v602 = vunpack.c.l.b16 %v431
          %v603 = vunpack.c.h.b16 %v431
          %v604 = vunpack.c.l.b16 %v432
          %v605 = vunpack.c.h.b16 %v432
          %v606 = vunpack.c.l.b16 %v433
          %v607 = vunpack.c.h.b16 %v433
          %v608 = vunpack.c.l.b16 %v434
          %v609 = vunpack.c.h.b16 %v434
          %v610 = vunpack.c.l.b16 %v435
          %v611 = vunpack.c.h.b16 %v435
          %v612 = vunpack.c.l.b16 %v436
          %v613 = vunpack.c.h.b16 %v436
          %v614 = vunpack.c.l.b16 %v437
          %v615 = vunpack.c.h.b16 %v437
          %v616 = vunpack.c.l.b16 %v438
          %v617 = vunpack.c.h.b16 %v438
          %v618 = vunpack.c.l.b16 %v439
          %v619 = vunpack.c.h.b16 %v439
          %v620 = vunpack.c.l.b16 %v440
          %v621 = vunpack.c.h.b16 %v440
          %v622 = vunpack.c.l.b16 %v441
          %v623 = vunpack.c.h.b16 %v441
          %v624 = vunpack.c.l.b16 %v442
          %v625 = vunpack.c.h.b16 %v442
          %v626 = vunpack.c.l.b16 %v443
          %v627 = vunpack.c.h.b16 %v443
          %v628 = vunpack.c.l.b16 %v444
          %v629 = vunpack.c.h.b16 %v444
          %v630 = vunpack.c.l.b16 %v445
          %v631 = vunpack.c.h.b16 %v445
          %v632 = vunpack.c.l.b16 %v446
          %v633 = vunpack.c.h.b16 %v446
          %v634 = vunpack.c.l.b16 %v447
          %v635 = vunpack.c.h.b16 %v447
          %v636 = vunpack.c.l.b16 %v448
          %v637 = vunpack.c.h.b16 %v448
          %v638 = vunpack.c.l.b16 %v449
          %v639 = vunpack.c.h.b16 %v449
          %v640 = vunpack.c.l.b16 %v450
          %v641 = vunpack.c.h.b16 %v450
          %v642 = vunpack.c.l.b16 %v451
          %v643 = vunpack.c.h.b16 %v451
          %v644 = vunpack.c.l.b16 %v452
          %v645 = vunpack.c.h.b16 %v452
          %v646 = vunpack.c.l.b16 %v453
          %v647 = vunpack.c.h.b16 %v453
          %v648 = vunpack.c.l.b16 %v454
          %v649 = vunpack.c.h.b16 %v454
          %v650 = vunpack.c.l.b16 %v455
          %v651 = vunpack.c.h.b16 %v455
          %v652 = vunpack.c.l.b16 %v456
          %v653 = vunpack.c.h.b16 %v456
          %v654 = vunpack.c.l.b16 %v457
          %v655 = vunpack.c.h.b16 %v457
          %v656 = vunpack.c.l.b16 %v458
          %v657 = vunpack.c.h.b16 %v458
          %v658 = vunpack.c.l.b16 %v459
          %v659 = vunpack.c.h.b16 %v459
          %v660 = vunpack.c.l.b16 %v460
          %v661 = vunpack.c.h.b16 %v460
          %v662 = vunpack.c.l.b16 %v461
          %v663 = vunpack.c.h.b16 %v461
          %v664 = vunpack.c.l.b16 %v462
          %v665 = vunpack.c.h.b16 %v462
          %v666 = vunpack.c.l.b16 %v463
          %v667 = vunpack.c.h.b16 %v463
          %v668 = vunpack.c.l.b16 %v464
          %v669 = vunpack.c.h.b16 %v464
          %v670 = vunpack.c.l.b16 %v465
          %v671 = vunpack.c.h.b16 %v465
          %v672 = vunpack.c.l.b16 %v466
          %v673 = vunpack.c.h.b16 %v466
          %v674 = vunpack.c.l.b16 %v467
          %v675 = vunpack.c.h.b16 %v467
          %v676 = vunpack.c.l.b16 %v468
          %v677 = vunpack.c.h.b16 %v468
          %v678 = vunpack.c.l.b16 %v469
          %v679 = vunpack.c.h.b16 %v469
          %v680 = vunpack.c.l.b16 %v470
          %v681 = vunpack.c.h.b16 %v470
          %v682 = vunpack.c.l.b16 %v471
          %v683 = vunpack.c.h.b16 %v471
          %v684 = vunpack.c.l.b16 %v472
          %v685 = vunpack.c.h.b16 %v472
          %v686 = vunpack.c.l.b16 %v473
          %v687 = vunpack.c.h.b16 %v473
          %v688 = vunpack.c.l.b16 %v474
          %v689 = vunpack.c.h.b16 %v474
          %v690 = vunpack.c.l.b16 %v475
          %v691 = vunpack.c.h.b16 %v475
          %v692 = vunpack.c.l.b16 %v476
          %v693 = vunpack.c.h.b16 %v476
          %v694 = vunpack.c.l.b16 %v477
          %v695 = vunpack.c.h.b16 %v477
          %v696 = vunpack.c.l.b16 %v478
          %v697 = vunpack.c.h.b16 %v478
          %v698 = vunpack.c.l.b16 %v479
          %v699 = vunpack.c.h.b16 %v479
          %v700 = vunpack.c.l.b16 %v480
          %v701 = vunpack.c.h.b16 %v480
          %v702 = vunpack.c.l.b16 %v481
          %v703 = vunpack.c.h.b16 %v481
          %v704 = vunpack.c.l.b16 %v482
          %v705 = vunpack.c.h.b16 %v482
          %v706 = vunpack.c.l.b16 %v483
          %v707 = vunpack.c.h.b16 %v483
          %v708 = vunpack.c.l.b16 %v484
          %v709 = vunpack.c.h.b16 %v484
          %v710 = vunpack.c.l.b16 %v485
          %v711 = vunpack.c.h.b16 %v485
          %v712 = vunpack.c.l.b16 %v486
          %v713 = vunpack.c.h.b16 %v486
          %v714 = vunpack.c.l.b16 %v487
          %v715 = vunpack.c.h.b16 %v487
          %v716 = vunpack.c.l.b16 %v488
          %v717 = vunpack.c.h.b16 %v488
          %v718 = vunpack.c.l.b16 %v489
          %v719 = vunpack.c.h.b16 %v489
          %v720 = vpack.c.b16 %v594, %v592
          %v721 = vpack.c.b16 %v595, %v593
          %v722 = vpack.c.b16 %v598, %v596
          %v723 = vpack.c.b16 %v599, %v597
          %v724 = vpack.c.b16 %v602, %v600
          %v725 = vpack.c.b16 %v603, %v601
          %v726 = vpack.c.b16 %v606, %v604
          %v727 = vpack.c.b16 %v607, %v605
          %v728 = vpack.c.b16 %v610, %v608
          %v729 = vpack.c.b16 %v611, %v609
          %v730 = vpack.c.b16 %v614, %v612
          %v731 = vpack.c.b16 %v615, %v613
          %v732 = vpack.c.b16 %v618, %v616
          %v733 = vpack.c.b16 %v619, %v617
          %v734 = vpack.c.b16 %v622, %v620
          %v735 = vpack.c.b16 %v623, %v621
          %v736 = vpack.c.b16 %v626, %v624
          %v737 = vpack.c.b16 %v627, %v625
          %v738 = vpack.c.b16 %v630, %v628
          %v739 = vpack.c.b16 %v631, %v629
          %v740 = vpack.c.b16 %v634, %v632
          %v741 = vpack.c.b16 %v635, %v633
          %v742 = vpack.c.b16 %v638, %v636
          %v743 = vpack.c.b16 %v639, %v637
          %v744 = vpack.c.b16 %v642, %v640
          %v745 = vpack.c.b16 %v643, %v641
          %v746 = vpack.c.b16 %v646, %v644
          %v747 = vpack.c.b16 %v647, %v645
          %v748 = vpack.c.b16 %v650, %v648
          %v749 = vpack.c.b16 %v651, %v649
          %v750 = vpack.c.b16 %v654, %v652
          %v751 = vpack.c.b16 %v655, %v653
          %v752 = vpack.c.b16 %v658, %v656
          %v753 = vpack.c.b16 %v659, %v657
          %v754 = vpack.c.b16 %v662, %v660
          %v755 = vpack.c.b16 %v663, %v661
          %v756 = vpack.c.b16 %v666, %v664
          %v757 = vpack.c.b16 %v667, %v665
          %v758 = vpack.c.b16 %v670, %v668
          %v759 = vpack.c.b16 %v671, %v669
          %v760 = vpack.c.b16 %v674, %v672
          %v761 = vpack.c.b16 %v675, %v673
          %v762 = vpack.c.b16 %v678, %v676
          %v763 = vpack.c.b16 %v679, %v677
          %v764 = vpack.c.b16 %v682, %v680
          %v765 = vpack.c.b16 %v683, %v681
          %v766 = vpack.c.b16 %v686, %v684
          %v767 = vpack.c.b16 %v687, %v685
          %v768 = vpack.c.b16 %v690, %v688
          %v769 = vpack.c.b16 %v691, %v689
          %v770 = vpack.c.b16 %v694, %v692
          %v771 = vpack.c.b16 %v695, %v693
          %v772 = vpack.c.b16 %v698, %v696
          %v773 = vpack.c.b16 %v699, %v697
          %v774 = vpack.c.b16 %v702, %v700
          %v775 = vpack.c.b16 %v703, %v701
          %v776 = vpack.c.b16 %v706, %v704
          %v777 = vpack.c.b16 %v707, %v705
          %v778 = vpack.c.b16 %v710, %v708
          %v779 = vpack.c.b16 %v711, %v709
          %v780 = vpack.c.b16 %v714, %v712
          %v781 = vpack.c.b16 %v715, %v713
          %v782 = vpack.c.b16 %v718, %v716
          %v783 = vpack.c.b16 %v719, %v717
          %848 = vmatprep.subr.bf16.mxu0 %v721
          %849 = vmatpush1.bf16.msra.mxu0 %v720
          %850 = vmatprep.subr.bf16.mxu0 %v723
          %851 = vmatpush1.bf16.msra.mxu0 %v722
          %852 = vmatprep.subr.bf16.mxu0 %v725
          %853 = vmatpush1.bf16.msra.mxu0 %v724
          %854 = vmatprep.subr.bf16.mxu0 %v727
          %855 = vmatpush1.bf16.msra.mxu0 %v726
          %856 = vmatprep.subr.bf16.mxu0 %v729
          %857 = vmatpush1.bf16.msra.mxu0 %v728
          %858 = vmatprep.subr.bf16.mxu0 %v731
          %859 = vmatpush1.bf16.msra.mxu0 %v730
          %860 = vmatprep.subr.bf16.mxu0 %v733
          %861 = vmatpush1.bf16.msra.mxu0 %v732
          %862 = vmatprep.subr.bf16.mxu0 %v735
          %863 = vmatpush1.bf16.msra.mxu0 %v734
          %864 = vmatprep.subr.bf16.mxu0 %v737
          %865 = vmatpush1.bf16.msra.mxu0 %v736
          %866 = vmatprep.subr.bf16.mxu0 %v739
          %867 = vmatpush1.bf16.msra.mxu0 %v738
          %868 = vmatprep.subr.bf16.mxu0 %v741
          %869 = vmatpush1.bf16.msra.mxu0 %v740
          %870 = vmatprep.subr.bf16.mxu0 %v743
          %871 = vmatpush1.bf16.msra.mxu0 %v742
          %872 = vmatprep.subr.bf16.mxu0 %v745
          %873 = vmatpush1.bf16.msra.mxu0 %v744
          %874 = vmatprep.subr.bf16.mxu0 %v747
          %875 = vmatpush1.bf16.msra.mxu0 %v746
          %876 = vmatprep.subr.bf16.mxu0 %v749
          %877 = vmatpush1.bf16.msra.mxu0 %v748
          %878 = vmatprep.subr.bf16.mxu0 %v751
          %879 = vmatpush1.bf16.msra.mxu0 %v750
          %880 = vmatprep.mubr.bf16.mxu0 %v513
          %881 = vmatmul.mubr.bf16.gmra.mrb[0].mxu0 %v512
          %v882 = vpop.f32.mrb[0].mxu0
          %v883 = vadd.f32 %v521, %v882
          %v884 = vpop.f32.mrb[0].mxu0
          %v885 = vadd.f32 %v525, %v884
          %v886 = vpop.f32.mrb[0].mxu0
          %v887 = vpop.f32.mrb[0].mxu0
          %888 = vdwg.mxu0
          %889 = vmatprep.subr.bf16.mxu0 %v753
          %890 = vmatpush1.bf16.msra.mxu0 %v752
          %891 = vmatprep.subr.bf16.mxu0 %v755
          %892 = vmatpush1.bf16.msra.mxu0 %v754
          %893 = vmatprep.subr.bf16.mxu0 %v757
          %894 = vmatpush1.bf16.msra.mxu0 %v756
          %895 = vmatprep.subr.bf16.mxu0 %v759
          %896 = vmatpush1.bf16.msra.mxu0 %v758
          %897 = vmatprep.subr.bf16.mxu0 %v761
          %898 = vmatpush1.bf16.msra.mxu0 %v760
          %899 = vmatprep.subr.bf16.mxu0 %v763
          %900 = vmatpush1.bf16.msra.mxu0 %v762
          %901 = vmatprep.subr.bf16.mxu0 %v765
          %902 = vmatpush1.bf16.msra.mxu0 %v764
          %903 = vmatprep.subr.bf16.mxu0 %v767
          %904 = vmatpush1.bf16.msra.mxu0 %v766
          %905 = vmatprep.subr.bf16.mxu0 %v769
          %906 = vmatpush1.bf16.msra.mxu0 %v768
          %907 = vmatprep.subr.bf16.mxu0 %v771
          %908 = vmatpush1.bf16.msra.mxu0 %v770
          %909 = vmatprep.subr.bf16.mxu0 %v773
          %910 = vmatpush1.bf16.msra.mxu0 %v772
          %911 = vmatprep.subr.bf16.mxu0 %v775
          %912 = vmatpush1.bf16.msra.mxu0 %v774
          %913 = vmatprep.subr.bf16.mxu0 %v777
          %914 = vmatpush1.bf16.msra.mxu0 %v776
          %915 = vmatprep.subr.bf16.mxu0 %v779
          %916 = vmatpush1.bf16.msra.mxu0 %v778
          %917 = vmatprep.subr.bf16.mxu0 %v781
          %918 = vmatpush1.bf16.msra.mxu0 %v780
          %919 = vmatprep.subr.bf16.mxu0 %v783
          %920 = vmatpush1.bf16.msra.mxu0 %v782
          %921 = vmatprep.mubr.bf16.mxu0 %v515
          %922 = vmatmul.mubr.bf16.gmra.mrb[0].mxu0 %v514
          %v923 = vpop.f32.mrb[0].mxu0
          %v924 = vadd.f32 %v883, %v923
          %v925 = vpop.f32.mrb[0].mxu0
          %v926 = vadd.f32 %v885, %v925
          %v927 = vpop.f32.mrb[0].mxu0
          %v928 = vpop.f32.mrb[0].mxu0
          %929 = vdwg.mxu0
          %v930 = vmax.f32 %v924, 0.0
          %v931 = vmax.f32 %v926, 0.0
          %v932 = vld [vmem:[#allocation8] sm:$0xff]
          %v933 = vld [vmem:[#allocation8 + $0x8] sm:$0xff]
          %v934 = vld [vmem:[#allocation8 + $0x10] sm:$0xff]
          %v935 = vld [vmem:[#allocation8 + $0x18] sm:$0xff]
          %v936 = vld [vmem:[#allocation8 + $0x20] sm:$0xff]
          %v937 = vld [vmem:[#allocation8 + $0x28] sm:$0xff]
          %v938 = vld [vmem:[#allocation8 + $0x30] sm:$0xff]
          %v939 = vld [vmem:[#allocation8 + $0x38] sm:$0xff]
          %v940 = vld [vmem:[#allocation8 + $0x40] sm:$0xff]
          %v941 = vld [vmem:[#allocation8 + $0x48] sm:$0xff]
          %v942 = vld [vmem:[#allocation8 + $0x50] sm:$0xff]
          %v943 = vld [vmem:[#allocation8 + $0x58] sm:$0xff]
          %v944 = vld [vmem:[#allocation8 + $0x60] sm:$0xff]
          %v945 = vld [vmem:[#allocation8 + $0x68] sm:$0xff]
          %v946 = vld [vmem:[#allocation8 + $0x70] sm:$0xff]
          %v947 = vld [vmem:[#allocation8 + $0x78] sm:$0xff]
          %v948 = vld [vmem:[#allocation8 + $0x80] sm:$0xff]
          %v949 = vld [vmem:[#allocation8 + $0x88] sm:$0xff]
          %v950 = vld [vmem:[#allocation8 + $0x90] sm:$0xff]
          %v951 = vld [vmem:[#allocation8 + $0x98] sm:$0xff]
          %v952 = vld [vmem:[#allocation8 + $0xa0] sm:$0xff]
          %v953 = vld [vmem:[#allocation8 + $0xa8] sm:$0xff]
          %v954 = vld [vmem:[#allocation8 + $0xb0] sm:$0xff]
          %v955 = vld [vmem:[#allocation8 + $0xb8] sm:$0xff]
          %v956 = vld [vmem:[#allocation8 + $0xc0] sm:$0xff]
          %v957 = vld [vmem:[#allocation8 + $0xc8] sm:$0xff]
          %v958 = vld [vmem:[#allocation8 + $0xd0] sm:$0xff]
          %v959 = vld [vmem:[#allocation8 + $0xd8] sm:$0xff]
          %v960 = vld [vmem:[#allocation8 + $0xe0] sm:$0xff]
          %v961 = vld [vmem:[#allocation8 + $0xe8] sm:$0xff]
          %v962 = vld [vmem:[#allocation8 + $0xf0] sm:$0xff]
          %v963 = vld [vmem:[#allocation8 + $0xf8] sm:$0xff]
          %v964 = vpack.c.bf16 %v930, %v930
          %v965 = vpack.c.bf16 %v931, %v931
          %v966 = vld [vmem:[#allocation9] sm:$0x3]
          %v968 = vlaneseq
          %v969 = vshrl.u32 %v968, 7
          %v970 = vsub.s32 0, %v969
          %v971 = vrot.slane %v966, %v970
          %v972 = vlaneseq
          %v973 = vshrl.u32 %v972, 7
          %v974 = vsub.s32 1, %v973
          %v975 = vrot.slane %v966, %v974
          %v1010 = vunpack.c.l.b16 %v932
          %v1011 = vunpack.c.h.b16 %v932
          %v1012 = vunpack.c.l.b16 %v933
          %v1013 = vunpack.c.h.b16 %v933
          %v1014 = vunpack.c.l.b16 %v934
          %v1015 = vunpack.c.h.b16 %v934
          %v1016 = vunpack.c.l.b16 %v935
          %v1017 = vunpack.c.h.b16 %v935
          %v1018 = vunpack.c.l.b16 %v936
          %v1019 = vunpack.c.h.b16 %v936
          %v1020 = vunpack.c.l.b16 %v937
          %v1021 = vunpack.c.h.b16 %v937
          %v1022 = vunpack.c.l.b16 %v938
          %v1023 = vunpack.c.h.b16 %v938
          %v1024 = vunpack.c.l.b16 %v939
          %v1025 = vunpack.c.h.b16 %v939
          %v1026 = vunpack.c.l.b16 %v940
          %v1027 = vunpack.c.h.b16 %v940
          %v1028 = vunpack.c.l.b16 %v941
          %v1029 = vunpack.c.h.b16 %v941
          %v1030 = vunpack.c.l.b16 %v942
          %v1031 = vunpack.c.h.b16 %v942
          %v1032 = vunpack.c.l.b16 %v943
          %v1033 = vunpack.c.h.b16 %v943
          %v1034 = vunpack.c.l.b16 %v944
          %v1035 = vunpack.c.h.b16 %v944
          %v1036 = vunpack.c.l.b16 %v945
          %v1037 = vunpack.c.h.b16 %v945
          %v1038 = vunpack.c.l.b16 %v946
          %v1039 = vunpack.c.h.b16 %v946
          %v1040 = vunpack.c.l.b16 %v947
          %v1041 = vunpack.c.h.b16 %v947
          %v1042 = vunpack.c.l.b16 %v948
          %v1043 = vunpack.c.h.b16 %v948
          %v1044 = vunpack.c.l.b16 %v949
          %v1045 = vunpack.c.h.b16 %v949
          %v1046 = vunpack.c.l.b16 %v950
          %v1047 = vunpack.c.h.b16 %v950
          %v1048 = vunpack.c.l.b16 %v951
          %v1049 = vunpack.c.h.b16 %v951
          %v1050 = vunpack.c.l.b16 %v952
          %v1051 = vunpack.c.h.b16 %v952
          %v1052 = vunpack.c.l.b16 %v953
          %v1053 = vunpack.c.h.b16 %v953
          %v1054 = vunpack.c.l.b16 %v954
          %v1055 = vunpack.c.h.b16 %v954
          %v1056 = vunpack.c.l.b16 %v955
          %v1057 = vunpack.c.h.b16 %v955
          %v1058 = vunpack.c.l.b16 %v956
          %v1059 = vunpack.c.h.b16 %v956
          %v1060 = vunpack.c.l.b16 %v957
          %v1061 = vunpack.c.h.b16 %v957
          %v1062 = vunpack.c.l.b16 %v958
          %v1063 = vunpack.c.h.b16 %v958
          %v1064 = vunpack.c.l.b16 %v959
          %v1065 = vunpack.c.h.b16 %v959
          %v1066 = vunpack.c.l.b16 %v960
          %v1067 = vunpack.c.h.b16 %v960
          %v1068 = vunpack.c.l.b16 %v961
          %v1069 = vunpack.c.h.b16 %v961
          %v1070 = vunpack.c.l.b16 %v962
          %v1071 = vunpack.c.h.b16 %v962
          %v1072 = vunpack.c.l.b16 %v963
          %v1073 = vunpack.c.h.b16 %v963
          %v1074 = vpack.c.b16 %v1012, %v1010
          %v1075 = vpack.c.b16 %v1013, %v1011
          %v1076 = vpack.c.b16 %v1016, %v1014
          %v1077 = vpack.c.b16 %v1017, %v1015
          %v1078 = vpack.c.b16 %v1020, %v1018
          %v1079 = vpack.c.b16 %v1021, %v1019
          %v1080 = vpack.c.b16 %v1024, %v1022
          %v1081 = vpack.c.b16 %v1025, %v1023
          %v1082 = vpack.c.b16 %v1028, %v1026
          %v1083 = vpack.c.b16 %v1029, %v1027
          %v1084 = vpack.c.b16 %v1032, %v1030
          %v1085 = vpack.c.b16 %v1033, %v1031
          %v1086 = vpack.c.b16 %v1036, %v1034
          %v1087 = vpack.c.b16 %v1037, %v1035
          %v1088 = vpack.c.b16 %v1040, %v1038
          %v1089 = vpack.c.b16 %v1041, %v1039
          %v1090 = vpack.c.b16 %v1044, %v1042
          %v1091 = vpack.c.b16 %v1045, %v1043
          %v1092 = vpack.c.b16 %v1048, %v1046
          %v1093 = vpack.c.b16 %v1049, %v1047
          %v1094 = vpack.c.b16 %v1052, %v1050
          %v1095 = vpack.c.b16 %v1053, %v1051
          %v1096 = vpack.c.b16 %v1056, %v1054
          %v1097 = vpack.c.b16 %v1057, %v1055
          %v1098 = vpack.c.b16 %v1060, %v1058
          %v1099 = vpack.c.b16 %v1061, %v1059
          %v1100 = vpack.c.b16 %v1064, %v1062
          %v1101 = vpack.c.b16 %v1065, %v1063
          %v1102 = vpack.c.b16 %v1068, %v1066
          %v1103 = vpack.c.b16 %v1069, %v1067
          %v1104 = vpack.c.b16 %v1072, %v1070
          %v1105 = vpack.c.b16 %v1073, %v1071
          %1138 = vmatprep.subr.bf16.mxu0 %v1075
          %1139 = vmatpush1.bf16.msra.mxu0 %v1074
          %1140 = vmatprep.subr.bf16.mxu0 %v1077
          %1141 = vmatpush1.bf16.msra.mxu0 %v1076
          %1142 = vmatprep.subr.bf16.mxu0 %v1079
          %1143 = vmatpush1.bf16.msra.mxu0 %v1078
          %1144 = vmatprep.subr.bf16.mxu0 %v1081
          %1145 = vmatpush1.bf16.msra.mxu0 %v1080
          %1146 = vmatprep.subr.bf16.mxu0 %v1083
          %1147 = vmatpush1.bf16.msra.mxu0 %v1082
          %1148 = vmatprep.subr.bf16.mxu0 %v1085
          %1149 = vmatpush1.bf16.msra.mxu0 %v1084
          %1150 = vmatprep.subr.bf16.mxu0 %v1087
          %1151 = vmatpush1.bf16.msra.mxu0 %v1086
          %1152 = vmatprep.subr.bf16.mxu0 %v1089
          %1153 = vmatpush1.bf16.msra.mxu0 %v1088
          %1154 = vmatprep.subr.bf16.mxu0 %v1091
          %1155 = vmatpush1.bf16.msra.mxu0 %v1090
          %1156 = vmatprep.subr.bf16.mxu0 %v1093
          %1157 = vmatpush1.bf16.msra.mxu0 %v1092
          %1158 = vmatprep.subr.bf16.mxu0 %v1095
          %1159 = vmatpush1.bf16.msra.mxu0 %v1094
          %1160 = vmatprep.subr.bf16.mxu0 %v1097
          %1161 = vmatpush1.bf16.msra.mxu0 %v1096
          %1162 = vmatprep.subr.bf16.mxu0 %v1099
          %1163 = vmatpush1.bf16.msra.mxu0 %v1098
          %1164 = vmatprep.subr.bf16.mxu0 %v1101
          %1165 = vmatpush1.bf16.msra.mxu0 %v1100
          %1166 = vmatprep.subr.bf16.mxu0 %v1103
          %1167 = vmatpush1.bf16.msra.mxu0 %v1102
          %1168 = vmatprep.subr.bf16.mxu0 %v1105
          %1169 = vmatpush1.bf16.msra.mxu0 %v1104
          %1170 = vmatprep.mubr.bf16.mxu0 %v965
          %1171 = vmatmul.mubr.bf16.gmra.mrb[0].mxu0 %v964
          %v1172 = vpop.f32.mrb[0].mxu0
          %v1173 = vadd.f32 %v971, %v1172
          %v1174 = vpop.f32.mrb[0].mxu0
          %v1175 = vadd.f32 %v975, %v1174
          %v1176 = vpop.f32.mrb[0].mxu0
          %v1177 = vpop.f32.mrb[0].mxu0
          %1178 = vdwg.mxu0
          %v1179 = vmax.f32 %v1173, 0.0
          %v1180 = vmax.f32 %v1175, 0.0
          %v1183 = vcombine.low %v1179, %v1180
          %v1185 = vunpack.c.l.s4 1983009808
          %v1186 = vunpack.c.0.s8 %v1185
          %v1187 = vlaneseq
          %v1188 = vshrl.u32 %v1187, 7
          %v1189 = vsub.s32 %v1186, %v1188
          %v1190 = vrot.slane %v1183, %v1189
          %1192 = vst [vmem:[#allocation2] sm:$0xf] %v1190
        $region76: #{autoencoder_forward.3} parent=47 // pred_fallthru
          _
        %v1193 = vld [vmem:[%s363] sm:$0xff]
        %v1194 = vld [vmem:[%s363 + $0x8] sm:$0xff]
        %v1195 = vld [vmem:[%s363 + $0x10] sm:$0xff]
        %v1196 = vld [vmem:[%s363 + $0x18] sm:$0xff]
        %v1197 = vld [vmem:[%s363 + $0x20] sm:$0xff]
        %v1198 = vld [vmem:[%s363 + $0x28] sm:$0xff]
        %v1199 = vld [vmem:[%s363 + $0x30] sm:$0xff]
        %v1200 = vld [vmem:[%s363 + $0x38] sm:$0xff]
        %v1201 = vld [vmem:[%s363 + $0x40] sm:$0xff]
        %v1202 = vld [vmem:[%s363 + $0x48] sm:$0xff]
        %v1203 = vld [vmem:[%s363 + $0x50] sm:$0xff]
        %v1204 = vld [vmem:[%s363 + $0x58] sm:$0xff]
        %v1205 = vld [vmem:[%s363 + $0x60] sm:$0xff]
        %v1206 = vld [vmem:[%s363 + $0x68] sm:$0xff]
        %v1207 = vld [vmem:[%s363 + $0x70] sm:$0xff]
        %v1208 = vld [vmem:[%s363 + $0x78] sm:$0xff]
        %v1209 = vld [vmem:[%s363 + $0x80] sm:$0xff]
        %v1210 = vld [vmem:[%s363 + $0x88] sm:$0xff]
        %v1211 = vld [vmem:[%s363 + $0x90] sm:$0xff]
        %v1212 = vld [vmem:[%s363 + $0x98] sm:$0xff]
        %v1213 = vld [vmem:[%s363 + $0xa0] sm:$0xff]
        %v1214 = vld [vmem:[%s363 + $0xa8] sm:$0xff]
        %v1215 = vld [vmem:[%s363 + $0xb0] sm:$0xff]
        %v1216 = vld [vmem:[%s363 + $0xb8] sm:$0xff]
        %v1217 = vld [vmem:[%s363 + $0xc0] sm:$0xff]
        %v1218 = vld [vmem:[%s363 + $0xc8] sm:$0xff]
        %v1219 = vld [vmem:[%s363 + $0xd0] sm:$0xff]
        %v1220 = vld [vmem:[%s363 + $0xd8] sm:$0xff]
        %v1221 = vld [vmem:[%s363 + $0xe0] sm:$0xff]
        %v1222 = vld [vmem:[%s363 + $0xe8] sm:$0xff]
        %v1223 = vld [vmem:[%s363 + $0xf0] sm:$0xff]
        %v1224 = vld [vmem:[%s363 + $0xf8] sm:$0xff]
        %v1225 = vld [vmem:[%s363 + $0x100] sm:$0xff]
        %v1226 = vld [vmem:[%s363 + $0x108] sm:$0xff]
        %v1227 = vld [vmem:[%s363 + $0x110] sm:$0xff]
        %v1228 = vld [vmem:[%s363 + $0x118] sm:$0xff]
        %v1229 = vld [vmem:[%s363 + $0x120] sm:$0xff]
        %v1230 = vld [vmem:[%s363 + $0x128] sm:$0xff]
        %v1231 = vld [vmem:[%s363 + $0x130] sm:$0xff]
        %v1232 = vld [vmem:[%s363 + $0x138] sm:$0xff]
        %v1233 = vld [vmem:[%s363 + $0x140] sm:$0xff]
        %v1234 = vld [vmem:[%s363 + $0x148] sm:$0xff]
        %v1235 = vld [vmem:[%s363 + $0x150] sm:$0xff]
        %v1236 = vld [vmem:[%s363 + $0x158] sm:$0xff]
        %v1237 = vld [vmem:[%s363 + $0x160] sm:$0xff]
        %v1238 = vld [vmem:[%s363 + $0x168] sm:$0xff]
        %v1239 = vld [vmem:[%s363 + $0x170] sm:$0xff]
        %v1240 = vld [vmem:[%s363 + $0x178] sm:$0xff]
        %v1241 = vld [vmem:[%s363 + $0x180] sm:$0xff]
        %v1242 = vld [vmem:[%s363 + $0x188] sm:$0xff]
        %v1243 = vld [vmem:[%s363 + $0x190] sm:$0xff]
        %v1244 = vld [vmem:[%s363 + $0x198] sm:$0xff]
        %v1245 = vld [vmem:[%s363 + $0x1a0] sm:$0xff]
        %v1246 = vld [vmem:[%s363 + $0x1a8] sm:$0xff]
        %v1247 = vld [vmem:[%s363 + $0x1b0] sm:$0xff]
        %v1248 = vld [vmem:[%s363 + $0x1b8] sm:$0xff]
        %v1249 = vld [vmem:[%s363 + $0x1c0] sm:$0xff]
        %v1250 = vld [vmem:[%s363 + $0x1c8] sm:$0xff]
        %v1251 = vld [vmem:[%s363 + $0x1d0] sm:$0xff]
        %v1252 = vld [vmem:[%s363 + $0x1d8] sm:$0xff]
        %v1253 = vld [vmem:[%s363 + $0x1e0] sm:$0xff]
        %v1254 = vld [vmem:[%s363 + $0x1e8] sm:$0xff]
        %v1255 = vld [vmem:[%s363 + $0x1f0] sm:$0xff]
        %v1256 = vld [vmem:[%s363 + $0x1f8] sm:$0xff]
        %v1257 = vld [vmem:[%s363 + $0x200] sm:$0xff]
        %v1258 = vld [vmem:[%s363 + $0x208] sm:$0xff]
        %v1259 = vld [vmem:[%s363 + $0x210] sm:$0xff]
        %v1260 = vld [vmem:[%s363 + $0x218] sm:$0xff]
        %v1261 = vld [vmem:[%s363 + $0x220] sm:$0xff]
        %v1262 = vld [vmem:[%s363 + $0x228] sm:$0xff]
        %v1263 = vld [vmem:[%s363 + $0x230] sm:$0xff]
        %v1264 = vld [vmem:[%s363 + $0x238] sm:$0xff]
        %v1265 = vld [vmem:[%s363 + $0x240] sm:$0xff]
        %v1266 = vld [vmem:[%s363 + $0x248] sm:$0xff]
        %v1267 = vld [vmem:[%s363 + $0x250] sm:$0xff]
        %v1268 = vld [vmem:[%s363 + $0x258] sm:$0xff]
        %v1269 = vld [vmem:[%s363 + $0x260] sm:$0xff]
        %v1270 = vld [vmem:[%s363 + $0x268] sm:$0xff]
        %v1271 = vld [vmem:[%s363 + $0x270] sm:$0xff]
        %v1272 = vld [vmem:[%s363 + $0x278] sm:$0xff]
        %v1273 = vld [vmem:[%s363 + $0x280] sm:$0xff]
        %v1274 = vld [vmem:[%s363 + $0x288] sm:$0xff]
        %v1275 = vld [vmem:[%s363 + $0x290] sm:$0xff]
        %v1276 = vld [vmem:[%s363 + $0x298] sm:$0xff]
        %v1277 = vld [vmem:[%s363 + $0x2a0] sm:$0xff]
        %v1278 = vld [vmem:[%s363 + $0x2a8] sm:$0xff]
        %v1279 = vld [vmem:[%s363 + $0x2b0] sm:$0xff]
        %v1280 = vld [vmem:[%s363 + $0x2b8] sm:$0xff]
        %v1281 = vld [vmem:[%s363 + $0x2c0] sm:$0xff]
        %v1282 = vld [vmem:[%s363 + $0x2c8] sm:$0xff]
        %v1283 = vld [vmem:[%s363 + $0x2d0] sm:$0xff]
        %v1284 = vld [vmem:[%s363 + $0x2d8] sm:$0xff]
        %v1285 = vld [vmem:[%s363 + $0x2e0] sm:$0xff]
        %v1286 = vld [vmem:[%s363 + $0x2e8] sm:$0xff]
        %v1287 = vld [vmem:[%s363 + $0x2f0] sm:$0xff]
        %v1288 = vld [vmem:[%s363 + $0x2f8] sm:$0xff]
        %v1289 = vld [vmem:[%s363 + $0x300] sm:$0xff]
        %v1290 = vld [vmem:[%s363 + $0x308] sm:$0xff]
        %v1291 = vld [vmem:[%s363 + $0x310] sm:$0xff]
        %v1292 = vld [vmem:[%s363 + $0x318] sm:$0xff]
        %v1293 = vld [vmem:[%s363 + $0x320] sm:$0xff]
        %v1294 = vld [vmem:[%s363 + $0x328] sm:$0xff]
        %v1295 = vld [vmem:[%s363 + $0x330] sm:$0xff]
        %v1296 = vld [vmem:[%s363 + $0x338] sm:$0xff]
        %v1297 = vld [vmem:[%s363 + $0x340] sm:$0xff]
        %v1298 = vld [vmem:[%s363 + $0x348] sm:$0xff]
        %v1299 = vld [vmem:[%s363 + $0x350] sm:$0xff]
        %v1300 = vld [vmem:[%s363 + $0x358] sm:$0xff]
        %v1301 = vld [vmem:[%s363 + $0x360] sm:$0xff]
        %v1302 = vld [vmem:[%s363 + $0x368] sm:$0xff]
        %v1303 = vld [vmem:[%s363 + $0x370] sm:$0xff]
        %v1304 = vld [vmem:[%s363 + $0x378] sm:$0xff]
        %v1305 = vld [vmem:[%s363 + $0x380] sm:$0xff]
        %v1306 = vld [vmem:[%s363 + $0x388] sm:$0xff]
        %v1307 = vld [vmem:[%s363 + $0x390] sm:$0xff]
        %v1308 = vld [vmem:[%s363 + $0x398] sm:$0xff]
        %v1309 = vld [vmem:[%s363 + $0x3a0] sm:$0xff]
        %v1310 = vld [vmem:[%s363 + $0x3a8] sm:$0xff]
        %v1311 = vld [vmem:[%s363 + $0x3b0] sm:$0xff]
        %v1312 = vld [vmem:[%s363 + $0x3b8] sm:$0xff]
        %v1313 = vld [vmem:[%s363 + $0x3c0] sm:$0xff]
        %v1314 = vld [vmem:[%s363 + $0x3c8] sm:$0xff]
        %v1315 = vld [vmem:[%s363 + $0x3d0] sm:$0xff]
        %v1316 = vld [vmem:[%s363 + $0x3d8] sm:$0xff]
        %v1317 = vld [vmem:[%s363 + $0x3e0] sm:$0xff]
        %v1318 = vld [vmem:[%s363 + $0x3e8] sm:$0xff]
        %v1319 = vld [vmem:[%s363 + $0x3f0] sm:$0xff]
        %v1320 = vld [vmem:[%s363 + $0x3f8] sm:$0xff]
        %v1321 = vld [vmem:[#allocation2] sm:$0xf]
        %v1324 = vunpack.c.l.s4 1983009808
        %v1325 = vunpack.c.0.s8 %v1324
        %v1326 = vlaneseq
        %v1327 = vshrl.u32 %v1326, 7
        %v1328 = vsub.s32 %v1325, %v1327
        %v1329 = vrot.slane %v1321, %v1328
        %v1330 = vcombine.high %v1329, %v1329
        %v1333 = vpack.c.bf16 %v1329, %v1329
        %v1334 = vpack.c.bf16 %v1330, %v1330
        %v1335 = vld [vmem:[%s372] sm:$0xff]
        %v1337 = vlaneseq
        %v1338 = vshrl.u32 %v1337, 7
        %v1339 = vsub.s32 0, %v1338
        %v1340 = vrot.slane %v1335, %v1339
        %v1341 = vlaneseq
        %v1342 = vshrl.u32 %v1341, 7
        %v1343 = vsub.s32 1, %v1342
        %v1344 = vrot.slane %v1335, %v1343
        %v1345 = vlaneseq
        %v1346 = vshrl.u32 %v1345, 7
        %v1347 = vsub.s32 2, %v1346
        %v1348 = vrot.slane %v1335, %v1347
        %v1349 = vlaneseq
        %v1350 = vshrl.u32 %v1349, 7
        %v1351 = vsub.s32 3, %v1350
        %v1352 = vrot.slane %v1335, %v1351
        %v1353 = vlaneseq
        %v1354 = vshrl.u32 %v1353, 7
        %v1355 = vsub.s32 4, %v1354
        %v1356 = vrot.slane %v1335, %v1355
        %v1357 = vlaneseq
        %v1358 = vshrl.u32 %v1357, 7
        %v1359 = vsub.s32 5, %v1358
        %v1360 = vrot.slane %v1335, %v1359
        %v1361 = vlaneseq
        %v1362 = vshrl.u32 %v1361, 7
        %v1363 = vsub.s32 6, %v1362
        %v1364 = vrot.slane %v1335, %v1363
        %v1365 = vlaneseq
        %v1366 = vshrl.u32 %v1365, 7
        %v1367 = vsub.s32 7, %v1366
        %v1368 = vrot.slane %v1335, %v1367
        %v1505 = vunpack.c.l.b16 %v1193
        %v1506 = vunpack.c.h.b16 %v1193
        %v1507 = vunpack.c.l.b16 %v1194
        %v1508 = vunpack.c.h.b16 %v1194
        %v1509 = vunpack.c.l.b16 %v1195
        %v1510 = vunpack.c.h.b16 %v1195
        %v1511 = vunpack.c.l.b16 %v1196
        %v1512 = vunpack.c.h.b16 %v1196
        %v1513 = vunpack.c.l.b16 %v1197
        %v1514 = vunpack.c.h.b16 %v1197
        %v1515 = vunpack.c.l.b16 %v1198
        %v1516 = vunpack.c.h.b16 %v1198
        %v1517 = vunpack.c.l.b16 %v1199
        %v1518 = vunpack.c.h.b16 %v1199
        %v1519 = vunpack.c.l.b16 %v1200
        %v1520 = vunpack.c.h.b16 %v1200
        %v1521 = vunpack.c.l.b16 %v1201
        %v1522 = vunpack.c.h.b16 %v1201
        %v1523 = vunpack.c.l.b16 %v1202
        %v1524 = vunpack.c.h.b16 %v1202
        %v1525 = vunpack.c.l.b16 %v1203
        %v1526 = vunpack.c.h.b16 %v1203
        %v1527 = vunpack.c.l.b16 %v1204
        %v1528 = vunpack.c.h.b16 %v1204
        %v1529 = vunpack.c.l.b16 %v1205
        %v1530 = vunpack.c.h.b16 %v1205
        %v1531 = vunpack.c.l.b16 %v1206
        %v1532 = vunpack.c.h.b16 %v1206
        %v1533 = vunpack.c.l.b16 %v1207
        %v1534 = vunpack.c.h.b16 %v1207
        %v1535 = vunpack.c.l.b16 %v1208
        %v1536 = vunpack.c.h.b16 %v1208
        %v1537 = vunpack.c.l.b16 %v1209
        %v1538 = vunpack.c.h.b16 %v1209
        %v1539 = vunpack.c.l.b16 %v1210
        %v1540 = vunpack.c.h.b16 %v1210
        %v1541 = vunpack.c.l.b16 %v1211
        %v1542 = vunpack.c.h.b16 %v1211
        %v1543 = vunpack.c.l.b16 %v1212
        %v1544 = vunpack.c.h.b16 %v1212
        %v1545 = vunpack.c.l.b16 %v1213
        %v1546 = vunpack.c.h.b16 %v1213
        %v1547 = vunpack.c.l.b16 %v1214
        %v1548 = vunpack.c.h.b16 %v1214
        %v1549 = vunpack.c.l.b16 %v1215
        %v1550 = vunpack.c.h.b16 %v1215
        %v1551 = vunpack.c.l.b16 %v1216
        %v1552 = vunpack.c.h.b16 %v1216
        %v1553 = vunpack.c.l.b16 %v1217
        %v1554 = vunpack.c.h.b16 %v1217
        %v1555 = vunpack.c.l.b16 %v1218
        %v1556 = vunpack.c.h.b16 %v1218
        %v1557 = vunpack.c.l.b16 %v1219
        %v1558 = vunpack.c.h.b16 %v1219
        %v1559 = vunpack.c.l.b16 %v1220
        %v1560 = vunpack.c.h.b16 %v1220
        %v1561 = vunpack.c.l.b16 %v1221
        %v1562 = vunpack.c.h.b16 %v1221
        %v1563 = vunpack.c.l.b16 %v1222
        %v1564 = vunpack.c.h.b16 %v1222
        %v1565 = vunpack.c.l.b16 %v1223
        %v1566 = vunpack.c.h.b16 %v1223
        %v1567 = vunpack.c.l.b16 %v1224
        %v1568 = vunpack.c.h.b16 %v1224
        %v1569 = vunpack.c.l.b16 %v1225
        %v1570 = vunpack.c.h.b16 %v1225
        %v1571 = vunpack.c.l.b16 %v1226
        %v1572 = vunpack.c.h.b16 %v1226
        %v1573 = vunpack.c.l.b16 %v1227
        %v1574 = vunpack.c.h.b16 %v1227
        %v1575 = vunpack.c.l.b16 %v1228
        %v1576 = vunpack.c.h.b16 %v1228
        %v1577 = vunpack.c.l.b16 %v1229
        %v1578 = vunpack.c.h.b16 %v1229
        %v1579 = vunpack.c.l.b16 %v1230
        %v1580 = vunpack.c.h.b16 %v1230
        %v1581 = vunpack.c.l.b16 %v1231
        %v1582 = vunpack.c.h.b16 %v1231
        %v1583 = vunpack.c.l.b16 %v1232
        %v1584 = vunpack.c.h.b16 %v1232
        %v1585 = vunpack.c.l.b16 %v1233
        %v1586 = vunpack.c.h.b16 %v1233
        %v1587 = vunpack.c.l.b16 %v1234
        %v1588 = vunpack.c.h.b16 %v1234
        %v1589 = vunpack.c.l.b16 %v1235
        %v1590 = vunpack.c.h.b16 %v1235
        %v1591 = vunpack.c.l.b16 %v1236
        %v1592 = vunpack.c.h.b16 %v1236
        %v1593 = vunpack.c.l.b16 %v1237
        %v1594 = vunpack.c.h.b16 %v1237
        %v1595 = vunpack.c.l.b16 %v1238
        %v1596 = vunpack.c.h.b16 %v1238
        %v1597 = vunpack.c.l.b16 %v1239
        %v1598 = vunpack.c.h.b16 %v1239
        %v1599 = vunpack.c.l.b16 %v1240
        %v1600 = vunpack.c.h.b16 %v1240
        %v1601 = vunpack.c.l.b16 %v1241
        %v1602 = vunpack.c.h.b16 %v1241
        %v1603 = vunpack.c.l.b16 %v1242
        %v1604 = vunpack.c.h.b16 %v1242
        %v1605 = vunpack.c.l.b16 %v1243
        %v1606 = vunpack.c.h.b16 %v1243
        %v1607 = vunpack.c.l.b16 %v1244
        %v1608 = vunpack.c.h.b16 %v1244
        %v1609 = vunpack.c.l.b16 %v1245
        %v1610 = vunpack.c.h.b16 %v1245
        %v1611 = vunpack.c.l.b16 %v1246
        %v1612 = vunpack.c.h.b16 %v1246
        %v1613 = vunpack.c.l.b16 %v1247
        %v1614 = vunpack.c.h.b16 %v1247
        %v1615 = vunpack.c.l.b16 %v1248
        %v1616 = vunpack.c.h.b16 %v1248
        %v1617 = vunpack.c.l.b16 %v1249
        %v1618 = vunpack.c.h.b16 %v1249
        %v1619 = vunpack.c.l.b16 %v1250
        %v1620 = vunpack.c.h.b16 %v1250
        %v1621 = vunpack.c.l.b16 %v1251
        %v1622 = vunpack.c.h.b16 %v1251
        %v1623 = vunpack.c.l.b16 %v1252
        %v1624 = vunpack.c.h.b16 %v1252
        %v1625 = vunpack.c.l.b16 %v1253
        %v1626 = vunpack.c.h.b16 %v1253
        %v1627 = vunpack.c.l.b16 %v1254
        %v1628 = vunpack.c.h.b16 %v1254
        %v1629 = vunpack.c.l.b16 %v1255
        %v1630 = vunpack.c.h.b16 %v1255
        %v1631 = vunpack.c.l.b16 %v1256
        %v1632 = vunpack.c.h.b16 %v1256
        %v1633 = vunpack.c.l.b16 %v1257
        %v1634 = vunpack.c.h.b16 %v1257
        %v1635 = vunpack.c.l.b16 %v1258
        %v1636 = vunpack.c.h.b16 %v1258
        %v1637 = vunpack.c.l.b16 %v1259
        %v1638 = vunpack.c.h.b16 %v1259
        %v1639 = vunpack.c.l.b16 %v1260
        %v1640 = vunpack.c.h.b16 %v1260
        %v1641 = vunpack.c.l.b16 %v1261
        %v1642 = vunpack.c.h.b16 %v1261
        %v1643 = vunpack.c.l.b16 %v1262
        %v1644 = vunpack.c.h.b16 %v1262
        %v1645 = vunpack.c.l.b16 %v1263
        %v1646 = vunpack.c.h.b16 %v1263
        %v1647 = vunpack.c.l.b16 %v1264
        %v1648 = vunpack.c.h.b16 %v1264
        %v1649 = vunpack.c.l.b16 %v1265
        %v1650 = vunpack.c.h.b16 %v1265
        %v1651 = vunpack.c.l.b16 %v1266
        %v1652 = vunpack.c.h.b16 %v1266
        %v1653 = vunpack.c.l.b16 %v1267
        %v1654 = vunpack.c.h.b16 %v1267
        %v1655 = vunpack.c.l.b16 %v1268
        %v1656 = vunpack.c.h.b16 %v1268
        %v1657 = vunpack.c.l.b16 %v1269
        %v1658 = vunpack.c.h.b16 %v1269
        %v1659 = vunpack.c.l.b16 %v1270
        %v1660 = vunpack.c.h.b16 %v1270
        %v1661 = vunpack.c.l.b16 %v1271
        %v1662 = vunpack.c.h.b16 %v1271
        %v1663 = vunpack.c.l.b16 %v1272
        %v1664 = vunpack.c.h.b16 %v1272
        %v1665 = vunpack.c.l.b16 %v1273
        %v1666 = vunpack.c.h.b16 %v1273
        %v1667 = vunpack.c.l.b16 %v1274
        %v1668 = vunpack.c.h.b16 %v1274
        %v1669 = vunpack.c.l.b16 %v1275
        %v1670 = vunpack.c.h.b16 %v1275
        %v1671 = vunpack.c.l.b16 %v1276
        %v1672 = vunpack.c.h.b16 %v1276
        %v1673 = vunpack.c.l.b16 %v1277
        %v1674 = vunpack.c.h.b16 %v1277
        %v1675 = vunpack.c.l.b16 %v1278
        %v1676 = vunpack.c.h.b16 %v1278
        %v1677 = vunpack.c.l.b16 %v1279
        %v1678 = vunpack.c.h.b16 %v1279
        %v1679 = vunpack.c.l.b16 %v1280
        %v1680 = vunpack.c.h.b16 %v1280
        %v1681 = vunpack.c.l.b16 %v1281
        %v1682 = vunpack.c.h.b16 %v1281
        %v1683 = vunpack.c.l.b16 %v1282
        %v1684 = vunpack.c.h.b16 %v1282
        %v1685 = vunpack.c.l.b16 %v1283
        %v1686 = vunpack.c.h.b16 %v1283
        %v1687 = vunpack.c.l.b16 %v1284
        %v1688 = vunpack.c.h.b16 %v1284
        %v1689 = vunpack.c.l.b16 %v1285
        %v1690 = vunpack.c.h.b16 %v1285
        %v1691 = vunpack.c.l.b16 %v1286
        %v1692 = vunpack.c.h.b16 %v1286
        %v1693 = vunpack.c.l.b16 %v1287
        %v1694 = vunpack.c.h.b16 %v1287
        %v1695 = vunpack.c.l.b16 %v1288
        %v1696 = vunpack.c.h.b16 %v1288
        %v1697 = vunpack.c.l.b16 %v1289
        %v1698 = vunpack.c.h.b16 %v1289
        %v1699 = vunpack.c.l.b16 %v1290
        %v1700 = vunpack.c.h.b16 %v1290
        %v1701 = vunpack.c.l.b16 %v1291
        %v1702 = vunpack.c.h.b16 %v1291
        %v1703 = vunpack.c.l.b16 %v1292
        %v1704 = vunpack.c.h.b16 %v1292
        %v1705 = vunpack.c.l.b16 %v1293
        %v1706 = vunpack.c.h.b16 %v1293
        %v1707 = vunpack.c.l.b16 %v1294
        %v1708 = vunpack.c.h.b16 %v1294
        %v1709 = vunpack.c.l.b16 %v1295
        %v1710 = vunpack.c.h.b16 %v1295
        %v1711 = vunpack.c.l.b16 %v1296
        %v1712 = vunpack.c.h.b16 %v1296
        %v1713 = vunpack.c.l.b16 %v1297
        %v1714 = vunpack.c.h.b16 %v1297
        %v1715 = vunpack.c.l.b16 %v1298
        %v1716 = vunpack.c.h.b16 %v1298
        %v1717 = vunpack.c.l.b16 %v1299
        %v1718 = vunpack.c.h.b16 %v1299
        %v1719 = vunpack.c.l.b16 %v1300
        %v1720 = vunpack.c.h.b16 %v1300
        %v1721 = vunpack.c.l.b16 %v1301
        %v1722 = vunpack.c.h.b16 %v1301
        %v1723 = vunpack.c.l.b16 %v1302
        %v1724 = vunpack.c.h.b16 %v1302
        %v1725 = vunpack.c.l.b16 %v1303
        %v1726 = vunpack.c.h.b16 %v1303
        %v1727 = vunpack.c.l.b16 %v1304
        %v1728 = vunpack.c.h.b16 %v1304
        %v1729 = vunpack.c.l.b16 %v1305
        %v1730 = vunpack.c.h.b16 %v1305
        %v1731 = vunpack.c.l.b16 %v1306
        %v1732 = vunpack.c.h.b16 %v1306
        %v1733 = vunpack.c.l.b16 %v1307
        %v1734 = vunpack.c.h.b16 %v1307
        %v1735 = vunpack.c.l.b16 %v1308
        %v1736 = vunpack.c.h.b16 %v1308
        %v1737 = vunpack.c.l.b16 %v1309
        %v1738 = vunpack.c.h.b16 %v1309
        %v1739 = vunpack.c.l.b16 %v1310
        %v1740 = vunpack.c.h.b16 %v1310
        %v1741 = vunpack.c.l.b16 %v1311
        %v1742 = vunpack.c.h.b16 %v1311
        %v1743 = vunpack.c.l.b16 %v1312
        %v1744 = vunpack.c.h.b16 %v1312
        %v1745 = vunpack.c.l.b16 %v1313
        %v1746 = vunpack.c.h.b16 %v1313
        %v1747 = vunpack.c.l.b16 %v1314
        %v1748 = vunpack.c.h.b16 %v1314
        %v1749 = vunpack.c.l.b16 %v1315
        %v1750 = vunpack.c.h.b16 %v1315
        %v1751 = vunpack.c.l.b16 %v1316
        %v1752 = vunpack.c.h.b16 %v1316
        %v1753 = vunpack.c.l.b16 %v1317
        %v1754 = vunpack.c.h.b16 %v1317
        %v1755 = vunpack.c.l.b16 %v1318
        %v1756 = vunpack.c.h.b16 %v1318
        %v1757 = vunpack.c.l.b16 %v1319
        %v1758 = vunpack.c.h.b16 %v1319
        %v1759 = vunpack.c.l.b16 %v1320
        %v1760 = vunpack.c.h.b16 %v1320
        %v1761 = vpack.c.b16 %v1513, %v1505
        %v1762 = vpack.c.b16 %v1514, %v1506
        %v1763 = vpack.c.b16 %v1515, %v1507
        %v1764 = vpack.c.b16 %v1516, %v1508
        %v1765 = vpack.c.b16 %v1517, %v1509
        %v1766 = vpack.c.b16 %v1518, %v1510
        %v1767 = vpack.c.b16 %v1519, %v1511
        %v1768 = vpack.c.b16 %v1520, %v1512
        %v1769 = vpack.c.b16 %v1529, %v1521
        %v1770 = vpack.c.b16 %v1530, %v1522
        %v1771 = vpack.c.b16 %v1531, %v1523
        %v1772 = vpack.c.b16 %v1532, %v1524
        %v1773 = vpack.c.b16 %v1533, %v1525
        %v1774 = vpack.c.b16 %v1534, %v1526
        %v1775 = vpack.c.b16 %v1535, %v1527
        %v1776 = vpack.c.b16 %v1536, %v1528
        %v1777 = vpack.c.b16 %v1545, %v1537
        %v1778 = vpack.c.b16 %v1546, %v1538
        %v1779 = vpack.c.b16 %v1547, %v1539
        %v1780 = vpack.c.b16 %v1548, %v1540
        %v1781 = vpack.c.b16 %v1549, %v1541
        %v1782 = vpack.c.b16 %v1550, %v1542
        %v1783 = vpack.c.b16 %v1551, %v1543
        %v1784 = vpack.c.b16 %v1552, %v1544
        %v1785 = vpack.c.b16 %v1561, %v1553
        %v1786 = vpack.c.b16 %v1562, %v1554
        %v1787 = vpack.c.b16 %v1563, %v1555
        %v1788 = vpack.c.b16 %v1564, %v1556
        %v1789 = vpack.c.b16 %v1565, %v1557
        %v1790 = vpack.c.b16 %v1566, %v1558
        %v1791 = vpack.c.b16 %v1567, %v1559
        %v1792 = vpack.c.b16 %v1568, %v1560
        %v1793 = vpack.c.b16 %v1577, %v1569
        %v1794 = vpack.c.b16 %v1578, %v1570
        %v1795 = vpack.c.b16 %v1579, %v1571
        %v1796 = vpack.c.b16 %v1580, %v1572
        %v1797 = vpack.c.b16 %v1581, %v1573
        %v1798 = vpack.c.b16 %v1582, %v1574
        %v1799 = vpack.c.b16 %v1583, %v1575
        %v1800 = vpack.c.b16 %v1584, %v1576
        %v1801 = vpack.c.b16 %v1593, %v1585
        %v1802 = vpack.c.b16 %v1594, %v1586
        %v1803 = vpack.c.b16 %v1595, %v1587
        %v1804 = vpack.c.b16 %v1596, %v1588
        %v1805 = vpack.c.b16 %v1597, %v1589
        %v1806 = vpack.c.b16 %v1598, %v1590
        %v1807 = vpack.c.b16 %v1599, %v1591
        %v1808 = vpack.c.b16 %v1600, %v1592
        %v1809 = vpack.c.b16 %v1609, %v1601
        %v1810 = vpack.c.b16 %v1610, %v1602
        %v1811 = vpack.c.b16 %v1611, %v1603
        %v1812 = vpack.c.b16 %v1612, %v1604
        %v1813 = vpack.c.b16 %v1613, %v1605
        %v1814 = vpack.c.b16 %v1614, %v1606
        %v1815 = vpack.c.b16 %v1615, %v1607
        %v1816 = vpack.c.b16 %v1616, %v1608
        %v1817 = vpack.c.b16 %v1625, %v1617
        %v1818 = vpack.c.b16 %v1626, %v1618
        %v1819 = vpack.c.b16 %v1627, %v1619
        %v1820 = vpack.c.b16 %v1628, %v1620
        %v1821 = vpack.c.b16 %v1629, %v1621
        %v1822 = vpack.c.b16 %v1630, %v1622
        %v1823 = vpack.c.b16 %v1631, %v1623
        %v1824 = vpack.c.b16 %v1632, %v1624
        %v1825 = vpack.c.b16 %v1641, %v1633
        %v1826 = vpack.c.b16 %v1642, %v1634
        %v1827 = vpack.c.b16 %v1643, %v1635
        %v1828 = vpack.c.b16 %v1644, %v1636
        %v1829 = vpack.c.b16 %v1645, %v1637
        %v1830 = vpack.c.b16 %v1646, %v1638
        %v1831 = vpack.c.b16 %v1647, %v1639
        %v1832 = vpack.c.b16 %v1648, %v1640
        %v1833 = vpack.c.b16 %v1657, %v1649
        %v1834 = vpack.c.b16 %v1658, %v1650
        %v1835 = vpack.c.b16 %v1659, %v1651
        %v1836 = vpack.c.b16 %v1660, %v1652
        %v1837 = vpack.c.b16 %v1661, %v1653
        %v1838 = vpack.c.b16 %v1662, %v1654
        %v1839 = vpack.c.b16 %v1663, %v1655
        %v1840 = vpack.c.b16 %v1664, %v1656
        %v1841 = vpack.c.b16 %v1673, %v1665
        %v1842 = vpack.c.b16 %v1674, %v1666
        %v1843 = vpack.c.b16 %v1675, %v1667
        %v1844 = vpack.c.b16 %v1676, %v1668
        %v1845 = vpack.c.b16 %v1677, %v1669
        %v1846 = vpack.c.b16 %v1678, %v1670
        %v1847 = vpack.c.b16 %v1679, %v1671
        %v1848 = vpack.c.b16 %v1680, %v1672
        %v1849 = vpack.c.b16 %v1689, %v1681
        %v1850 = vpack.c.b16 %v1690, %v1682
        %v1851 = vpack.c.b16 %v1691, %v1683
        %v1852 = vpack.c.b16 %v1692, %v1684
        %v1853 = vpack.c.b16 %v1693, %v1685
        %v1854 = vpack.c.b16 %v1694, %v1686
        %v1855 = vpack.c.b16 %v1695, %v1687
        %v1856 = vpack.c.b16 %v1696, %v1688
        %v1857 = vpack.c.b16 %v1705, %v1697
        %v1858 = vpack.c.b16 %v1706, %v1698
        %v1859 = vpack.c.b16 %v1707, %v1699
        %v1860 = vpack.c.b16 %v1708, %v1700
        %v1861 = vpack.c.b16 %v1709, %v1701
        %v1862 = vpack.c.b16 %v1710, %v1702
        %v1863 = vpack.c.b16 %v1711, %v1703
        %v1864 = vpack.c.b16 %v1712, %v1704
        %v1865 = vpack.c.b16 %v1721, %v1713
        %v1866 = vpack.c.b16 %v1722, %v1714
        %v1867 = vpack.c.b16 %v1723, %v1715
        %v1868 = vpack.c.b16 %v1724, %v1716
        %v1869 = vpack.c.b16 %v1725, %v1717
        %v1870 = vpack.c.b16 %v1726, %v1718
        %v1871 = vpack.c.b16 %v1727, %v1719
        %v1872 = vpack.c.b16 %v1728, %v1720
        %v1873 = vpack.c.b16 %v1737, %v1729
        %v1874 = vpack.c.b16 %v1738, %v1730
        %v1875 = vpack.c.b16 %v1739, %v1731
        %v1876 = vpack.c.b16 %v1740, %v1732
        %v1877 = vpack.c.b16 %v1741, %v1733
        %v1878 = vpack.c.b16 %v1742, %v1734
        %v1879 = vpack.c.b16 %v1743, %v1735
        %v1880 = vpack.c.b16 %v1744, %v1736
        %v1881 = vpack.c.b16 %v1753, %v1745
        %v1882 = vpack.c.b16 %v1754, %v1746
        %v1883 = vpack.c.b16 %v1755, %v1747
        %v1884 = vpack.c.b16 %v1756, %v1748
        %v1885 = vpack.c.b16 %v1757, %v1749
        %v1886 = vpack.c.b16 %v1758, %v1750
        %v1887 = vpack.c.b16 %v1759, %v1751
        %v1888 = vpack.c.b16 %v1760, %v1752
        %2017 = vmatprep.subr.bf16.mxu0 %v1762
        %2018 = vmatpush1.bf16.msra.mxu0 %v1761
        %2019 = vmatprep.subr.bf16.mxu0 %v1770
        %2020 = vmatpush1.bf16.msra.mxu0 %v1769
        %2021 = vmatprep.subr.bf16.mxu0 %v1778
        %2022 = vmatpush1.bf16.msra.mxu0 %v1777
        %2023 = vmatprep.subr.bf16.mxu0 %v1786
        %2024 = vmatpush1.bf16.msra.mxu0 %v1785
        %2025 = vmatprep.subr.bf16.mxu0 %v1794
        %2026 = vmatpush1.bf16.msra.mxu0 %v1793
        %2027 = vmatprep.subr.bf16.mxu0 %v1802
        %2028 = vmatpush1.bf16.msra.mxu0 %v1801
        %2029 = vmatprep.subr.bf16.mxu0 %v1810
        %2030 = vmatpush1.bf16.msra.mxu0 %v1809
        %2031 = vmatprep.subr.bf16.mxu0 %v1818
        %2032 = vmatpush1.bf16.msra.mxu0 %v1817
        %2033 = vmatprep.subr.bf16.mxu0 %v1826
        %2034 = vmatpush1.bf16.msra.mxu0 %v1825
        %2035 = vmatprep.subr.bf16.mxu0 %v1834
        %2036 = vmatpush1.bf16.msra.mxu0 %v1833
        %2037 = vmatprep.subr.bf16.mxu0 %v1842
        %2038 = vmatpush1.bf16.msra.mxu0 %v1841
        %2039 = vmatprep.subr.bf16.mxu0 %v1850
        %2040 = vmatpush1.bf16.msra.mxu0 %v1849
        %2041 = vmatprep.subr.bf16.mxu0 %v1858
        %2042 = vmatpush1.bf16.msra.mxu0 %v1857
        %2043 = vmatprep.subr.bf16.mxu0 %v1866
        %2044 = vmatpush1.bf16.msra.mxu0 %v1865
        %2045 = vmatprep.subr.bf16.mxu0 %v1874
        %2046 = vmatpush1.bf16.msra.mxu0 %v1873
        %2047 = vmatprep.subr.bf16.mxu0 %v1882
        %2048 = vmatpush1.bf16.msra.mxu0 %v1881
        %2049 = vmatprep.mubr.bf16.mxu0 %v1334
        %2050 = vmatmul.mubr.bf16.gmra.mrb[0].mxu0 %v1333
        %v2051 = vpop.f32.mrb[0].mxu0
        %v2052 = vadd.f32 %v1340, %v2051
        %v2053 = vpop.f32.mrb[0].mxu0
        %v2054 = vadd.f32 %v1344, %v2053
        %v2055 = vpop.f32.mrb[0].mxu0
        %v2056 = vpop.f32.mrb[0].mxu0
        %2057 = vdwg.mxu0
        %2058 = vmatprep.subr.bf16.mxu0 %v1764
        %2059 = vmatpush1.bf16.msra.mxu0 %v1763
        %2060 = vmatprep.subr.bf16.mxu0 %v1772
        %2061 = vmatpush1.bf16.msra.mxu0 %v1771
        %2062 = vmatprep.subr.bf16.mxu0 %v1780
        %2063 = vmatpush1.bf16.msra.mxu0 %v1779
        %2064 = vmatprep.subr.bf16.mxu0 %v1788
        %2065 = vmatpush1.bf16.msra.mxu0 %v1787
        %2066 = vmatprep.subr.bf16.mxu0 %v1796
        %2067 = vmatpush1.bf16.msra.mxu0 %v1795
        %2068 = vmatprep.subr.bf16.mxu0 %v1804
        %2069 = vmatpush1.bf16.msra.mxu0 %v1803
        %2070 = vmatprep.subr.bf16.mxu0 %v1812
        %2071 = vmatpush1.bf16.msra.mxu0 %v1811
        %2072 = vmatprep.subr.bf16.mxu0 %v1820
        %2073 = vmatpush1.bf16.msra.mxu0 %v1819
        %2074 = vmatprep.subr.bf16.mxu0 %v1828
        %2075 = vmatpush1.bf16.msra.mxu0 %v1827
        %2076 = vmatprep.subr.bf16.mxu0 %v1836
        %2077 = vmatpush1.bf16.msra.mxu0 %v1835
        %2078 = vmatprep.subr.bf16.mxu0 %v1844
        %2079 = vmatpush1.bf16.msra.mxu0 %v1843
        %2080 = vmatprep.subr.bf16.mxu0 %v1852
        %2081 = vmatpush1.bf16.msra.mxu0 %v1851
        %2082 = vmatprep.subr.bf16.mxu0 %v1860
        %2083 = vmatpush1.bf16.msra.mxu0 %v1859
        %2084 = vmatprep.subr.bf16.mxu0 %v1868
        %2085 = vmatpush1.bf16.msra.mxu0 %v1867
        %2086 = vmatprep.subr.bf16.mxu0 %v1876
        %2087 = vmatpush1.bf16.msra.mxu0 %v1875
        %2088 = vmatprep.subr.bf16.mxu0 %v1884
        %2089 = vmatpush1.bf16.msra.mxu0 %v1883
        %2090 = vmatprep.mubr.bf16.mxu0 %v1334
        %2091 = vmatmul.mubr.bf16.gmra.mrb[0].mxu0 %v1333
        %v2092 = vpop.f32.mrb[0].mxu0
        %v2093 = vadd.f32 %v1348, %v2092
        %v2094 = vpop.f32.mrb[0].mxu0
        %v2095 = vadd.f32 %v1352, %v2094
        %v2096 = vpop.f32.mrb[0].mxu0
        %v2097 = vpop.f32.mrb[0].mxu0
        %2098 = vdwg.mxu0
        %2099 = vmatprep.subr.bf16.mxu0 %v1766
        %2100 = vmatpush1.bf16.msra.mxu0 %v1765
        %2101 = vmatprep.subr.bf16.mxu0 %v1774
        %2102 = vmatpush1.bf16.msra.mxu0 %v1773
        %2103 = vmatprep.subr.bf16.mxu0 %v1782
        %2104 = vmatpush1.bf16.msra.mxu0 %v1781
        %2105 = vmatprep.subr.bf16.mxu0 %v1790
        %2106 = vmatpush1.bf16.msra.mxu0 %v1789
        %2107 = vmatprep.subr.bf16.mxu0 %v1798
        %2108 = vmatpush1.bf16.msra.mxu0 %v1797
        %2109 = vmatprep.subr.bf16.mxu0 %v1806
        %2110 = vmatpush1.bf16.msra.mxu0 %v1805
        %2111 = vmatprep.subr.bf16.mxu0 %v1814
        %2112 = vmatpush1.bf16.msra.mxu0 %v1813
        %2113 = vmatprep.subr.bf16.mxu0 %v1822
        %2114 = vmatpush1.bf16.msra.mxu0 %v1821
        %2115 = vmatprep.subr.bf16.mxu0 %v1830
        %2116 = vmatpush1.bf16.msra.mxu0 %v1829
        %2117 = vmatprep.subr.bf16.mxu0 %v1838
        %2118 = vmatpush1.bf16.msra.mxu0 %v1837
        %2119 = vmatprep.subr.bf16.mxu0 %v1846
        %2120 = vmatpush1.bf16.msra.mxu0 %v1845
        %2121 = vmatprep.subr.bf16.mxu0 %v1854
        %2122 = vmatpush1.bf16.msra.mxu0 %v1853
        %2123 = vmatprep.subr.bf16.mxu0 %v1862
        %2124 = vmatpush1.bf16.msra.mxu0 %v1861
        %2125 = vmatprep.subr.bf16.mxu0 %v1870
        %2126 = vmatpush1.bf16.msra.mxu0 %v1869
        %2127 = vmatprep.subr.bf16.mxu0 %v1878
        %2128 = vmatpush1.bf16.msra.mxu0 %v1877
        %2129 = vmatprep.subr.bf16.mxu0 %v1886
        %2130 = vmatpush1.bf16.msra.mxu0 %v1885
        %2131 = vmatprep.mubr.bf16.mxu0 %v1334
        %2132 = vmatmul.mubr.bf16.gmra.mrb[0].mxu0 %v1333
        %v2133 = vpop.f32.mrb[0].mxu0
        %v2134 = vadd.f32 %v1356, %v2133
        %v2135 = vpop.f32.mrb[0].mxu0
        %v2136 = vadd.f32 %v1360, %v2135
        %v2137 = vpop.f32.mrb[0].mxu0
        %v2138 = vpop.f32.mrb[0].mxu0
        %2139 = vdwg.mxu0
        %2140 = vmatprep.subr.bf16.mxu0 %v1768
        %2141 = vmatpush1.bf16.msra.mxu0 %v1767
        %2142 = vmatprep.subr.bf16.mxu0 %v1776
        %2143 = vmatpush1.bf16.msra.mxu0 %v1775
        %2144 = vmatprep.subr.bf16.mxu0 %v1784
        %2145 = vmatpush1.bf16.msra.mxu0 %v1783
        %2146 = vmatprep.subr.bf16.mxu0 %v1792
        %2147 = vmatpush1.bf16.msra.mxu0 %v1791
        %2148 = vmatprep.subr.bf16.mxu0 %v1800
        %2149 = vmatpush1.bf16.msra.mxu0 %v1799
        %2150 = vmatprep.subr.bf16.mxu0 %v1808
        %2151 = vmatpush1.bf16.msra.mxu0 %v1807
        %2152 = vmatprep.subr.bf16.mxu0 %v1816
        %2153 = vmatpush1.bf16.msra.mxu0 %v1815
        %2154 = vmatprep.subr.bf16.mxu0 %v1824
        %2155 = vmatpush1.bf16.msra.mxu0 %v1823
        %2156 = vmatprep.subr.bf16.mxu0 %v1832
        %2157 = vmatpush1.bf16.msra.mxu0 %v1831
        %2158 = vmatprep.subr.bf16.mxu0 %v1840
        %2159 = vmatpush1.bf16.msra.mxu0 %v1839
        %2160 = vmatprep.subr.bf16.mxu0 %v1848
        %2161 = vmatpush1.bf16.msra.mxu0 %v1847
        %2162 = vmatprep.subr.bf16.mxu0 %v1856
        %2163 = vmatpush1.bf16.msra.mxu0 %v1855
        %2164 = vmatprep.subr.bf16.mxu0 %v1864
        %2165 = vmatpush1.bf16.msra.mxu0 %v1863
        %2166 = vmatprep.subr.bf16.mxu0 %v1872
        %2167 = vmatpush1.bf16.msra.mxu0 %v1871
        %2168 = vmatprep.subr.bf16.mxu0 %v1880
        %2169 = vmatpush1.bf16.msra.mxu0 %v1879
        %2170 = vmatprep.subr.bf16.mxu0 %v1888
        %2171 = vmatpush1.bf16.msra.mxu0 %v1887
        %2172 = vmatprep.mubr.bf16.mxu0 %v1334
        %2173 = vmatmul.mubr.bf16.gmra.mrb[0].mxu0 %v1333
        %v2174 = vpop.f32.mrb[0].mxu0
        %v2175 = vadd.f32 %v1364, %v2174
        %v2176 = vpop.f32.mrb[0].mxu0
        %v2177 = vadd.f32 %v1368, %v2176
        %v2178 = vpop.f32.mrb[0].mxu0
        %v2179 = vpop.f32.mrb[0].mxu0
        %2180 = vdwg.mxu0
        %v2189 = vcombine.low %v2052, %v2054
        %v2190 = vcombine.low %v2093, %v2095
        %v2192 = vunpack.c.l.s4 1983009808
        %v2193 = vunpack.c.0.s8 %v2192
        %v2194 = vlaneseq
        %v2195 = vshrl.u32 %v2194, 7
        %v2196 = vsub.s32 %v2193, %v2195
        %v2197 = vrot.slane %v2189, %v2196
        %v2199 = vunpack.c.l.s4 1983009808
        %v2200 = vunpack.c.0.s8 %v2199
        %v2201 = vlaneseq
        %v2202 = vshrl.u32 %v2201, 7
        %v2203 = vsub.s32 %v2200, %v2202
        %v2204 = vrot.slane %v2190, %v2203
        %v2205 = vcombine.low %v2197, %v2204
        %v2206 = vcombine.low %v2134, %v2136
        %v2207 = vcombine.low %v2175, %v2177
        %v2209 = vunpack.c.l.s4 1983009808
        %v2210 = vunpack.c.0.s8 %v2209
        %v2211 = vlaneseq
        %v2212 = vshrl.u32 %v2211, 7
        %v2213 = vsub.s32 %v2210, %v2212
        %v2214 = vrot.slane %v2206, %v2213
        %v2216 = vunpack.c.l.s4 1983009808
        %v2217 = vunpack.c.0.s8 %v2216
        %v2218 = vlaneseq
        %v2219 = vshrl.u32 %v2218, 7
        %v2220 = vsub.s32 %v2217, %v2219
        %v2221 = vrot.slane %v2207, %v2220
        %v2222 = vcombine.low %v2214, %v2221
        %2225 = vst [vmem:[%s412] sm:$0xff] %v2205
        %2226 = vst [vmem:[%s412 + $0x8] sm:$0xff] %v2222
        %s2227 = sand.u32 %s208, 1
        %s2228 = scalar_lea.sflag [#allocation5], %s2227
        %s2229 = sand.u32 %s208, 1
        %s2230 = smul.addr %s2229, 16
        %s2231 = scalar_lea.vmem [#allocation13], %s2230
        // Predicated region
        $region77: #{autoencoder_forward.3} parent=47 // pred_check
          %p2232 = pneg %p218
        $region78: #{autoencoder_forward.3} parent=47 // pred_check_branch
          %2234 = sbr.rel (%p2232) target = $region80
        $region79: #{autoencoder_forward.3} parent=47 // pred_region
          %s2235 = smul.u32 8, %s29
          %s2237 = ssub.s32 256, 256
          %2238 = vsyncadd %s2228, %s2237
          %s2239 = smul.addr %s28, 48
          %s2240 = sadd.s32 %s2235, %s2239
          %s2241 = smul.addr %s2240, 32
          %s2242 = scalar_lea.hbm %s7, %s2241
          %s2244 = sshll.u32 %s2231, 4
          %s2245 = int_to_ptr.vmem [resolvable:$true] %s2244
          %2247 = dma.vmem_to_hbm [thread:$0]  %s2245, 256, %s2242, %s2228
        $region80: #{autoencoder_forward.3} parent=47 // pred_fallthru
          _
      $region48: #{autoencoder_forward.3} parent=5 // pred_fallthru
        _
      %p2248 = scmp.le.s32.totalorder 2, %s19
      // Predicated region
      $region81: #{autoencoder_forward.3} parent=5 // pred_check
        %p2249 = pneg %p2248
      $region82: #{autoencoder_forward.3} parent=5 // pred_check_branch
        %2251 = sbr.rel (%p2249) target = $region84
      $region83: #{autoencoder_forward.3} parent=5 // pred_region
        %s2252 = ssub.s32 %s19, 2
        // Predicated region
        $region85: #{autoencoder_forward.3} parent=83 // pred_check
          %p2253 = pneg %p224
        $region86: #{autoencoder_forward.3} parent=83 // pred_check_branch
          %2255 = sbr.rel (%p2253) target = $region88
        $region87: #{autoencoder_forward.3} parent=83 // pred_region
          %s2256 = sand.u32 %s209, 1
          %s2257 = scalar_lea.sflag [#allocation5], %s2256
          %s2258 = sand.u32 %s209, 1
          %s2259 = smul.addr %s2258, 16
          %s2260 = scalar_lea.vmem [#allocation13], %s2259
          %2261 = dma.done %s2257, 256
        $region88: #{autoencoder_forward.3} parent=83 // pred_fallthru
          _
      $region84: #{autoencoder_forward.3} parent=5 // pred_fallthru
        _
    $region6: #{autoencoder_forward.3} parent=1 // loop_footer
      %s23 = sadd.s32 1, %s19
    $region7: #{autoencoder_forward.3} parent=1 // loop_footer_branch
      %18 = sbr.rel target = $region3
    $region8: #{autoencoder_forward.3} parent=1 // loop_exit
      _
    %2262 = vsyncpa [#allocation4], 1
    %s2263 = scalar_lea.sflag [#allocation4], 1
    %2264 = vsyncpa %s2263, 1
    %2265 = vsyncpa [#allocation7], 1
    %2266 = vsyncpa [#allocation10], 1
    %2267 = vsyncpa [#allocation5], 1
    %s2268 = scalar_lea.sflag [#allocation5], 1
    %2269 = vsyncpa %s2268, 1

// kernel: autoencoder_forward.2
$region0: #{autoencoder_forward.2}
  #allocation0 [shape = 'u32[]', space=smem, size = 0x4, offset = 0x4, fixed_abs, tag = 'smem constant byte address 0x4 - core index']
  #allocation1 [shape = 'u32[144,128]{1,0:T(1,128)}', space=vmem, size = 0x12000, scoped, tag = 'internal scratch']
  %s0 = inlined_call_operand.vmem [shape: f32[2,64,3], index: 0, kind: input, shape index: {}]
  %s1 = inlined_call_operand.hbm [shape: f32[3,64], index: 1, kind: input, shape index: {}]
  %s2 = inlined_call_operand.hbm [shape: f32[1,64], index: 2, kind: input, shape index: {}]
  %s3 = inlined_call_operand.hbm [shape: bf16[64,128], index: 3, kind: input, shape index: {}]
  %s4 = inlined_call_operand.hbm [shape: f32[1,128], index: 4, kind: input, shape index: {}]
  %s5 = inlined_call_operand.hbm [shape: bf16[128,128], index: 5, kind: input, shape index: {}]
  %s6 = inlined_call_operand.hbm [shape: f32[1,128], index: 6, kind: input, shape index: {}]
  %s7 = inlined_call_operand.hbm [shape: bf16[128,256], index: 7, kind: input, shape index: {}]
  %s8 = inlined_call_operand.hbm [shape: f32[1,256], index: 8, kind: input, shape index: {}]
  %s9 = inlined_call_operand.hbm [shape: bf16[256,512], index: 9, kind: input, shape index: {}]
  %s10 = inlined_call_operand.hbm [shape: f32[1,512], index: 10, kind: input, shape index: {}]
  %s11 = inlined_call_operand.vmem [shape: f32[2,512], index: 11, kind: output, shape index: {}]
  %s12 = sld [smem:[#allocation0]]
  $region102: #{autoencoder_forward.2} parent=0
    _
  %s14 = ssub.s32 1, %s12
  %s15 = scalar_select 0, %s14, %s12
  $region1: #{autoencoder_forward.2} parent=0
    #allocation2 [shape = 'u8[2048]{0}', space=vmem, size = 0x800, scoped, tag = 'input window, operand 1, single buffered']
    #allocation3 [shape = 's32[1]{0}', space=sflag, size = 0x4, scoped, tag = 'scoped memory for autoencoder_forward.2']
    #allocation4 [shape = 'u8[512]{0}', space=vmem, size = 0x400, scoped, tag = 'input window, operand 2, single buffered']
    #allocation5 [shape = 's32[1]{0}', space=sflag, size = 0x4, scoped, tag = 'scoped memory for autoencoder_forward.2']
    #allocation6 [shape = 'u8[16384]{0}', space=vmem, size = 0x4000, scoped, tag = 'input window, operand 3, single buffered']
    #allocation7 [shape = 'u8[512]{0}', space=vmem, size = 0x400, scoped, tag = 'input window, operand 4, single buffered']
    #allocation8 [shape = 's32[1]{0}', space=sflag, size = 0x4, scoped, tag = 'scoped memory for autoencoder_forward.2']
    #allocation9 [shape = 'u8[32768]{0}', space=vmem, size = 0x8000, scoped, tag = 'input window, operand 5, single buffered']
    #allocation10 [shape = 'u8[512]{0}', space=vmem, size = 0x400, scoped, tag = 'input window, operand 6, single buffered']
    #allocation11 [shape = 's32[1]{0}', space=sflag, size = 0x4, scoped, tag = 'scoped memory for autoencoder_forward.2']
    #allocation12 [shape = 'u8[65536]{0}', space=vmem, size = 0x10000, scoped, tag = 'input window, operand 7, single buffered']
    #allocation13 [shape = 'u8[1024]{0}', space=vmem, size = 0x400, scoped, tag = 'input window, operand 8, single buffered']
    #allocation14 [shape = 's32[1]{0}', space=sflag, size = 0x4, scoped, tag = 'scoped memory for autoencoder_forward.2']
    #allocation15 [shape = 'u8[262144]{0}', space=vmem, size = 0x40000, scoped, tag = 'input window, operand 9, single buffered']
    #allocation16 [shape = 'u8[2048]{0}', space=vmem, size = 0x800, scoped, tag = 'input window, operand 10, single buffered']
    #allocation17 [shape = 's32[1]{0}', space=sflag, size = 0x4, scoped, tag = 'scoped memory for autoencoder_forward.2']
    %16 = vsyncpa [#allocation3], 0
    %17 = vsyncpa [#allocation5], 0
    %18 = vsyncpa [#allocation8], 0
    %19 = vsyncpa [#allocation11], 0
    %20 = vsyncpa [#allocation14], 0
    %21 = vsyncpa [#allocation17], 0
    // Predicated region
    $region2: #{autoencoder_forward.2} parent=1 // pred_check
      _
    $region3: #{autoencoder_forward.2} parent=1 // pred_check_branch
      %23 = sbr.rel (0) target = $region5
    $region4: #{autoencoder_forward.2} parent=1 // pred_region
      _
    $region5: #{autoencoder_forward.2} parent=1 // pred_fallthru
      _
    // Predicated region
    $region6: #{autoencoder_forward.2} parent=1 // pred_check
      _
    $region7: #{autoencoder_forward.2} parent=1 // pred_check_branch
      %25 = sbr.rel (0) target = $region9
    $region8: #{autoencoder_forward.2} parent=1 // pred_region
      %s27 = ssub.s32 64, 64
      %28 = vsyncadd [#allocation3], %s27
      %s30 = sshll.u32 [#allocation2], 4
      %s31 = int_to_ptr.vmem [resolvable:$true] %s30
      %33 = dma.hbm_to_vmem [thread:$0]  %s1, 64, %s31, [#allocation3]
    $region9: #{autoencoder_forward.2} parent=1 // pred_fallthru
      _
    // Predicated region
    $region10: #{autoencoder_forward.2} parent=1 // pred_check
      _
    $region11: #{autoencoder_forward.2} parent=1 // pred_check_branch
      %35 = sbr.rel (0) target = $region13
    $region12: #{autoencoder_forward.2} parent=1 // pred_region
      %s37 = ssub.s32 16, 16
      %38 = vsyncadd [#allocation5], %s37
      %s40 = sshll.u32 [#allocation4], 4
      %s41 = int_to_ptr.vmem [resolvable:$true] %s40
      %43 = dma.hbm_to_vmem [thread:$0]  %s2, 16, %s41, [#allocation5]
    $region13: #{autoencoder_forward.2} parent=1 // pred_fallthru
      _
    // Predicated region
    $region14: #{autoencoder_forward.2} parent=1 // pred_check
      _
    $region15: #{autoencoder_forward.2} parent=1 // pred_check_branch
      %45 = sbr.rel (0) target = $region17
    $region16: #{autoencoder_forward.2} parent=1 // pred_region
      %s47 = ssub.s32 512, 512
      %48 = vsyncadd [#allocation5], %s47
      %s49 = sshll.u32 [#allocation6], 4
      %s50 = int_to_ptr.vmem [resolvable:$true] %s49
      %55 = dma.hbm_to_vmem [thread:$0]  %s3, 512, %s50, [#allocation5], 64, 64, 4
    $region17: #{autoencoder_forward.2} parent=1 // pred_fallthru
      _
    // Predicated region
    $region18: #{autoencoder_forward.2} parent=1 // pred_check
      _
    $region19: #{autoencoder_forward.2} parent=1 // pred_check_branch
      %57 = sbr.rel (0) target = $region21
    $region20: #{autoencoder_forward.2} parent=1 // pred_region
      %s59 = ssub.s32 16, 16
      %60 = vsyncadd [#allocation8], %s59
      %s62 = sshll.u32 [#allocation7], 4
      %s63 = int_to_ptr.vmem [resolvable:$true] %s62
      %65 = dma.hbm_to_vmem [thread:$0]  %s4, 16, %s63, [#allocation8]
    $region21: #{autoencoder_forward.2} parent=1 // pred_fallthru
      _
    // Predicated region
    $region22: #{autoencoder_forward.2} parent=1 // pred_check
      _
    $region23: #{autoencoder_forward.2} parent=1 // pred_check_branch
      %67 = sbr.rel (0) target = $region25
    $region24: #{autoencoder_forward.2} parent=1 // pred_region
      %s69 = ssub.s32 1024, 1024
      %70 = vsyncadd [#allocation8], %s69
      %s71 = sshll.u32 [#allocation9], 4
      %s72 = int_to_ptr.vmem [resolvable:$true] %s71
      %77 = dma.hbm_to_vmem [thread:$0]  %s5, 1024, %s72, [#allocation8], 64, 64, 4
    $region25: #{autoencoder_forward.2} parent=1 // pred_fallthru
      _
    // Predicated region
    $region26: #{autoencoder_forward.2} parent=1 // pred_check
      _
    $region27: #{autoencoder_forward.2} parent=1 // pred_check_branch
      %79 = sbr.rel (0) target = $region29
    $region28: #{autoencoder_forward.2} parent=1 // pred_region
      %s81 = ssub.s32 16, 16
      %82 = vsyncadd [#allocation11], %s81
      %s84 = sshll.u32 [#allocation10], 4
      %s85 = int_to_ptr.vmem [resolvable:$true] %s84
      %87 = dma.hbm_to_vmem [thread:$0]  %s6, 16, %s85, [#allocation11]
    $region29: #{autoencoder_forward.2} parent=1 // pred_fallthru
      _
    // Predicated region
    $region30: #{autoencoder_forward.2} parent=1 // pred_check
      _
    $region31: #{autoencoder_forward.2} parent=1 // pred_check_branch
      %89 = sbr.rel (0) target = $region33
    $region32: #{autoencoder_forward.2} parent=1 // pred_region
      %s91 = ssub.s32 2048, 2048
      %92 = vsyncadd [#allocation11], %s91
      %s93 = sshll.u32 [#allocation12], 4
      %s94 = int_to_ptr.vmem [resolvable:$true] %s93
      %99 = dma.hbm_to_vmem [thread:$0]  %s7, 2048, %s94, [#allocation11], 128, 128, 8
    $region33: #{autoencoder_forward.2} parent=1 // pred_fallthru
      _
    // Predicated region
    $region34: #{autoencoder_forward.2} parent=1 // pred_check
      _
    $region35: #{autoencoder_forward.2} parent=1 // pred_check_branch
      %101 = sbr.rel (0) target = $region37
    $region36: #{autoencoder_forward.2} parent=1 // pred_region
      %s103 = ssub.s32 32, 32
      %104 = vsyncadd [#allocation14], %s103
      %s106 = sshll.u32 [#allocation13], 4
      %s107 = int_to_ptr.vmem [resolvable:$true] %s106
      %109 = dma.hbm_to_vmem [thread:$0]  %s8, 32, %s107, [#allocation14]
    $region37: #{autoencoder_forward.2} parent=1 // pred_fallthru
      _
    // Predicated region
    $region38: #{autoencoder_forward.2} parent=1 // pred_check
      _
    $region39: #{autoencoder_forward.2} parent=1 // pred_check_branch
      %111 = sbr.rel (0) target = $region41
    $region40: #{autoencoder_forward.2} parent=1 // pred_region
      %s113 = ssub.s32 8192, 8192
      %114 = vsyncadd [#allocation14], %s113
      %s115 = sshll.u32 [#allocation15], 4
      %s116 = int_to_ptr.vmem [resolvable:$true] %s115
      %121 = dma.hbm_to_vmem [thread:$0]  %s9, 8192, %s116, [#allocation14], 256, 256, 16
    $region41: #{autoencoder_forward.2} parent=1 // pred_fallthru
      _
    // Predicated region
    $region42: #{autoencoder_forward.2} parent=1 // pred_check
      _
    $region43: #{autoencoder_forward.2} parent=1 // pred_check_branch
      %123 = sbr.rel (0) target = $region45
    $region44: #{autoencoder_forward.2} parent=1 // pred_region
      %s125 = ssub.s32 64, 64
      %126 = vsyncadd [#allocation17], %s125
      %s128 = sshll.u32 [#allocation16], 4
      %s129 = int_to_ptr.vmem [resolvable:$true] %s128
      %131 = dma.hbm_to_vmem [thread:$0]  %s10, 64, %s129, [#allocation17]
    $region45: #{autoencoder_forward.2} parent=1 // pred_fallthru
      _
    // Predicated region
    $region46: #{autoencoder_forward.2} parent=1 // pred_check
      _
    $region47: #{autoencoder_forward.2} parent=1 // pred_check_branch
      %133 = sbr.rel (0) target = $region49
    $region48: #{autoencoder_forward.2} parent=1 // pred_region
      %134 = dma.done [#allocation3], 64
    $region49: #{autoencoder_forward.2} parent=1 // pred_fallthru
      _
    // Predicated region
    $region50: #{autoencoder_forward.2} parent=1 // pred_check
      _
    $region51: #{autoencoder_forward.2} parent=1 // pred_check_branch
      %136 = sbr.rel (0) target = $region53
    $region52: #{autoencoder_forward.2} parent=1 // pred_region
      %137 = dma.done [#allocation5], 16
    $region53: #{autoencoder_forward.2} parent=1 // pred_fallthru
      _
    // Predicated region
    $region54: #{autoencoder_forward.2} parent=1 // pred_check
      _
    $region55: #{autoencoder_forward.2} parent=1 // pred_check_branch
      %139 = sbr.rel (0) target = $region57
    $region56: #{autoencoder_forward.2} parent=1 // pred_region
      %140 = dma.done [#allocation5], 512
    $region57: #{autoencoder_forward.2} parent=1 // pred_fallthru
      _
    // Predicated region
    $region58: #{autoencoder_forward.2} parent=1 // pred_check
      _
    $region59: #{autoencoder_forward.2} parent=1 // pred_check_branch
      %142 = sbr.rel (0) target = $region61
    $region60: #{autoencoder_forward.2} parent=1 // pred_region
      %143 = dma.done [#allocation8], 16
    $region61: #{autoencoder_forward.2} parent=1 // pred_fallthru
      _
    // Predicated region
    $region62: #{autoencoder_forward.2} parent=1 // pred_check
      _
    $region63: #{autoencoder_forward.2} parent=1 // pred_check_branch
      %145 = sbr.rel (0) target = $region65
    $region64: #{autoencoder_forward.2} parent=1 // pred_region
      %146 = dma.done [#allocation8], 1024
    $region65: #{autoencoder_forward.2} parent=1 // pred_fallthru
      _
    // Predicated region
    $region66: #{autoencoder_forward.2} parent=1 // pred_check
      _
    $region67: #{autoencoder_forward.2} parent=1 // pred_check_branch
      %148 = sbr.rel (0) target = $region69
    $region68: #{autoencoder_forward.2} parent=1 // pred_region
      %149 = dma.done [#allocation11], 16
    $region69: #{autoencoder_forward.2} parent=1 // pred_fallthru
      _
    // Predicated region
    $region70: #{autoencoder_forward.2} parent=1 // pred_check
      _
    $region71: #{autoencoder_forward.2} parent=1 // pred_check_branch
      %151 = sbr.rel (0) target = $region73
    $region72: #{autoencoder_forward.2} parent=1 // pred_region
      %152 = dma.done [#allocation11], 2048
    $region73: #{autoencoder_forward.2} parent=1 // pred_fallthru
      _
    // Predicated region
    $region74: #{autoencoder_forward.2} parent=1 // pred_check
      _
    $region75: #{autoencoder_forward.2} parent=1 // pred_check_branch
      %154 = sbr.rel (0) target = $region77
    $region76: #{autoencoder_forward.2} parent=1 // pred_region
      %155 = dma.done [#allocation14], 32
    $region77: #{autoencoder_forward.2} parent=1 // pred_fallthru
      _
    // Predicated region
    $region78: #{autoencoder_forward.2} parent=1 // pred_check
      _
    $region79: #{autoencoder_forward.2} parent=1 // pred_check_branch
      %157 = sbr.rel (0) target = $region81
    $region80: #{autoencoder_forward.2} parent=1 // pred_region
      %158 = dma.done [#allocation14], 8192
    $region81: #{autoencoder_forward.2} parent=1 // pred_fallthru
      _
    // Predicated region
    $region82: #{autoencoder_forward.2} parent=1 // pred_check
      _
    $region83: #{autoencoder_forward.2} parent=1 // pred_check_branch
      %160 = sbr.rel (0) target = $region85
    $region84: #{autoencoder_forward.2} parent=1 // pred_region
      %161 = dma.done [#allocation17], 64
    $region85: #{autoencoder_forward.2} parent=1 // pred_fallthru
      _
    %v163 = vld [vmem:[%s0] sm:$0xff]
    %v164 = vld [vmem:[%s0 + $0x8] sm:$0xff]
    %v165 = vld [vmem:[%s0 + $0x10] sm:$0xff]
    %v166 = vld [vmem:[%s0 + $0x18] sm:$0xff]
    %v167 = vld [vmem:[%s0 + $0x20] sm:$0xff]
    %v168 = vld [vmem:[%s0 + $0x28] sm:$0xff]
    %v169 = vld [vmem:[%s0 + $0x30] sm:$0xff]
    %v170 = vld [vmem:[%s0 + $0x38] sm:$0xff]
    %v171 = vld [vmem:[%s0 + $0x40] sm:$0xff]
    %v172 = vld [vmem:[%s0 + $0x48] sm:$0xff]
    %v173 = vld [vmem:[%s0 + $0x50] sm:$0xff]
    %v174 = vld [vmem:[%s0 + $0x58] sm:$0xff]
    %v175 = vld [vmem:[%s0 + $0x60] sm:$0xff]
    %v176 = vld [vmem:[%s0 + $0x68] sm:$0xff]
    %v177 = vld [vmem:[%s0 + $0x70] sm:$0xff]
    %v178 = vld [vmem:[%s0 + $0x78] sm:$0xff]
    %v179 = vld [vmem:[#allocation2] sm:$0x7]
    %181 = vset.pattern.permute.xlu0 0
    %182 = vperm.xlu0 %181, %v163
    %v183 = vpop.permute.xlu0 %182
    %186 = vset.pattern.permute.xlu0 0
    %187 = vperm.xlu0 %186, %v164
    %v188 = vpop.permute.xlu0 %187
    %191 = vset.pattern.permute.xlu0 0
    %192 = vperm.xlu0 %191, %v165
    %v193 = vpop.permute.xlu0 %192
    %196 = vset.pattern.permute.xlu0 0
    %197 = vperm.xlu0 %196, %v166
    %v198 = vpop.permute.xlu0 %197
    %201 = vset.pattern.permute.xlu0 0
    %202 = vperm.xlu0 %201, %v167
    %v203 = vpop.permute.xlu0 %202
    %206 = vset.pattern.permute.xlu0 0
    %207 = vperm.xlu0 %206, %v168
    %v208 = vpop.permute.xlu0 %207
    %211 = vset.pattern.permute.xlu0 0
    %212 = vperm.xlu0 %211, %v169
    %v213 = vpop.permute.xlu0 %212
    %216 = vset.pattern.permute.xlu0 0
    %217 = vperm.xlu0 %216, %v170
    %v218 = vpop.permute.xlu0 %217
    %221 = vset.pattern.permute.xlu0 0
    %222 = vperm.xlu0 %221, %v171
    %v223 = vpop.permute.xlu0 %222
    %226 = vset.pattern.permute.xlu0 0
    %227 = vperm.xlu0 %226, %v172
    %v228 = vpop.permute.xlu0 %227
    %231 = vset.pattern.permute.xlu0 0
    %232 = vperm.xlu0 %231, %v173
    %v233 = vpop.permute.xlu0 %232
    %236 = vset.pattern.permute.xlu0 0
    %237 = vperm.xlu0 %236, %v174
    %v238 = vpop.permute.xlu0 %237
    %241 = vset.pattern.permute.xlu0 0
    %242 = vperm.xlu0 %241, %v175
    %v243 = vpop.permute.xlu0 %242
    %246 = vset.pattern.permute.xlu0 0
    %247 = vperm.xlu0 %246, %v176
    %v248 = vpop.permute.xlu0 %247
    %251 = vset.pattern.permute.xlu0 0
    %252 = vperm.xlu0 %251, %v177
    %v253 = vpop.permute.xlu0 %252
    %256 = vset.pattern.permute.xlu0 0
    %257 = vperm.xlu0 %256, %v178
    %v258 = vpop.permute.xlu0 %257
    %v260 = vlaneseq
    %v261 = vshrl.u32 %v260, 7
    %v262 = vsub.s32 0, %v261
    %v263 = vrot.slane %v179, %v262
    %v264 = vmul.f32 %v183, %v263
    %v265 = vmul.f32 %v188, %v263
    %v266 = vmul.f32 %v193, %v263
    %v267 = vmul.f32 %v198, %v263
    %v268 = vmul.f32 %v203, %v263
    %v269 = vmul.f32 %v208, %v263
    %v270 = vmul.f32 %v213, %v263
    %v271 = vmul.f32 %v218, %v263
    %v272 = vmul.f32 %v223, %v263
    %v273 = vmul.f32 %v228, %v263
    %v274 = vmul.f32 %v233, %v263
    %v275 = vmul.f32 %v238, %v263
    %v276 = vmul.f32 %v243, %v263
    %v277 = vmul.f32 %v248, %v263
    %v278 = vmul.f32 %v253, %v263
    %v279 = vmul.f32 %v258, %v263
    %280 = vset.pattern.permute.xlu0 1
    %281 = vperm.xlu0 %280, %v163
    %v282 = vpop.permute.xlu0 %281
    %284 = vset.pattern.permute.xlu0 1
    %285 = vperm.xlu0 %284, %v164
    %v286 = vpop.permute.xlu0 %285
    %288 = vset.pattern.permute.xlu0 1
    %289 = vperm.xlu0 %288, %v165
    %v290 = vpop.permute.xlu0 %289
    %292 = vset.pattern.permute.xlu0 1
    %293 = vperm.xlu0 %292, %v166
    %v294 = vpop.permute.xlu0 %293
    %296 = vset.pattern.permute.xlu0 1
    %297 = vperm.xlu0 %296, %v167
    %v298 = vpop.permute.xlu0 %297
    %300 = vset.pattern.permute.xlu0 1
    %301 = vperm.xlu0 %300, %v168
    %v302 = vpop.permute.xlu0 %301
    %304 = vset.pattern.permute.xlu0 1
    %305 = vperm.xlu0 %304, %v169
    %v306 = vpop.permute.xlu0 %305
    %308 = vset.pattern.permute.xlu0 1
    %309 = vperm.xlu0 %308, %v170
    %v310 = vpop.permute.xlu0 %309
    %312 = vset.pattern.permute.xlu0 1
    %313 = vperm.xlu0 %312, %v171
    %v314 = vpop.permute.xlu0 %313
    %316 = vset.pattern.permute.xlu0 1
    %317 = vperm.xlu0 %316, %v172
    %v318 = vpop.permute.xlu0 %317
    %320 = vset.pattern.permute.xlu0 1
    %321 = vperm.xlu0 %320, %v173
    %v322 = vpop.permute.xlu0 %321
    %324 = vset.pattern.permute.xlu0 1
    %325 = vperm.xlu0 %324, %v174
    %v326 = vpop.permute.xlu0 %325
    %328 = vset.pattern.permute.xlu0 1
    %329 = vperm.xlu0 %328, %v175
    %v330 = vpop.permute.xlu0 %329
    %332 = vset.pattern.permute.xlu0 1
    %333 = vperm.xlu0 %332, %v176
    %v334 = vpop.permute.xlu0 %333
    %336 = vset.pattern.permute.xlu0 1
    %337 = vperm.xlu0 %336, %v177
    %v338 = vpop.permute.xlu0 %337
    %340 = vset.pattern.permute.xlu0 1
    %341 = vperm.xlu0 %340, %v178
    %v342 = vpop.permute.xlu0 %341
    %v344 = vlaneseq
    %v345 = vshrl.u32 %v344, 7
    %v346 = vsub.s32 1, %v345
    %v347 = vrot.slane %v179, %v346
    %v348 = vmul.f32 %v282, %v347
    %v349 = vmul.f32 %v286, %v347
    %v350 = vmul.f32 %v290, %v347
    %v351 = vmul.f32 %v294, %v347
    %v352 = vmul.f32 %v298, %v347
    %v353 = vmul.f32 %v302, %v347
    %v354 = vmul.f32 %v306, %v347
    %v355 = vmul.f32 %v310, %v347
    %v356 = vmul.f32 %v314, %v347
    %v357 = vmul.f32 %v318, %v347
    %v358 = vmul.f32 %v322, %v347
    %v359 = vmul.f32 %v326, %v347
    %v360 = vmul.f32 %v330, %v347
    %v361 = vmul.f32 %v334, %v347
    %v362 = vmul.f32 %v338, %v347
    %v363 = vmul.f32 %v342, %v347
    %v364 = vadd.f32 %v264, %v348
    %v365 = vadd.f32 %v265, %v349
    %v366 = vadd.f32 %v266, %v350
    %v367 = vadd.f32 %v267, %v351
    %v368 = vadd.f32 %v268, %v352
    %v369 = vadd.f32 %v269, %v353
    %v370 = vadd.f32 %v270, %v354
    %v371 = vadd.f32 %v271, %v355
    %v372 = vadd.f32 %v272, %v356
    %v373 = vadd.f32 %v273, %v357
    %v374 = vadd.f32 %v274, %v358
    %v375 = vadd.f32 %v275, %v359
    %v376 = vadd.f32 %v276, %v360
    %v377 = vadd.f32 %v277, %v361
    %v378 = vadd.f32 %v278, %v362
    %v379 = vadd.f32 %v279, %v363
    %380 = vset.pattern.permute.xlu0 2
    %381 = vperm.xlu0 %380, %v163
    %v382 = vpop.permute.xlu0 %381
    %384 = vset.pattern.permute.xlu0 2
    %385 = vperm.xlu0 %384, %v164
    %v386 = vpop.permute.xlu0 %385
    %388 = vset.pattern.permute.xlu0 2
    %389 = vperm.xlu0 %388, %v165
    %v390 = vpop.permute.xlu0 %389
    %392 = vset.pattern.permute.xlu0 2
    %393 = vperm.xlu0 %392, %v166
    %v394 = vpop.permute.xlu0 %393
    %396 = vset.pattern.permute.xlu0 2
    %397 = vperm.xlu0 %396, %v167
    %v398 = vpop.permute.xlu0 %397
    %400 = vset.pattern.permute.xlu0 2
    %401 = vperm.xlu0 %400, %v168
    %v402 = vpop.permute.xlu0 %401
    %404 = vset.pattern.permute.xlu0 2
    %405 = vperm.xlu0 %404, %v169
    %v406 = vpop.permute.xlu0 %405
    %408 = vset.pattern.permute.xlu0 2
    %409 = vperm.xlu0 %408, %v170
    %v410 = vpop.permute.xlu0 %409
    %412 = vset.pattern.permute.xlu0 2
    %413 = vperm.xlu0 %412, %v171
    %v414 = vpop.permute.xlu0 %413
    %416 = vset.pattern.permute.xlu0 2
    %417 = vperm.xlu0 %416, %v172
    %v418 = vpop.permute.xlu0 %417
    %420 = vset.pattern.permute.xlu0 2
    %421 = vperm.xlu0 %420, %v173
    %v422 = vpop.permute.xlu0 %421
    %424 = vset.pattern.permute.xlu0 2
    %425 = vperm.xlu0 %424, %v174
    %v426 = vpop.permute.xlu0 %425
    %428 = vset.pattern.permute.xlu0 2
    %429 = vperm.xlu0 %428, %v175
    %v430 = vpop.permute.xlu0 %429
    %432 = vset.pattern.permute.xlu0 2
    %433 = vperm.xlu0 %432, %v176
    %v434 = vpop.permute.xlu0 %433
    %436 = vset.pattern.permute.xlu0 2
    %437 = vperm.xlu0 %436, %v177
    %v438 = vpop.permute.xlu0 %437
    %440 = vset.pattern.permute.xlu0 2
    %441 = vperm.xlu0 %440, %v178
    %v442 = vpop.permute.xlu0 %441
    %v444 = vlaneseq
    %v445 = vshrl.u32 %v444, 7
    %v446 = vsub.s32 2, %v445
    %v447 = vrot.slane %v179, %v446
    %v448 = vmul.f32 %v382, %v447
    %v449 = vmul.f32 %v386, %v447
    %v450 = vmul.f32 %v390, %v447
    %v451 = vmul.f32 %v394, %v447
    %v452 = vmul.f32 %v398, %v447
    %v453 = vmul.f32 %v402, %v447
    %v454 = vmul.f32 %v406, %v447
    %v455 = vmul.f32 %v410, %v447
    %v456 = vmul.f32 %v414, %v447
    %v457 = vmul.f32 %v418, %v447
    %v458 = vmul.f32 %v422, %v447
    %v459 = vmul.f32 %v426, %v447
    %v460 = vmul.f32 %v430, %v447
    %v461 = vmul.f32 %v434, %v447
    %v462 = vmul.f32 %v438, %v447
    %v463 = vmul.f32 %v442, %v447
    %v464 = vadd.f32 %v364, %v448
    %v465 = vadd.f32 %v365, %v449
    %v466 = vadd.f32 %v366, %v450
    %v467 = vadd.f32 %v367, %v451
    %v468 = vadd.f32 %v368, %v452
    %v469 = vadd.f32 %v369, %v453
    %v470 = vadd.f32 %v370, %v454
    %v471 = vadd.f32 %v371, %v455
    %v472 = vadd.f32 %v372, %v456
    %v473 = vadd.f32 %v373, %v457
    %v474 = vadd.f32 %v374, %v458
    %v475 = vadd.f32 %v375, %v459
    %v476 = vadd.f32 %v376, %v460
    %v477 = vadd.f32 %v377, %v461
    %v478 = vadd.f32 %v378, %v462
    %v479 = vadd.f32 %v379, %v463
    %v480 = vld [vmem:[#allocation4] sm:$0x1]
    %v482 = vlaneseq
    %v483 = vshrl.u32 %v482, 7
    %v484 = vsub.s32 0, %v483
    %v485 = vrot.slane %v480, %v484
    %v487 = vadd.f32 %v464, %v485
    %v488 = vadd.f32 %v465, %v485
    %v489 = vadd.f32 %v466, %v485
    %v490 = vadd.f32 %v467, %v485
    %v491 = vadd.f32 %v468, %v485
    %v492 = vadd.f32 %v469, %v485
    %v493 = vadd.f32 %v470, %v485
    %v494 = vadd.f32 %v471, %v485
    %v495 = vadd.f32 %v472, %v485
    %v496 = vadd.f32 %v473, %v485
    %v497 = vadd.f32 %v474, %v485
    %v498 = vadd.f32 %v475, %v485
    %v499 = vadd.f32 %v476, %v485
    %v500 = vadd.f32 %v477, %v485
    %v501 = vadd.f32 %v478, %v485
    %v502 = vadd.f32 %v479, %v485
    %v503 = vmax.f32 %v487, 0.0
    %v504 = vmax.f32 %v488, 0.0
    %v505 = vmax.f32 %v489, 0.0
    %v506 = vmax.f32 %v490, 0.0
    %v507 = vmax.f32 %v491, 0.0
    %v508 = vmax.f32 %v492, 0.0
    %v509 = vmax.f32 %v493, 0.0
    %v510 = vmax.f32 %v494, 0.0
    %v511 = vmax.f32 %v495, 0.0
    %v512 = vmax.f32 %v496, 0.0
    %v513 = vmax.f32 %v497, 0.0
    %v514 = vmax.f32 %v498, 0.0
    %v515 = vmax.f32 %v499, 0.0
    %v516 = vmax.f32 %v500, 0.0
    %v517 = vmax.f32 %v501, 0.0
    %v518 = vmax.f32 %v502, 0.0
    %v519 = vld [vmem:[#allocation6] sm:$0xf]
    %v520 = vld [vmem:[#allocation6 + $0x4] sm:$0xf]
    %v521 = vld [vmem:[#allocation6 + $0x8] sm:$0xf]
    %v522 = vld [vmem:[#allocation6 + $0xc] sm:$0xf]
    %v523 = vld [vmem:[#allocation6 + $0x10] sm:$0xf]
    %v524 = vld [vmem:[#allocation6 + $0x14] sm:$0xf]
    %v525 = vld [vmem:[#allocation6 + $0x18] sm:$0xf]
    %v526 = vld [vmem:[#allocation6 + $0x1c] sm:$0xf]
    %v527 = vpack.c.bf16 %v504, %v503
    %v528 = vpack.c.bf16 %v506, %v505
    %v529 = vpack.c.bf16 %v508, %v507
    %v530 = vpack.c.bf16 %v510, %v509
    %v531 = vpack.c.bf16 %v512, %v511
    %v532 = vpack.c.bf16 %v514, %v513
    %v533 = vpack.c.bf16 %v516, %v515
    %v534 = vpack.c.bf16 %v518, %v517
    %v535 = vld [vmem:[#allocation7] sm:$0x1]
    %v537 = vlaneseq
    %v538 = vshrl.u32 %v537, 7
    %v539 = vsub.s32 0, %v538
    %v540 = vrot.slane %v535, %v539
    %v550 = vunpack.c.l.b16 %v519
    %v551 = vunpack.c.l.b16 %v520
    %v552 = vunpack.c.l.b16 %v521
    %v553 = vunpack.c.l.b16 %v522
    %v554 = vunpack.c.l.b16 %v523
    %v555 = vunpack.c.l.b16 %v524
    %v556 = vunpack.c.l.b16 %v525
    %v557 = vunpack.c.l.b16 %v526
    %v558 = vpack.c.b16 %v551, %v550
    %v559 = vpack.c.b16 %v553, %v552
    %v560 = vpack.c.b16 %v555, %v554
    %v561 = vpack.c.b16 %v557, %v556
    %vm566 = vcmask 523264
    %v568 = vsel %vm566, %v527, 0
    %v571 = vsel %vm566, %v528, 0
    %v574 = vsel %vm566, %v529, 0
    %v577 = vsel %vm566, %v530, 0
    %v580 = vsel %vm566, %v531, 0
    %v583 = vsel %vm566, %v532, 0
    %v586 = vsel %vm566, %v533, 0
    %v589 = vsel %vm566, %v534, 0
    %591 = vmatprep.subr.bf16.mxu0 0
    %592 = vmatpush1.bf16.msra.mxu0 %v558
    %593 = vmatprep.subr.bf16.mxu0 0
    %594 = vmatpush1.bf16.msra.mxu0 %v559
    %595 = vmatprep.subr.bf16.mxu0 0
    %596 = vmatpush1.bf16.msra.mxu0 %v560
    %597 = vmatprep.subr.bf16.mxu0 0
    %598 = vmatpush1.bf16.msra.mxu0 %v561
    %599 = vmatprep.subr.bf16.mxu0 0
    %600 = vmatpush1.bf16.msra.mxu0 0
    %601 = vmatprep.subr.bf16.mxu0 0
    %602 = vmatpush1.bf16.msra.mxu0 0
    %603 = vmatprep.subr.bf16.mxu0 0
    %604 = vmatpush1.bf16.msra.mxu0 0
    %605 = vmatprep.subr.bf16.mxu0 0
    %606 = vmatpush1.bf16.msra.mxu0 0
    %607 = vmatprep.subr.bf16.mxu0 0
    %608 = vmatpush1.bf16.msra.mxu0 0
    %609 = vmatprep.subr.bf16.mxu0 0
    %610 = vmatpush1.bf16.msra.mxu0 0
    %611 = vmatprep.subr.bf16.mxu0 0
    %612 = vmatpush1.bf16.msra.mxu0 0
    %613 = vmatprep.subr.bf16.mxu0 0
    %614 = vmatpush1.bf16.msra.mxu0 0
    %615 = vmatprep.subr.bf16.mxu0 0
    %616 = vmatpush1.bf16.msra.mxu0 0
    %617 = vmatprep.subr.bf16.mxu0 0
    %618 = vmatpush1.bf16.msra.mxu0 0
    %619 = vmatprep.subr.bf16.mxu0 0
    %620 = vmatpush1.bf16.msra.mxu0 0
    %621 = vmatprep.subr.bf16.mxu0 0
    %622 = vmatpush1.bf16.msra.mxu0 0
    %623 = vmatprep.mubr.bf16.mxu0 0
    %624 = vmatmul.mubr.bf16.gmra.mrb[0].mxu0 %v568
    %v625 = vpop.f32.mrb[0].mxu0
    %v626 = vadd.f32 %v540, %v625
    %v627 = vpop.f32.mrb[0].mxu0
    %v628 = vpop.f32.mrb[0].mxu0
    %v629 = vadd.f32 %v540, %v628
    %v630 = vpop.f32.mrb[0].mxu0
    %631 = vmatprep.mubr.bf16.mxu0 0
    %632 = vmatmul.mubr.bf16.gmra.mrb[0].mxu0 %v571
    %v633 = vpop.f32.mrb[0].mxu0
    %v634 = vadd.f32 %v540, %v633
    %v635 = vpop.f32.mrb[0].mxu0
    %v636 = vpop.f32.mrb[0].mxu0
    %v637 = vadd.f32 %v540, %v636
    %v638 = vpop.f32.mrb[0].mxu0
    %639 = vmatprep.mubr.bf16.mxu0 0
    %640 = vmatmul.mubr.bf16.gmra.mrb[0].mxu0 %v574
    %v641 = vpop.f32.mrb[0].mxu0
    %v642 = vadd.f32 %v540, %v641
    %v643 = vpop.f32.mrb[0].mxu0
    %v644 = vpop.f32.mrb[0].mxu0
    %v645 = vadd.f32 %v540, %v644
    %v646 = vpop.f32.mrb[0].mxu0
    %647 = vmatprep.mubr.bf16.mxu0 0
    %648 = vmatmul.mubr.bf16.gmra.mrb[0].mxu0 %v577
    %v649 = vpop.f32.mrb[0].mxu0
    %v650 = vadd.f32 %v540, %v649
    %v651 = vpop.f32.mrb[0].mxu0
    %v652 = vpop.f32.mrb[0].mxu0
    %v653 = vadd.f32 %v540, %v652
    %v654 = vpop.f32.mrb[0].mxu0
    %655 = vmatprep.mubr.bf16.mxu0 0
    %656 = vmatmul.mubr.bf16.gmra.mrb[0].mxu0 %v580
    %v657 = vpop.f32.mrb[0].mxu0
    %v658 = vadd.f32 %v540, %v657
    %v659 = vpop.f32.mrb[0].mxu0
    %v660 = vpop.f32.mrb[0].mxu0
    %v661 = vadd.f32 %v540, %v660
    %v662 = vpop.f32.mrb[0].mxu0
    %663 = vmatprep.mubr.bf16.mxu0 0
    %664 = vmatmul.mubr.bf16.gmra.mrb[0].mxu0 %v583
    %v665 = vpop.f32.mrb[0].mxu0
    %v666 = vadd.f32 %v540, %v665
    %v667 = vpop.f32.mrb[0].mxu0
    %v668 = vpop.f32.mrb[0].mxu0
    %v669 = vadd.f32 %v540, %v668
    %v670 = vpop.f32.mrb[0].mxu0
    %671 = vmatprep.mubr.bf16.mxu0 0
    %672 = vmatmul.mubr.bf16.gmra.mrb[0].mxu0 %v586
    %v673 = vpop.f32.mrb[0].mxu0
    %v674 = vadd.f32 %v540, %v673
    %v675 = vpop.f32.mrb[0].mxu0
    %v676 = vpop.f32.mrb[0].mxu0
    %v677 = vadd.f32 %v540, %v676
    %v678 = vpop.f32.mrb[0].mxu0
    %679 = vmatprep.mubr.bf16.mxu0 0
    %680 = vmatmul.mubr.bf16.gmra.mrb[0].mxu0 %v589
    %v681 = vpop.f32.mrb[0].mxu0
    %v682 = vadd.f32 %v540, %v681
    %v683 = vpop.f32.mrb[0].mxu0
    %v684 = vpop.f32.mrb[0].mxu0
    %v685 = vadd.f32 %v540, %v684
    %v686 = vpop.f32.mrb[0].mxu0
    %687 = vdwg.mxu0
    %v688 = vmax.f32 %v626, 0.0
    %v689 = vmax.f32 %v629, 0.0
    %v690 = vmax.f32 %v634, 0.0
    %v691 = vmax.f32 %v637, 0.0
    %v692 = vmax.f32 %v642, 0.0
    %v693 = vmax.f32 %v645, 0.0
    %v694 = vmax.f32 %v650, 0.0
    %v695 = vmax.f32 %v653, 0.0
    %v696 = vmax.f32 %v658, 0.0
    %v697 = vmax.f32 %v661, 0.0
    %v698 = vmax.f32 %v666, 0.0
    %v699 = vmax.f32 %v669, 0.0
    %v700 = vmax.f32 %v674, 0.0
    %v701 = vmax.f32 %v677, 0.0
    %v702 = vmax.f32 %v682, 0.0
    %v703 = vmax.f32 %v685, 0.0
    %v704 = vld [vmem:[#allocation9] sm:$0xf]
    %v705 = vld [vmem:[#allocation9 + $0x4] sm:$0xf]
    %v706 = vld [vmem:[#allocation9 + $0x8] sm:$0xf]
    %v707 = vld [vmem:[#allocation9 + $0xc] sm:$0xf]
    %v708 = vld [vmem:[#allocation9 + $0x10] sm:$0xf]
    %v709 = vld [vmem:[#allocation9 + $0x14] sm:$0xf]
    %v710 = vld [vmem:[#allocation9 + $0x18] sm:$0xf]
    %v711 = vld [vmem:[#allocation9 + $0x1c] sm:$0xf]
    %v712 = vld [vmem:[#allocation9 + $0x20] sm:$0xf]
    %v713 = vld [vmem:[#allocation9 + $0x24] sm:$0xf]
    %v714 = vld [vmem:[#allocation9 + $0x28] sm:$0xf]
    %v715 = vld [vmem:[#allocation9 + $0x2c] sm:$0xf]
    %v716 = vld [vmem:[#allocation9 + $0x30] sm:$0xf]
    %v717 = vld [vmem:[#allocation9 + $0x34] sm:$0xf]
    %v718 = vld [vmem:[#allocation9 + $0x38] sm:$0xf]
    %v719 = vld [vmem:[#allocation9 + $0x3c] sm:$0xf]
    %v720 = vpack.c.bf16 %v689, %v688
    %v721 = vpack.c.bf16 %v691, %v690
    %v722 = vpack.c.bf16 %v693, %v692
    %v723 = vpack.c.bf16 %v695, %v694
    %v724 = vpack.c.bf16 %v697, %v696
    %v725 = vpack.c.bf16 %v699, %v698
    %v726 = vpack.c.bf16 %v701, %v700
    %v727 = vpack.c.bf16 %v703, %v702
    %v728 = vld [vmem:[#allocation10] sm:$0x1]
    %v730 = vlaneseq
    %v731 = vshrl.u32 %v730, 7
    %v732 = vsub.s32 0, %v731
    %v733 = vrot.slane %v728, %v732
    %v751 = vunpack.c.l.b16 %v704
    %v752 = vunpack.c.l.b16 %v705
    %v753 = vunpack.c.l.b16 %v706
    %v754 = vunpack.c.l.b16 %v707
    %v755 = vunpack.c.l.b16 %v708
    %v756 = vunpack.c.l.b16 %v709
    %v757 = vunpack.c.l.b16 %v710
    %v758 = vunpack.c.l.b16 %v711
    %v759 = vunpack.c.l.b16 %v712
    %v760 = vunpack.c.l.b16 %v713
    %v761 = vunpack.c.l.b16 %v714
    %v762 = vunpack.c.l.b16 %v715
    %v763 = vunpack.c.l.b16 %v716
    %v764 = vunpack.c.l.b16 %v717
    %v765 = vunpack.c.l.b16 %v718
    %v766 = vunpack.c.l.b16 %v719
    %v767 = vpack.c.b16 %v752, %v751
    %v768 = vpack.c.b16 %v754, %v753
    %v769 = vpack.c.b16 %v756, %v755
    %v770 = vpack.c.b16 %v758, %v757
    %v771 = vpack.c.b16 %v760, %v759
    %v772 = vpack.c.b16 %v762, %v761
    %v773 = vpack.c.b16 %v764, %v763
    %v774 = vpack.c.b16 %v766, %v765
    %783 = vmatprep.subr.bf16.mxu0 0
    %784 = vmatpush1.bf16.msra.mxu0 %v767
    %785 = vmatprep.subr.bf16.mxu0 0
    %786 = vmatpush1.bf16.msra.mxu0 %v768
    %787 = vmatprep.subr.bf16.mxu0 0
    %788 = vmatpush1.bf16.msra.mxu0 %v769
    %789 = vmatprep.subr.bf16.mxu0 0
    %790 = vmatpush1.bf16.msra.mxu0 %v770
    %791 = vmatprep.subr.bf16.mxu0 0
    %792 = vmatpush1.bf16.msra.mxu0 %v771
    %793 = vmatprep.subr.bf16.mxu0 0
    %794 = vmatpush1.bf16.msra.mxu0 %v772
    %795 = vmatprep.subr.bf16.mxu0 0
    %796 = vmatpush1.bf16.msra.mxu0 %v773
    %797 = vmatprep.subr.bf16.mxu0 0
    %798 = vmatpush1.bf16.msra.mxu0 %v774
    %799 = vmatprep.subr.bf16.mxu0 0
    %800 = vmatpush1.bf16.msra.mxu0 0
    %801 = vmatprep.subr.bf16.mxu0 0
    %802 = vmatpush1.bf16.msra.mxu0 0
    %803 = vmatprep.subr.bf16.mxu0 0
    %804 = vmatpush1.bf16.msra.mxu0 0
    %805 = vmatprep.subr.bf16.mxu0 0
    %806 = vmatpush1.bf16.msra.mxu0 0
    %807 = vmatprep.subr.bf16.mxu0 0
    %808 = vmatpush1.bf16.msra.mxu0 0
    %809 = vmatprep.subr.bf16.mxu0 0
    %810 = vmatpush1.bf16.msra.mxu0 0
    %811 = vmatprep.subr.bf16.mxu0 0
    %812 = vmatpush1.bf16.msra.mxu0 0
    %813 = vmatprep.subr.bf16.mxu0 0
    %814 = vmatpush1.bf16.msra.mxu0 0
    %815 = vmatprep.mubr.bf16.mxu0 0
    %816 = vmatmul.mubr.bf16.gmra.mrb[0].mxu0 %v720
    %v817 = vpop.f32.mrb[0].mxu0
    %v818 = vadd.f32 %v733, %v817
    %v819 = vpop.f32.mrb[0].mxu0
    %v820 = vpop.f32.mrb[0].mxu0
    %v821 = vadd.f32 %v733, %v820
    %v822 = vpop.f32.mrb[0].mxu0
    %823 = vmatprep.mubr.bf16.mxu0 0
    %824 = vmatmul.mubr.bf16.gmra.mrb[0].mxu0 %v721
    %v825 = vpop.f32.mrb[0].mxu0
    %v826 = vadd.f32 %v733, %v825
    %v827 = vpop.f32.mrb[0].mxu0
    %v828 = vpop.f32.mrb[0].mxu0
    %v829 = vadd.f32 %v733, %v828
    %v830 = vpop.f32.mrb[0].mxu0
    %831 = vmatprep.mubr.bf16.mxu0 0
    %832 = vmatmul.mubr.bf16.gmra.mrb[0].mxu0 %v722
    %v833 = vpop.f32.mrb[0].mxu0
    %v834 = vadd.f32 %v733, %v833
    %v835 = vpop.f32.mrb[0].mxu0
    %v836 = vpop.f32.mrb[0].mxu0
    %v837 = vadd.f32 %v733, %v836
    %v838 = vpop.f32.mrb[0].mxu0
    %839 = vmatprep.mubr.bf16.mxu0 0
    %840 = vmatmul.mubr.bf16.gmra.mrb[0].mxu0 %v723
    %v841 = vpop.f32.mrb[0].mxu0
    %v842 = vadd.f32 %v733, %v841
    %v843 = vpop.f32.mrb[0].mxu0
    %v844 = vpop.f32.mrb[0].mxu0
    %v845 = vadd.f32 %v733, %v844
    %v846 = vpop.f32.mrb[0].mxu0
    %847 = vmatprep.mubr.bf16.mxu0 0
    %848 = vmatmul.mubr.bf16.gmra.mrb[0].mxu0 %v724
    %v849 = vpop.f32.mrb[0].mxu0
    %v850 = vadd.f32 %v733, %v849
    %v851 = vpop.f32.mrb[0].mxu0
    %v852 = vpop.f32.mrb[0].mxu0
    %v853 = vadd.f32 %v733, %v852
    %v854 = vpop.f32.mrb[0].mxu0
    %855 = vmatprep.mubr.bf16.mxu0 0
    %856 = vmatmul.mubr.bf16.gmra.mrb[0].mxu0 %v725
    %v857 = vpop.f32.mrb[0].mxu0
    %v858 = vadd.f32 %v733, %v857
    %v859 = vpop.f32.mrb[0].mxu0
    %v860 = vpop.f32.mrb[0].mxu0
    %v861 = vadd.f32 %v733, %v860
    %v862 = vpop.f32.mrb[0].mxu0
    %863 = vmatprep.mubr.bf16.mxu0 0
    %864 = vmatmul.mubr.bf16.gmra.mrb[0].mxu0 %v726
    %v865 = vpop.f32.mrb[0].mxu0
    %v866 = vadd.f32 %v733, %v865
    %v867 = vpop.f32.mrb[0].mxu0
    %v868 = vpop.f32.mrb[0].mxu0
    %v869 = vadd.f32 %v733, %v868
    %v870 = vpop.f32.mrb[0].mxu0
    %871 = vmatprep.mubr.bf16.mxu0 0
    %872 = vmatmul.mubr.bf16.gmra.mrb[0].mxu0 %v727
    %v873 = vpop.f32.mrb[0].mxu0
    %v874 = vadd.f32 %v733, %v873
    %v875 = vpop.f32.mrb[0].mxu0
    %v876 = vpop.f32.mrb[0].mxu0
    %v877 = vadd.f32 %v733, %v876
    %v878 = vpop.f32.mrb[0].mxu0
    %879 = vdwg.mxu0
    %v880 = vmax.f32 %v818, 0.0
    %v881 = vmax.f32 %v821, 0.0
    %v882 = vmax.f32 %v826, 0.0
    %v883 = vmax.f32 %v829, 0.0
    %v884 = vmax.f32 %v834, 0.0
    %v885 = vmax.f32 %v837, 0.0
    %v886 = vmax.f32 %v842, 0.0
    %v887 = vmax.f32 %v845, 0.0
    %v888 = vmax.f32 %v850, 0.0
    %v889 = vmax.f32 %v853, 0.0
    %v890 = vmax.f32 %v858, 0.0
    %v891 = vmax.f32 %v861, 0.0
    %v892 = vmax.f32 %v866, 0.0
    %v893 = vmax.f32 %v869, 0.0
    %v894 = vmax.f32 %v874, 0.0
    %v895 = vmax.f32 %v877, 0.0
    %v896 = vld [vmem:[#allocation12] sm:$0xff]
    %v897 = vld [vmem:[#allocation12 + $0x8] sm:$0xff]
    %v898 = vld [vmem:[#allocation12 + $0x10] sm:$0xff]
    %v899 = vld [vmem:[#allocation12 + $0x18] sm:$0xff]
    %v900 = vld [vmem:[#allocation12 + $0x20] sm:$0xff]
    %v901 = vld [vmem:[#allocation12 + $0x28] sm:$0xff]
    %v902 = vld [vmem:[#allocation12 + $0x30] sm:$0xff]
    %v903 = vld [vmem:[#allocation12 + $0x38] sm:$0xff]
    %v904 = vld [vmem:[#allocation12 + $0x40] sm:$0xff]
    %v905 = vld [vmem:[#allocation12 + $0x48] sm:$0xff]
    %v906 = vld [vmem:[#allocation12 + $0x50] sm:$0xff]
    %v907 = vld [vmem:[#allocation12 + $0x58] sm:$0xff]
    %v908 = vld [vmem:[#allocation12 + $0x60] sm:$0xff]
    %v909 = vld [vmem:[#allocation12 + $0x68] sm:$0xff]
    %v910 = vld [vmem:[#allocation12 + $0x70] sm:$0xff]
    %v911 = vld [vmem:[#allocation12 + $0x78] sm:$0xff]
    %v912 = vpack.c.bf16 %v881, %v880
    %v913 = vpack.c.bf16 %v883, %v882
    %v914 = vpack.c.bf16 %v885, %v884
    %v915 = vpack.c.bf16 %v887, %v886
    %v916 = vpack.c.bf16 %v889, %v888
    %v917 = vpack.c.bf16 %v891, %v890
    %v918 = vpack.c.bf16 %v893, %v892
    %v919 = vpack.c.bf16 %v895, %v894
    %v920 = vld [vmem:[#allocation13] sm:$0x3]
    %v922 = vlaneseq
    %v923 = vshrl.u32 %v922, 7
    %v924 = vsub.s32 0, %v923
    %v925 = vrot.slane %v920, %v924
    %v926 = vlaneseq
    %v927 = vshrl.u32 %v926, 7
    %v928 = vsub.s32 1, %v927
    %v929 = vrot.slane %v920, %v928
    %v948 = vunpack.c.l.b16 %v896
    %v949 = vunpack.c.h.b16 %v896
    %v950 = vunpack.c.l.b16 %v897
    %v951 = vunpack.c.h.b16 %v897
    %v952 = vunpack.c.l.b16 %v898
    %v953 = vunpack.c.h.b16 %v898
    %v954 = vunpack.c.l.b16 %v899
    %v955 = vunpack.c.h.b16 %v899
    %v956 = vunpack.c.l.b16 %v900
    %v957 = vunpack.c.h.b16 %v900
    %v958 = vunpack.c.l.b16 %v901
    %v959 = vunpack.c.h.b16 %v901
    %v960 = vunpack.c.l.b16 %v902
    %v961 = vunpack.c.h.b16 %v902
    %v962 = vunpack.c.l.b16 %v903
    %v963 = vunpack.c.h.b16 %v903
    %v964 = vunpack.c.l.b16 %v904
    %v965 = vunpack.c.h.b16 %v904
    %v966 = vunpack.c.l.b16 %v905
    %v967 = vunpack.c.h.b16 %v905
    %v968 = vunpack.c.l.b16 %v906
    %v969 = vunpack.c.h.b16 %v906
    %v970 = vunpack.c.l.b16 %v907
    %v971 = vunpack.c.h.b16 %v907
    %v972 = vunpack.c.l.b16 %v908
    %v973 = vunpack.c.h.b16 %v908
    %v974 = vunpack.c.l.b16 %v909
    %v975 = vunpack.c.h.b16 %v909
    %v976 = vunpack.c.l.b16 %v910
    %v977 = vunpack.c.h.b16 %v910
    %v978 = vunpack.c.l.b16 %v911
    %v979 = vunpack.c.h.b16 %v911
    %v980 = vpack.c.b16 %v950, %v948
    %v981 = vpack.c.b16 %v951, %v949
    %v982 = vpack.c.b16 %v954, %v952
    %v983 = vpack.c.b16 %v955, %v953
    %v984 = vpack.c.b16 %v958, %v956
    %v985 = vpack.c.b16 %v959, %v957
    %v986 = vpack.c.b16 %v962, %v960
    %v987 = vpack.c.b16 %v963, %v961
    %v988 = vpack.c.b16 %v966, %v964
    %v989 = vpack.c.b16 %v967, %v965
    %v990 = vpack.c.b16 %v970, %v968
    %v991 = vpack.c.b16 %v971, %v969
    %v992 = vpack.c.b16 %v974, %v972
    %v993 = vpack.c.b16 %v975, %v973
    %v994 = vpack.c.b16 %v978, %v976
    %v995 = vpack.c.b16 %v979, %v977
    %1012 = vmatprep.subr.bf16.mxu0 %v981
    %1013 = vmatpush1.bf16.msra.mxu0 %v980
    %1014 = vmatprep.subr.bf16.mxu0 %v983
    %1015 = vmatpush1.bf16.msra.mxu0 %v982
    %1016 = vmatprep.subr.bf16.mxu0 %v985
    %1017 = vmatpush1.bf16.msra.mxu0 %v984
    %1018 = vmatprep.subr.bf16.mxu0 %v987
    %1019 = vmatpush1.bf16.msra.mxu0 %v986
    %1020 = vmatprep.subr.bf16.mxu0 %v989
    %1021 = vmatpush1.bf16.msra.mxu0 %v988
    %1022 = vmatprep.subr.bf16.mxu0 %v991
    %1023 = vmatpush1.bf16.msra.mxu0 %v990
    %1024 = vmatprep.subr.bf16.mxu0 %v993
    %1025 = vmatpush1.bf16.msra.mxu0 %v992
    %1026 = vmatprep.subr.bf16.mxu0 %v995
    %1027 = vmatpush1.bf16.msra.mxu0 %v994
    %1028 = vmatprep.subr.bf16.mxu0 0
    %1029 = vmatpush1.bf16.msra.mxu0 0
    %1030 = vmatprep.subr.bf16.mxu0 0
    %1031 = vmatpush1.bf16.msra.mxu0 0
    %1032 = vmatprep.subr.bf16.mxu0 0
    %1033 = vmatpush1.bf16.msra.mxu0 0
    %1034 = vmatprep.subr.bf16.mxu0 0
    %1035 = vmatpush1.bf16.msra.mxu0 0
    %1036 = vmatprep.subr.bf16.mxu0 0
    %1037 = vmatpush1.bf16.msra.mxu0 0
    %1038 = vmatprep.subr.bf16.mxu0 0
    %1039 = vmatpush1.bf16.msra.mxu0 0
    %1040 = vmatprep.subr.bf16.mxu0 0
    %1041 = vmatpush1.bf16.msra.mxu0 0
    %1042 = vmatprep.subr.bf16.mxu0 0
    %1043 = vmatpush1.bf16.msra.mxu0 0
    %1044 = vmatprep.mubr.bf16.mxu0 0
    %1045 = vmatmul.mubr.bf16.gmra.mrb[0].mxu0 %v912
    %v1046 = vpop.f32.mrb[0].mxu0
    %v1047 = vadd.f32 %v925, %v1046
    %v1048 = vpop.f32.mrb[0].mxu0
    %v1049 = vadd.f32 %v929, %v1048
    %v1050 = vpop.f32.mrb[0].mxu0
    %v1051 = vadd.f32 %v925, %v1050
    %v1052 = vpop.f32.mrb[0].mxu0
    %v1053 = vadd.f32 %v929, %v1052
    %1054 = vmatprep.mubr.bf16.mxu0 0
    %1055 = vmatmul.mubr.bf16.gmra.mrb[0].mxu0 %v913
    %v1056 = vpop.f32.mrb[0].mxu0
    %v1057 = vadd.f32 %v925, %v1056
    %v1058 = vpop.f32.mrb[0].mxu0
    %v1059 = vadd.f32 %v929, %v1058
    %v1060 = vpop.f32.mrb[0].mxu0
    %v1061 = vadd.f32 %v925, %v1060
    %v1062 = vpop.f32.mrb[0].mxu0
    %v1063 = vadd.f32 %v929, %v1062
    %1064 = vmatprep.mubr.bf16.mxu0 0
    %1065 = vmatmul.mubr.bf16.gmra.mrb[0].mxu0 %v914
    %v1066 = vpop.f32.mrb[0].mxu0
    %v1067 = vadd.f32 %v925, %v1066
    %v1068 = vpop.f32.mrb[0].mxu0
    %v1069 = vadd.f32 %v929, %v1068
    %v1070 = vpop.f32.mrb[0].mxu0
    %v1071 = vadd.f32 %v925, %v1070
    %v1072 = vpop.f32.mrb[0].mxu0
    %v1073 = vadd.f32 %v929, %v1072
    %1074 = vmatprep.mubr.bf16.mxu0 0
    %1075 = vmatmul.mubr.bf16.gmra.mrb[0].mxu0 %v915
    %v1076 = vpop.f32.mrb[0].mxu0
    %v1077 = vadd.f32 %v925, %v1076
    %v1078 = vpop.f32.mrb[0].mxu0
    %v1079 = vadd.f32 %v929, %v1078
    %v1080 = vpop.f32.mrb[0].mxu0
    %v1081 = vadd.f32 %v925, %v1080
    %v1082 = vpop.f32.mrb[0].mxu0
    %v1083 = vadd.f32 %v929, %v1082
    %1084 = vmatprep.mubr.bf16.mxu0 0
    %1085 = vmatmul.mubr.bf16.gmra.mrb[0].mxu0 %v916
    %v1086 = vpop.f32.mrb[0].mxu0
    %v1087 = vadd.f32 %v925, %v1086
    %v1088 = vpop.f32.mrb[0].mxu0
    %v1089 = vadd.f32 %v929, %v1088
    %v1090 = vpop.f32.mrb[0].mxu0
    %v1091 = vadd.f32 %v925, %v1090
    %v1092 = vpop.f32.mrb[0].mxu0
    %v1093 = vadd.f32 %v929, %v1092
    %1094 = vmatprep.mubr.bf16.mxu0 0
    %1095 = vmatmul.mubr.bf16.gmra.mrb[0].mxu0 %v917
    %v1096 = vpop.f32.mrb[0].mxu0
    %v1097 = vadd.f32 %v925, %v1096
    %v1098 = vpop.f32.mrb[0].mxu0
    %v1099 = vadd.f32 %v929, %v1098
    %v1100 = vpop.f32.mrb[0].mxu0
    %v1101 = vadd.f32 %v925, %v1100
    %v1102 = vpop.f32.mrb[0].mxu0
    %v1103 = vadd.f32 %v929, %v1102
    %1104 = vmatprep.mubr.bf16.mxu0 0
    %1105 = vmatmul.mubr.bf16.gmra.mrb[0].mxu0 %v918
    %v1106 = vpop.f32.mrb[0].mxu0
    %v1107 = vadd.f32 %v925, %v1106
    %v1108 = vpop.f32.mrb[0].mxu0
    %v1109 = vadd.f32 %v929, %v1108
    %v1110 = vpop.f32.mrb[0].mxu0
    %v1111 = vadd.f32 %v925, %v1110
    %v1112 = vpop.f32.mrb[0].mxu0
    %v1113 = vadd.f32 %v929, %v1112
    %1114 = vmatprep.mubr.bf16.mxu0 0
    %1115 = vmatmul.mubr.bf16.gmra.mrb[0].mxu0 %v919
    %v1116 = vpop.f32.mrb[0].mxu0
    %v1117 = vadd.f32 %v925, %v1116
    %v1118 = vpop.f32.mrb[0].mxu0
    %v1119 = vadd.f32 %v929, %v1118
    %v1120 = vpop.f32.mrb[0].mxu0
    %v1121 = vadd.f32 %v925, %v1120
    %v1122 = vpop.f32.mrb[0].mxu0
    %v1123 = vadd.f32 %v929, %v1122
    %1124 = vdwg.mxu0
    %v1125 = vmax.f32 %v1047, 0.0
    %v1126 = vmax.f32 %v1049, 0.0
    %v1127 = vmax.f32 %v1051, 0.0
    %v1128 = vmax.f32 %v1053, 0.0
    %v1129 = vmax.f32 %v1057, 0.0
    %v1130 = vmax.f32 %v1059, 0.0
    %v1131 = vmax.f32 %v1061, 0.0
    %v1132 = vmax.f32 %v1063, 0.0
    %v1133 = vmax.f32 %v1067, 0.0
    %v1134 = vmax.f32 %v1069, 0.0
    %v1135 = vmax.f32 %v1071, 0.0
    %v1136 = vmax.f32 %v1073, 0.0
    %v1137 = vmax.f32 %v1077, 0.0
    %v1138 = vmax.f32 %v1079, 0.0
    %v1139 = vmax.f32 %v1081, 0.0
    %v1140 = vmax.f32 %v1083, 0.0
    %v1141 = vmax.f32 %v1087, 0.0
    %v1142 = vmax.f32 %v1089, 0.0
    %v1143 = vmax.f32 %v1091, 0.0
    %v1144 = vmax.f32 %v1093, 0.0
    %v1145 = vmax.f32 %v1097, 0.0
    %v1146 = vmax.f32 %v1099, 0.0
    %v1147 = vmax.f32 %v1101, 0.0
    %v1148 = vmax.f32 %v1103, 0.0
    %v1149 = vmax.f32 %v1107, 0.0
    %v1150 = vmax.f32 %v1109, 0.0
    %v1151 = vmax.f32 %v1111, 0.0
    %v1152 = vmax.f32 %v1113, 0.0
    %v1153 = vmax.f32 %v1117, 0.0
    %v1154 = vmax.f32 %v1119, 0.0
    %v1155 = vmax.f32 %v1121, 0.0
    %v1156 = vmax.f32 %v1123, 0.0
    %v1157 = vld [vmem:[#allocation15] sm:$0xff]
    %v1158 = vld [vmem:[#allocation15 + $0x8] sm:$0xff]
    %v1159 = vld [vmem:[#allocation15 + $0x10] sm:$0xff]
    %v1160 = vld [vmem:[#allocation15 + $0x18] sm:$0xff]
    %v1161 = vld [vmem:[#allocation15 + $0x20] sm:$0xff]
    %v1162 = vld [vmem:[#allocation15 + $0x28] sm:$0xff]
    %v1163 = vld [vmem:[#allocation15 + $0x30] sm:$0xff]
    %v1164 = vld [vmem:[#allocation15 + $0x38] sm:$0xff]
    %v1165 = vld [vmem:[#allocation15 + $0x40] sm:$0xff]
    %v1166 = vld [vmem:[#allocation15 + $0x48] sm:$0xff]
    %v1167 = vld [vmem:[#allocation15 + $0x50] sm:$0xff]
    %v1168 = vld [vmem:[#allocation15 + $0x58] sm:$0xff]
    %v1169 = vld [vmem:[#allocation15 + $0x60] sm:$0xff]
    %v1170 = vld [vmem:[#allocation15 + $0x68] sm:$0xff]
    %v1171 = vld [vmem:[#allocation15 + $0x70] sm:$0xff]
    %v1172 = vld [vmem:[#allocation15 + $0x78] sm:$0xff]
    %v1173 = vld [vmem:[#allocation15 + $0x80] sm:$0xff]
    %v1174 = vld [vmem:[#allocation15 + $0x88] sm:$0xff]
    %v1175 = vld [vmem:[#allocation15 + $0x90] sm:$0xff]
    %v1176 = vld [vmem:[#allocation15 + $0x98] sm:$0xff]
    %v1177 = vld [vmem:[#allocation15 + $0xa0] sm:$0xff]
    %v1178 = vld [vmem:[#allocation15 + $0xa8] sm:$0xff]
    %v1179 = vld [vmem:[#allocation15 + $0xb0] sm:$0xff]
    %v1180 = vld [vmem:[#allocation15 + $0xb8] sm:$0xff]
    %v1181 = vld [vmem:[#allocation15 + $0xc0] sm:$0xff]
    %v1182 = vld [vmem:[#allocation15 + $0xc8] sm:$0xff]
    %v1183 = vld [vmem:[#allocation15 + $0xd0] sm:$0xff]
    %v1184 = vld [vmem:[#allocation15 + $0xd8] sm:$0xff]
    %v1185 = vld [vmem:[#allocation15 + $0xe0] sm:$0xff]
    %v1186 = vld [vmem:[#allocation15 + $0xe8] sm:$0xff]
    %v1187 = vld [vmem:[#allocation15 + $0xf0] sm:$0xff]
    %v1188 = vld [vmem:[#allocation15 + $0xf8] sm:$0xff]
    %v1189 = vld [vmem:[#allocation15 + $0x100] sm:$0xff]
    %v1190 = vld [vmem:[#allocation15 + $0x108] sm:$0xff]
    %v1191 = vld [vmem:[#allocation15 + $0x110] sm:$0xff]
    %v1192 = vld [vmem:[#allocation15 + $0x118] sm:$0xff]
    %v1193 = vld [vmem:[#allocation15 + $0x120] sm:$0xff]
    %v1194 = vld [vmem:[#allocation15 + $0x128] sm:$0xff]
    %v1195 = vld [vmem:[#allocation15 + $0x130] sm:$0xff]
    %v1196 = vld [vmem:[#allocation15 + $0x138] sm:$0xff]
    %v1197 = vld [vmem:[#allocation15 + $0x140] sm:$0xff]
    %v1198 = vld [vmem:[#allocation15 + $0x148] sm:$0xff]
    %v1199 = vld [vmem:[#allocation15 + $0x150] sm:$0xff]
    %v1200 = vld [vmem:[#allocation15 + $0x158] sm:$0xff]
    %v1201 = vld [vmem:[#allocation15 + $0x160] sm:$0xff]
    %v1202 = vld [vmem:[#allocation15 + $0x168] sm:$0xff]
    %v1203 = vld [vmem:[#allocation15 + $0x170] sm:$0xff]
    %v1204 = vld [vmem:[#allocation15 + $0x178] sm:$0xff]
    %v1205 = vld [vmem:[#allocation15 + $0x180] sm:$0xff]
    %v1206 = vld [vmem:[#allocation15 + $0x188] sm:$0xff]
    %v1207 = vld [vmem:[#allocation15 + $0x190] sm:$0xff]
    %v1208 = vld [vmem:[#allocation15 + $0x198] sm:$0xff]
    %v1209 = vld [vmem:[#allocation15 + $0x1a0] sm:$0xff]
    %v1210 = vld [vmem:[#allocation15 + $0x1a8] sm:$0xff]
    %v1211 = vld [vmem:[#allocation15 + $0x1b0] sm:$0xff]
    %v1212 = vld [vmem:[#allocation15 + $0x1b8] sm:$0xff]
    %v1213 = vld [vmem:[#allocation15 + $0x1c0] sm:$0xff]
    %v1214 = vld [vmem:[#allocation15 + $0x1c8] sm:$0xff]
    %v1215 = vld [vmem:[#allocation15 + $0x1d0] sm:$0xff]
    %v1216 = vld [vmem:[#allocation15 + $0x1d8] sm:$0xff]
    %v1217 = vld [vmem:[#allocation15 + $0x1e0] sm:$0xff]
    %v1218 = vld [vmem:[#allocation15 + $0x1e8] sm:$0xff]
    %v1219 = vld [vmem:[#allocation15 + $0x1f0] sm:$0xff]
    %v1220 = vld [vmem:[#allocation15 + $0x1f8] sm:$0xff]
    %v1221 = vpack.c.bf16 %v1127, %v1125
    %v1222 = vpack.c.bf16 %v1128, %v1126
    %v1223 = vpack.c.bf16 %v1131, %v1129
    %v1224 = vpack.c.bf16 %v1132, %v1130
    %v1225 = vpack.c.bf16 %v1135, %v1133
    %v1226 = vpack.c.bf16 %v1136, %v1134
    %v1227 = vpack.c.bf16 %v1139, %v1137
    %v1228 = vpack.c.bf16 %v1140, %v1138
    %v1229 = vpack.c.bf16 %v1143, %v1141
    %v1230 = vpack.c.bf16 %v1144, %v1142
    %v1231 = vpack.c.bf16 %v1147, %v1145
    %v1232 = vpack.c.bf16 %v1148, %v1146
    %v1233 = vpack.c.bf16 %v1151, %v1149
    %v1234 = vpack.c.bf16 %v1152, %v1150
    %v1235 = vpack.c.bf16 %v1155, %v1153
    %v1236 = vpack.c.bf16 %v1156, %v1154
    %v1237 = vld [vmem:[#allocation16] sm:$0xf]
    %v1239 = vlaneseq
    %v1240 = vshrl.u32 %v1239, 7
    %v1241 = vsub.s32 0, %v1240
    %v1242 = vrot.slane %v1237, %v1241
    %v1243 = vlaneseq
    %v1244 = vshrl.u32 %v1243, 7
    %v1245 = vsub.s32 1, %v1244
    %v1246 = vrot.slane %v1237, %v1245
    %v1247 = vlaneseq
    %v1248 = vshrl.u32 %v1247, 7
    %v1249 = vsub.s32 2, %v1248
    %v1250 = vrot.slane %v1237, %v1249
    %v1251 = vlaneseq
    %v1252 = vshrl.u32 %v1251, 7
    %v1253 = vsub.s32 3, %v1252
    %v1254 = vrot.slane %v1237, %v1253
    %v1323 = vunpack.c.l.b16 %v1157
    %v1324 = vunpack.c.h.b16 %v1157
    %v1325 = vunpack.c.l.b16 %v1158
    %v1326 = vunpack.c.h.b16 %v1158
    %v1327 = vunpack.c.l.b16 %v1159
    %v1328 = vunpack.c.h.b16 %v1159
    %v1329 = vunpack.c.l.b16 %v1160
    %v1330 = vunpack.c.h.b16 %v1160
    %v1331 = vunpack.c.l.b16 %v1161
    %v1332 = vunpack.c.h.b16 %v1161
    %v1333 = vunpack.c.l.b16 %v1162
    %v1334 = vunpack.c.h.b16 %v1162
    %v1335 = vunpack.c.l.b16 %v1163
    %v1336 = vunpack.c.h.b16 %v1163
    %v1337 = vunpack.c.l.b16 %v1164
    %v1338 = vunpack.c.h.b16 %v1164
    %v1339 = vunpack.c.l.b16 %v1165
    %v1340 = vunpack.c.h.b16 %v1165
    %v1341 = vunpack.c.l.b16 %v1166
    %v1342 = vunpack.c.h.b16 %v1166
    %v1343 = vunpack.c.l.b16 %v1167
    %v1344 = vunpack.c.h.b16 %v1167
    %v1345 = vunpack.c.l.b16 %v1168
    %v1346 = vunpack.c.h.b16 %v1168
    %v1347 = vunpack.c.l.b16 %v1169
    %v1348 = vunpack.c.h.b16 %v1169
    %v1349 = vunpack.c.l.b16 %v1170
    %v1350 = vunpack.c.h.b16 %v1170
    %v1351 = vunpack.c.l.b16 %v1171
    %v1352 = vunpack.c.h.b16 %v1171
    %v1353 = vunpack.c.l.b16 %v1172
    %v1354 = vunpack.c.h.b16 %v1172
    %v1355 = vunpack.c.l.b16 %v1173
    %v1356 = vunpack.c.h.b16 %v1173
    %v1357 = vunpack.c.l.b16 %v1174
    %v1358 = vunpack.c.h.b16 %v1174
    %v1359 = vunpack.c.l.b16 %v1175
    %v1360 = vunpack.c.h.b16 %v1175
    %v1361 = vunpack.c.l.b16 %v1176
    %v1362 = vunpack.c.h.b16 %v1176
    %v1363 = vunpack.c.l.b16 %v1177
    %v1364 = vunpack.c.h.b16 %v1177
    %v1365 = vunpack.c.l.b16 %v1178
    %v1366 = vunpack.c.h.b16 %v1178
    %v1367 = vunpack.c.l.b16 %v1179
    %v1368 = vunpack.c.h.b16 %v1179
    %v1369 = vunpack.c.l.b16 %v1180
    %v1370 = vunpack.c.h.b16 %v1180
    %v1371 = vunpack.c.l.b16 %v1181
    %v1372 = vunpack.c.h.b16 %v1181
    %v1373 = vunpack.c.l.b16 %v1182
    %v1374 = vunpack.c.h.b16 %v1182
    %v1375 = vunpack.c.l.b16 %v1183
    %v1376 = vunpack.c.h.b16 %v1183
    %v1377 = vunpack.c.l.b16 %v1184
    %v1378 = vunpack.c.h.b16 %v1184
    %v1379 = vunpack.c.l.b16 %v1185
    %v1380 = vunpack.c.h.b16 %v1185
    %v1381 = vunpack.c.l.b16 %v1186
    %v1382 = vunpack.c.h.b16 %v1186
    %v1383 = vunpack.c.l.b16 %v1187
    %v1384 = vunpack.c.h.b16 %v1187
    %v1385 = vunpack.c.l.b16 %v1188
    %v1386 = vunpack.c.h.b16 %v1188
    %v1387 = vunpack.c.l.b16 %v1189
    %v1388 = vunpack.c.h.b16 %v1189
    %v1389 = vunpack.c.l.b16 %v1190
    %v1390 = vunpack.c.h.b16 %v1190
    %v1391 = vunpack.c.l.b16 %v1191
    %v1392 = vunpack.c.h.b16 %v1191
    %v1393 = vunpack.c.l.b16 %v1192
    %v1394 = vunpack.c.h.b16 %v1192
    %v1395 = vunpack.c.l.b16 %v1193
    %v1396 = vunpack.c.h.b16 %v1193
    %v1397 = vunpack.c.l.b16 %v1194
    %v1398 = vunpack.c.h.b16 %v1194
    %v1399 = vunpack.c.l.b16 %v1195
    %v1400 = vunpack.c.h.b16 %v1195
    %v1401 = vunpack.c.l.b16 %v1196
    %v1402 = vunpack.c.h.b16 %v1196
    %v1403 = vunpack.c.l.b16 %v1197
    %v1404 = vunpack.c.h.b16 %v1197
    %v1405 = vunpack.c.l.b16 %v1198
    %v1406 = vunpack.c.h.b16 %v1198
    %v1407 = vunpack.c.l.b16 %v1199
    %v1408 = vunpack.c.h.b16 %v1199
    %v1409 = vunpack.c.l.b16 %v1200
    %v1410 = vunpack.c.h.b16 %v1200
    %v1411 = vunpack.c.l.b16 %v1201
    %v1412 = vunpack.c.h.b16 %v1201
    %v1413 = vunpack.c.l.b16 %v1202
    %v1414 = vunpack.c.h.b16 %v1202
    %v1415 = vunpack.c.l.b16 %v1203
    %v1416 = vunpack.c.h.b16 %v1203
    %v1417 = vunpack.c.l.b16 %v1204
    %v1418 = vunpack.c.h.b16 %v1204
    %v1419 = vunpack.c.l.b16 %v1205
    %v1420 = vunpack.c.h.b16 %v1205
    %v1421 = vunpack.c.l.b16 %v1206
    %v1422 = vunpack.c.h.b16 %v1206
    %v1423 = vunpack.c.l.b16 %v1207
    %v1424 = vunpack.c.h.b16 %v1207
    %v1425 = vunpack.c.l.b16 %v1208
    %v1426 = vunpack.c.h.b16 %v1208
    %v1427 = vunpack.c.l.b16 %v1209
    %v1428 = vunpack.c.h.b16 %v1209
    %v1429 = vunpack.c.l.b16 %v1210
    %v1430 = vunpack.c.h.b16 %v1210
    %v1431 = vunpack.c.l.b16 %v1211
    %v1432 = vunpack.c.h.b16 %v1211
    %v1433 = vunpack.c.l.b16 %v1212
    %v1434 = vunpack.c.h.b16 %v1212
    %v1435 = vunpack.c.l.b16 %v1213
    %v1436 = vunpack.c.h.b16 %v1213
    %v1437 = vunpack.c.l.b16 %v1214
    %v1438 = vunpack.c.h.b16 %v1214
    %v1439 = vunpack.c.l.b16 %v1215
    %v1440 = vunpack.c.h.b16 %v1215
    %v1441 = vunpack.c.l.b16 %v1216
    %v1442 = vunpack.c.h.b16 %v1216
    %v1443 = vunpack.c.l.b16 %v1217
    %v1444 = vunpack.c.h.b16 %v1217
    %v1445 = vunpack.c.l.b16 %v1218
    %v1446 = vunpack.c.h.b16 %v1218
    %v1447 = vunpack.c.l.b16 %v1219
    %v1448 = vunpack.c.h.b16 %v1219
    %v1449 = vunpack.c.l.b16 %v1220
    %v1450 = vunpack.c.h.b16 %v1220
    %v1451 = vpack.c.b16 %v1327, %v1323
    %v1452 = vpack.c.b16 %v1328, %v1324
    %v1453 = vpack.c.b16 %v1329, %v1325
    %v1454 = vpack.c.b16 %v1330, %v1326
    %v1455 = vpack.c.b16 %v1335, %v1331
    %v1456 = vpack.c.b16 %v1336, %v1332
    %v1457 = vpack.c.b16 %v1337, %v1333
    %v1458 = vpack.c.b16 %v1338, %v1334
    %v1459 = vpack.c.b16 %v1343, %v1339
    %v1460 = vpack.c.b16 %v1344, %v1340
    %v1461 = vpack.c.b16 %v1345, %v1341
    %v1462 = vpack.c.b16 %v1346, %v1342
    %v1463 = vpack.c.b16 %v1351, %v1347
    %v1464 = vpack.c.b16 %v1352, %v1348
    %v1465 = vpack.c.b16 %v1353, %v1349
    %v1466 = vpack.c.b16 %v1354, %v1350
    %v1467 = vpack.c.b16 %v1359, %v1355
    %v1468 = vpack.c.b16 %v1360, %v1356
    %v1469 = vpack.c.b16 %v1361, %v1357
    %v1470 = vpack.c.b16 %v1362, %v1358
    %v1471 = vpack.c.b16 %v1367, %v1363
    %v1472 = vpack.c.b16 %v1368, %v1364
    %v1473 = vpack.c.b16 %v1369, %v1365
    %v1474 = vpack.c.b16 %v1370, %v1366
    %v1475 = vpack.c.b16 %v1375, %v1371
    %v1476 = vpack.c.b16 %v1376, %v1372
    %v1477 = vpack.c.b16 %v1377, %v1373
    %v1478 = vpack.c.b16 %v1378, %v1374
    %v1479 = vpack.c.b16 %v1383, %v1379
    %v1480 = vpack.c.b16 %v1384, %v1380
    %v1481 = vpack.c.b16 %v1385, %v1381
    %v1482 = vpack.c.b16 %v1386, %v1382
    %v1483 = vpack.c.b16 %v1391, %v1387
    %v1484 = vpack.c.b16 %v1392, %v1388
    %v1485 = vpack.c.b16 %v1393, %v1389
    %v1486 = vpack.c.b16 %v1394, %v1390
    %v1487 = vpack.c.b16 %v1399, %v1395
    %v1488 = vpack.c.b16 %v1400, %v1396
    %v1489 = vpack.c.b16 %v1401, %v1397
    %v1490 = vpack.c.b16 %v1402, %v1398
    %v1491 = vpack.c.b16 %v1407, %v1403
    %v1492 = vpack.c.b16 %v1408, %v1404
    %v1493 = vpack.c.b16 %v1409, %v1405
    %v1494 = vpack.c.b16 %v1410, %v1406
    %v1495 = vpack.c.b16 %v1415, %v1411
    %v1496 = vpack.c.b16 %v1416, %v1412
    %v1497 = vpack.c.b16 %v1417, %v1413
    %v1498 = vpack.c.b16 %v1418, %v1414
    %v1499 = vpack.c.b16 %v1423, %v1419
    %v1500 = vpack.c.b16 %v1424, %v1420
    %v1501 = vpack.c.b16 %v1425, %v1421
    %v1502 = vpack.c.b16 %v1426, %v1422
    %v1503 = vpack.c.b16 %v1431, %v1427
    %v1504 = vpack.c.b16 %v1432, %v1428
    %v1505 = vpack.c.b16 %v1433, %v1429
    %v1506 = vpack.c.b16 %v1434, %v1430
    %v1507 = vpack.c.b16 %v1439, %v1435
    %v1508 = vpack.c.b16 %v1440, %v1436
    %v1509 = vpack.c.b16 %v1441, %v1437
    %v1510 = vpack.c.b16 %v1442, %v1438
    %v1511 = vpack.c.b16 %v1447, %v1443
    %v1512 = vpack.c.b16 %v1448, %v1444
    %v1513 = vpack.c.b16 %v1449, %v1445
    %v1514 = vpack.c.b16 %v1450, %v1446
    %1579 = vmatprep.subr.bf16.mxu0 %v1452
    %1580 = vmatpush1.bf16.msra.mxu0 %v1451
    %1581 = vmatprep.subr.bf16.mxu0 %v1456
    %1582 = vmatpush1.bf16.msra.mxu0 %v1455
    %1583 = vmatprep.subr.bf16.mxu0 %v1460
    %1584 = vmatpush1.bf16.msra.mxu0 %v1459
    %1585 = vmatprep.subr.bf16.mxu0 %v1464
    %1586 = vmatpush1.bf16.msra.mxu0 %v1463
    %1587 = vmatprep.subr.bf16.mxu0 %v1468
    %1588 = vmatpush1.bf16.msra.mxu0 %v1467
    %1589 = vmatprep.subr.bf16.mxu0 %v1472
    %1590 = vmatpush1.bf16.msra.mxu0 %v1471
    %1591 = vmatprep.subr.bf16.mxu0 %v1476
    %1592 = vmatpush1.bf16.msra.mxu0 %v1475
    %1593 = vmatprep.subr.bf16.mxu0 %v1480
    %1594 = vmatpush1.bf16.msra.mxu0 %v1479
    %1595 = vmatprep.subr.bf16.mxu0 %v1484
    %1596 = vmatpush1.bf16.msra.mxu0 %v1483
    %1597 = vmatprep.subr.bf16.mxu0 %v1488
    %1598 = vmatpush1.bf16.msra.mxu0 %v1487
    %1599 = vmatprep.subr.bf16.mxu0 %v1492
    %1600 = vmatpush1.bf16.msra.mxu0 %v1491
    %1601 = vmatprep.subr.bf16.mxu0 %v1496
    %1602 = vmatpush1.bf16.msra.mxu0 %v1495
    %1603 = vmatprep.subr.bf16.mxu0 %v1500
    %1604 = vmatpush1.bf16.msra.mxu0 %v1499
    %1605 = vmatprep.subr.bf16.mxu0 %v1504
    %1606 = vmatpush1.bf16.msra.mxu0 %v1503
    %1607 = vmatprep.subr.bf16.mxu0 %v1508
    %1608 = vmatpush1.bf16.msra.mxu0 %v1507
    %1609 = vmatprep.subr.bf16.mxu0 %v1512
    %1610 = vmatpush1.bf16.msra.mxu0 %v1511
    %1611 = vmatprep.mubr.bf16.mxu0 %v1222
    %1612 = vmatmul.mubr.bf16.gmra.mrb[0].mxu0 %v1221
    %v1613 = vpop.f32.mrb[0].mxu0
    %v1614 = vadd.f32 %v1242, %v1613
    %v1615 = vpop.f32.mrb[0].mxu0
    %v1616 = vadd.f32 %v1246, %v1615
    %v1617 = vpop.f32.mrb[0].mxu0
    %v1618 = vadd.f32 %v1242, %v1617
    %v1619 = vpop.f32.mrb[0].mxu0
    %v1620 = vadd.f32 %v1246, %v1619
    %1621 = vmatprep.mubr.bf16.mxu0 %v1224
    %1622 = vmatmul.mubr.bf16.gmra.mrb[0].mxu0 %v1223
    %v1623 = vpop.f32.mrb[0].mxu0
    %v1624 = vadd.f32 %v1242, %v1623
    %v1625 = vpop.f32.mrb[0].mxu0
    %v1626 = vadd.f32 %v1246, %v1625
    %v1627 = vpop.f32.mrb[0].mxu0
    %v1628 = vadd.f32 %v1242, %v1627
    %v1629 = vpop.f32.mrb[0].mxu0
    %v1630 = vadd.f32 %v1246, %v1629
    %1631 = vmatprep.mubr.bf16.mxu0 %v1226
    %1632 = vmatmul.mubr.bf16.gmra.mrb[0].mxu0 %v1225
    %v1633 = vpop.f32.mrb[0].mxu0
    %v1634 = vadd.f32 %v1242, %v1633
    %v1635 = vpop.f32.mrb[0].mxu0
    %v1636 = vadd.f32 %v1246, %v1635
    %v1637 = vpop.f32.mrb[0].mxu0
    %v1638 = vadd.f32 %v1242, %v1637
    %v1639 = vpop.f32.mrb[0].mxu0
    %v1640 = vadd.f32 %v1246, %v1639
    %1641 = vmatprep.mubr.bf16.mxu0 %v1228
    %1642 = vmatmul.mubr.bf16.gmra.mrb[0].mxu0 %v1227
    %v1643 = vpop.f32.mrb[0].mxu0
    %v1644 = vadd.f32 %v1242, %v1643
    %v1645 = vpop.f32.mrb[0].mxu0
    %v1646 = vadd.f32 %v1246, %v1645
    %v1647 = vpop.f32.mrb[0].mxu0
    %v1648 = vadd.f32 %v1242, %v1647
    %v1649 = vpop.f32.mrb[0].mxu0
    %v1650 = vadd.f32 %v1246, %v1649
    %1651 = vmatprep.mubr.bf16.mxu0 %v1230
    %1652 = vmatmul.mubr.bf16.gmra.mrb[0].mxu0 %v1229
    %v1653 = vpop.f32.mrb[0].mxu0
    %v1654 = vadd.f32 %v1242, %v1653
    %v1655 = vpop.f32.mrb[0].mxu0
    %v1656 = vadd.f32 %v1246, %v1655
    %v1657 = vpop.f32.mrb[0].mxu0
    %v1658 = vadd.f32 %v1242, %v1657
    %v1659 = vpop.f32.mrb[0].mxu0
    %v1660 = vadd.f32 %v1246, %v1659
    %1661 = vmatprep.mubr.bf16.mxu0 %v1232
    %1662 = vmatmul.mubr.bf16.gmra.mrb[0].mxu0 %v1231
    %v1663 = vpop.f32.mrb[0].mxu0
    %v1664 = vadd.f32 %v1242, %v1663
    %v1665 = vpop.f32.mrb[0].mxu0
    %v1666 = vadd.f32 %v1246, %v1665
    %v1667 = vpop.f32.mrb[0].mxu0
    %v1668 = vadd.f32 %v1242, %v1667
    %v1669 = vpop.f32.mrb[0].mxu0
    %v1670 = vadd.f32 %v1246, %v1669
    %1671 = vmatprep.mubr.bf16.mxu0 %v1234
    %1672 = vmatmul.mubr.bf16.gmra.mrb[0].mxu0 %v1233
    %v1673 = vpop.f32.mrb[0].mxu0
    %v1674 = vadd.f32 %v1242, %v1673
    %v1675 = vpop.f32.mrb[0].mxu0
    %v1676 = vadd.f32 %v1246, %v1675
    %v1677 = vpop.f32.mrb[0].mxu0
    %v1678 = vadd.f32 %v1242, %v1677
    %v1679 = vpop.f32.mrb[0].mxu0
    %v1680 = vadd.f32 %v1246, %v1679
    %1681 = vmatprep.mubr.bf16.mxu0 %v1236
    %1682 = vmatmul.mubr.bf16.gmra.mrb[0].mxu0 %v1235
    %v1683 = vpop.f32.mrb[0].mxu0
    %v1684 = vadd.f32 %v1242, %v1683
    %v1685 = vpop.f32.mrb[0].mxu0
    %v1686 = vadd.f32 %v1246, %v1685
    %v1687 = vpop.f32.mrb[0].mxu0
    %v1688 = vadd.f32 %v1242, %v1687
    %v1689 = vpop.f32.mrb[0].mxu0
    %v1690 = vadd.f32 %v1246, %v1689
    %1691 = vdwg.mxu0
    %1692 = vmatprep.subr.bf16.mxu0 %v1454
    %1693 = vmatpush1.bf16.msra.mxu0 %v1453
    %1694 = vmatprep.subr.bf16.mxu0 %v1458
    %1695 = vmatpush1.bf16.msra.mxu0 %v1457
    %1696 = vmatprep.subr.bf16.mxu0 %v1462
    %1697 = vmatpush1.bf16.msra.mxu0 %v1461
    %1698 = vmatprep.subr.bf16.mxu0 %v1466
    %1699 = vmatpush1.bf16.msra.mxu0 %v1465
    %1700 = vmatprep.subr.bf16.mxu0 %v1470
    %1701 = vmatpush1.bf16.msra.mxu0 %v1469
    %1702 = vmatprep.subr.bf16.mxu0 %v1474
    %1703 = vmatpush1.bf16.msra.mxu0 %v1473
    %1704 = vmatprep.subr.bf16.mxu0 %v1478
    %1705 = vmatpush1.bf16.msra.mxu0 %v1477
    %1706 = vmatprep.subr.bf16.mxu0 %v1482
    %1707 = vmatpush1.bf16.msra.mxu0 %v1481
    %1708 = vmatprep.subr.bf16.mxu0 %v1486
    %1709 = vmatpush1.bf16.msra.mxu0 %v1485
    %1710 = vmatprep.subr.bf16.mxu0 %v1490
    %1711 = vmatpush1.bf16.msra.mxu0 %v1489
    %1712 = vmatprep.subr.bf16.mxu0 %v1494
    %1713 = vmatpush1.bf16.msra.mxu0 %v1493
    %1714 = vmatprep.subr.bf16.mxu0 %v1498
    %1715 = vmatpush1.bf16.msra.mxu0 %v1497
    %1716 = vmatprep.subr.bf16.mxu0 %v1502
    %1717 = vmatpush1.bf16.msra.mxu0 %v1501
    %1718 = vmatprep.subr.bf16.mxu0 %v1506
    %1719 = vmatpush1.bf16.msra.mxu0 %v1505
    %1720 = vmatprep.subr.bf16.mxu0 %v1510
    %1721 = vmatpush1.bf16.msra.mxu0 %v1509
    %1722 = vmatprep.subr.bf16.mxu0 %v1514
    %1723 = vmatpush1.bf16.msra.mxu0 %v1513
    %1724 = vmatprep.mubr.bf16.mxu0 %v1222
    %1725 = vmatmul.mubr.bf16.gmra.mrb[0].mxu0 %v1221
    %v1726 = vpop.f32.mrb[0].mxu0
    %v1727 = vadd.f32 %v1250, %v1726
    %v1728 = vpop.f32.mrb[0].mxu0
    %v1729 = vadd.f32 %v1254, %v1728
    %v1730 = vpop.f32.mrb[0].mxu0
    %v1731 = vadd.f32 %v1250, %v1730
    %v1732 = vpop.f32.mrb[0].mxu0
    %v1733 = vadd.f32 %v1254, %v1732
    %1734 = vmatprep.mubr.bf16.mxu0 %v1224
    %1735 = vmatmul.mubr.bf16.gmra.mrb[0].mxu0 %v1223
    %v1736 = vpop.f32.mrb[0].mxu0
    %v1737 = vadd.f32 %v1250, %v1736
    %v1738 = vpop.f32.mrb[0].mxu0
    %v1739 = vadd.f32 %v1254, %v1738
    %v1740 = vpop.f32.mrb[0].mxu0
    %v1741 = vadd.f32 %v1250, %v1740
    %v1742 = vpop.f32.mrb[0].mxu0
    %v1743 = vadd.f32 %v1254, %v1742
    %1744 = vmatprep.mubr.bf16.mxu0 %v1226
    %1745 = vmatmul.mubr.bf16.gmra.mrb[0].mxu0 %v1225
    %v1746 = vpop.f32.mrb[0].mxu0
    %v1747 = vadd.f32 %v1250, %v1746
    %v1748 = vpop.f32.mrb[0].mxu0
    %v1749 = vadd.f32 %v1254, %v1748
    %v1750 = vpop.f32.mrb[0].mxu0
    %v1751 = vadd.f32 %v1250, %v1750
    %v1752 = vpop.f32.mrb[0].mxu0
    %v1753 = vadd.f32 %v1254, %v1752
    %1754 = vmatprep.mubr.bf16.mxu0 %v1228
    %1755 = vmatmul.mubr.bf16.gmra.mrb[0].mxu0 %v1227
    %v1756 = vpop.f32.mrb[0].mxu0
    %v1757 = vadd.f32 %v1250, %v1756
    %v1758 = vpop.f32.mrb[0].mxu0
    %v1759 = vadd.f32 %v1254, %v1758
    %v1760 = vpop.f32.mrb[0].mxu0
    %v1761 = vadd.f32 %v1250, %v1760
    %v1762 = vpop.f32.mrb[0].mxu0
    %v1763 = vadd.f32 %v1254, %v1762
    %1764 = vmatprep.mubr.bf16.mxu0 %v1230
    %1765 = vmatmul.mubr.bf16.gmra.mrb[0].mxu0 %v1229
    %v1766 = vpop.f32.mrb[0].mxu0
    %v1767 = vadd.f32 %v1250, %v1766
    %v1768 = vpop.f32.mrb[0].mxu0
    %v1769 = vadd.f32 %v1254, %v1768
    %v1770 = vpop.f32.mrb[0].mxu0
    %v1771 = vadd.f32 %v1250, %v1770
    %v1772 = vpop.f32.mrb[0].mxu0
    %v1773 = vadd.f32 %v1254, %v1772
    %1774 = vmatprep.mubr.bf16.mxu0 %v1232
    %1775 = vmatmul.mubr.bf16.gmra.mrb[0].mxu0 %v1231
    %v1776 = vpop.f32.mrb[0].mxu0
    %v1777 = vadd.f32 %v1250, %v1776
    %v1778 = vpop.f32.mrb[0].mxu0
    %v1779 = vadd.f32 %v1254, %v1778
    %v1780 = vpop.f32.mrb[0].mxu0
    %v1781 = vadd.f32 %v1250, %v1780
    %v1782 = vpop.f32.mrb[0].mxu0
    %v1783 = vadd.f32 %v1254, %v1782
    %1784 = vmatprep.mubr.bf16.mxu0 %v1234
    %1785 = vmatmul.mubr.bf16.gmra.mrb[0].mxu0 %v1233
    %v1786 = vpop.f32.mrb[0].mxu0
    %v1787 = vadd.f32 %v1250, %v1786
    %v1788 = vpop.f32.mrb[0].mxu0
    %v1789 = vadd.f32 %v1254, %v1788
    %v1790 = vpop.f32.mrb[0].mxu0
    %v1791 = vadd.f32 %v1250, %v1790
    %v1792 = vpop.f32.mrb[0].mxu0
    %v1793 = vadd.f32 %v1254, %v1792
    %1794 = vmatprep.mubr.bf16.mxu0 %v1236
    %1795 = vmatmul.mubr.bf16.gmra.mrb[0].mxu0 %v1235
    %v1796 = vpop.f32.mrb[0].mxu0
    %v1797 = vadd.f32 %v1250, %v1796
    %v1798 = vpop.f32.mrb[0].mxu0
    %v1799 = vadd.f32 %v1254, %v1798
    %v1800 = vpop.f32.mrb[0].mxu0
    %v1801 = vadd.f32 %v1250, %v1800
    %v1802 = vpop.f32.mrb[0].mxu0
    %v1803 = vadd.f32 %v1254, %v1802
    %1804 = vdwg.mxu0
    %v1805 = vmax.f32 %v1614, 0.0
    %v1806 = vmax.f32 %v1616, 0.0
    %v1807 = vmax.f32 %v1727, 0.0
    %v1808 = vmax.f32 %v1729, 0.0
    %v1809 = vmax.f32 %v1618, 0.0
    %v1810 = vmax.f32 %v1620, 0.0
    %v1811 = vmax.f32 %v1731, 0.0
    %v1812 = vmax.f32 %v1733, 0.0
    %v1813 = vmax.f32 %v1624, 0.0
    %v1814 = vmax.f32 %v1626, 0.0
    %v1815 = vmax.f32 %v1737, 0.0
    %v1816 = vmax.f32 %v1739, 0.0
    %v1817 = vmax.f32 %v1628, 0.0
    %v1818 = vmax.f32 %v1630, 0.0
    %v1819 = vmax.f32 %v1741, 0.0
    %v1820 = vmax.f32 %v1743, 0.0
    %v1821 = vmax.f32 %v1634, 0.0
    %v1822 = vmax.f32 %v1636, 0.0
    %v1823 = vmax.f32 %v1747, 0.0
    %v1824 = vmax.f32 %v1749, 0.0
    %v1825 = vmax.f32 %v1638, 0.0
    %v1826 = vmax.f32 %v1640, 0.0
    %v1827 = vmax.f32 %v1751, 0.0
    %v1828 = vmax.f32 %v1753, 0.0
    %v1829 = vmax.f32 %v1644, 0.0
    %v1830 = vmax.f32 %v1646, 0.0
    %v1831 = vmax.f32 %v1757, 0.0
    %v1832 = vmax.f32 %v1759, 0.0
    %v1833 = vmax.f32 %v1648, 0.0
    %v1834 = vmax.f32 %v1650, 0.0
    %v1835 = vmax.f32 %v1761, 0.0
    %v1836 = vmax.f32 %v1763, 0.0
    %v1837 = vmax.f32 %v1654, 0.0
    %v1838 = vmax.f32 %v1656, 0.0
    %v1839 = vmax.f32 %v1767, 0.0
    %v1840 = vmax.f32 %v1769, 0.0
    %v1841 = vmax.f32 %v1658, 0.0
    %v1842 = vmax.f32 %v1660, 0.0
    %v1843 = vmax.f32 %v1771, 0.0
    %v1844 = vmax.f32 %v1773, 0.0
    %v1845 = vmax.f32 %v1664, 0.0
    %v1846 = vmax.f32 %v1666, 0.0
    %v1847 = vmax.f32 %v1777, 0.0
    %v1848 = vmax.f32 %v1779, 0.0
    %v1849 = vmax.f32 %v1668, 0.0
    %v1850 = vmax.f32 %v1670, 0.0
    %v1851 = vmax.f32 %v1781, 0.0
    %v1852 = vmax.f32 %v1783, 0.0
    %v1853 = vmax.f32 %v1674, 0.0
    %v1854 = vmax.f32 %v1676, 0.0
    %v1855 = vmax.f32 %v1787, 0.0
    %v1856 = vmax.f32 %v1789, 0.0
    %v1857 = vmax.f32 %v1678, 0.0
    %v1858 = vmax.f32 %v1680, 0.0
    %v1859 = vmax.f32 %v1791, 0.0
    %v1860 = vmax.f32 %v1793, 0.0
    %v1861 = vmax.f32 %v1684, 0.0
    %v1862 = vmax.f32 %v1686, 0.0
    %v1863 = vmax.f32 %v1797, 0.0
    %v1864 = vmax.f32 %v1799, 0.0
    %v1865 = vmax.f32 %v1688, 0.0
    %v1866 = vmax.f32 %v1690, 0.0
    %v1867 = vmax.f32 %v1801, 0.0
    %v1868 = vmax.f32 %v1803, 0.0
    %v1869 = vmax.f32 %v1805, %v1809
    %v1870 = vmax.f32 %v1869, %v1813
    %v1871 = vmax.f32 %v1870, %v1817
    %v1872 = vmax.f32 %v1871, %v1821
    %v1873 = vmax.f32 %v1872, %v1825
    %v1874 = vmax.f32 %v1873, %v1829
    %v1875 = vmax.f32 %v1874, %v1833
    %v1876 = vrot.slane %v1875, 4
    %v1877 = vmax.f32 %v1875, %v1876
    %v1878 = vrot.slane %v1877, 2
    %v1879 = vmax.f32 %v1877, %v1878
    %v1880 = vrot.slane %v1879, 1
    %v1881 = vmax.f32 %v1879, %v1880
    %v1882 = vmax.f32 %v1806, %v1810
    %v1883 = vmax.f32 %v1882, %v1814
    %v1884 = vmax.f32 %v1883, %v1818
    %v1885 = vmax.f32 %v1884, %v1822
    %v1886 = vmax.f32 %v1885, %v1826
    %v1887 = vmax.f32 %v1886, %v1830
    %v1888 = vmax.f32 %v1887, %v1834
    %v1889 = vrot.slane %v1888, 4
    %v1890 = vmax.f32 %v1888, %v1889
    %v1891 = vrot.slane %v1890, 2
    %v1892 = vmax.f32 %v1890, %v1891
    %v1893 = vrot.slane %v1892, 1
    %v1894 = vmax.f32 %v1892, %v1893
    %v1895 = vmax.f32 %v1807, %v1811
    %v1896 = vmax.f32 %v1895, %v1815
    %v1897 = vmax.f32 %v1896, %v1819
    %v1898 = vmax.f32 %v1897, %v1823
    %v1899 = vmax.f32 %v1898, %v1827
    %v1900 = vmax.f32 %v1899, %v1831
    %v1901 = vmax.f32 %v1900, %v1835
    %v1902 = vrot.slane %v1901, 4
    %v1903 = vmax.f32 %v1901, %v1902
    %v1904 = vrot.slane %v1903, 2
    %v1905 = vmax.f32 %v1903, %v1904
    %v1906 = vrot.slane %v1905, 1
    %v1907 = vmax.f32 %v1905, %v1906
    %v1908 = vmax.f32 %v1808, %v1812
    %v1909 = vmax.f32 %v1908, %v1816
    %v1910 = vmax.f32 %v1909, %v1820
    %v1911 = vmax.f32 %v1910, %v1824
    %v1912 = vmax.f32 %v1911, %v1828
    %v1913 = vmax.f32 %v1912, %v1832
    %v1914 = vmax.f32 %v1913, %v1836
    %v1915 = vrot.slane %v1914, 4
    %v1916 = vmax.f32 %v1914, %v1915
    %v1917 = vrot.slane %v1916, 2
    %v1918 = vmax.f32 %v1916, %v1917
    %v1919 = vrot.slane %v1918, 1
    %v1920 = vmax.f32 %v1918, %v1919
    %v1921 = vmax.f32 %v1837, %v1841
    %v1922 = vmax.f32 %v1921, %v1845
    %v1923 = vmax.f32 %v1922, %v1849
    %v1924 = vmax.f32 %v1923, %v1853
    %v1925 = vmax.f32 %v1924, %v1857
    %v1926 = vmax.f32 %v1925, %v1861
    %v1927 = vmax.f32 %v1926, %v1865
    %v1928 = vrot.slane %v1927, 4
    %v1929 = vmax.f32 %v1927, %v1928
    %v1930 = vrot.slane %v1929, 2
    %v1931 = vmax.f32 %v1929, %v1930
    %v1932 = vrot.slane %v1931, 1
    %v1933 = vmax.f32 %v1931, %v1932
    %v1934 = vmax.f32 %v1838, %v1842
    %v1935 = vmax.f32 %v1934, %v1846
    %v1936 = vmax.f32 %v1935, %v1850
    %v1937 = vmax.f32 %v1936, %v1854
    %v1938 = vmax.f32 %v1937, %v1858
    %v1939 = vmax.f32 %v1938, %v1862
    %v1940 = vmax.f32 %v1939, %v1866
    %v1941 = vrot.slane %v1940, 4
    %v1942 = vmax.f32 %v1940, %v1941
    %v1943 = vrot.slane %v1942, 2
    %v1944 = vmax.f32 %v1942, %v1943
    %v1945 = vrot.slane %v1944, 1
    %v1946 = vmax.f32 %v1944, %v1945
    %v1947 = vmax.f32 %v1839, %v1843
    %v1948 = vmax.f32 %v1947, %v1847
    %v1949 = vmax.f32 %v1948, %v1851
    %v1950 = vmax.f32 %v1949, %v1855
    %v1951 = vmax.f32 %v1950, %v1859
    %v1952 = vmax.f32 %v1951, %v1863
    %v1953 = vmax.f32 %v1952, %v1867
    %v1954 = vrot.slane %v1953, 4
    %v1955 = vmax.f32 %v1953, %v1954
    %v1956 = vrot.slane %v1955, 2
    %v1957 = vmax.f32 %v1955, %v1956
    %v1958 = vrot.slane %v1957, 1
    %v1959 = vmax.f32 %v1957, %v1958
    %v1960 = vmax.f32 %v1840, %v1844
    %v1961 = vmax.f32 %v1960, %v1848
    %v1962 = vmax.f32 %v1961, %v1852
    %v1963 = vmax.f32 %v1962, %v1856
    %v1964 = vmax.f32 %v1963, %v1860
    %v1965 = vmax.f32 %v1964, %v1864
    %v1966 = vmax.f32 %v1965, %v1868
    %v1967 = vrot.slane %v1966, 4
    %v1968 = vmax.f32 %v1966, %v1967
    %v1969 = vrot.slane %v1968, 2
    %v1970 = vmax.f32 %v1968, %v1969
    %v1971 = vrot.slane %v1970, 1
    %v1972 = vmax.f32 %v1970, %v1971
    %p1973 = scmp.eq.s32.totalorder 0, 0
    // Predicated region
    $region86: #{autoencoder_forward.2} parent=1 // pred_check
      %p1974 = pneg %p1973
    $region87: #{autoencoder_forward.2} parent=1 // pred_check_branch
      %1976 = sbr.rel (%p1974) target = $region89
    $region88: #{autoencoder_forward.2} parent=1 // pred_region
      %v1985 = vcombine.low %v1881, %v1894
      %v1986 = vcombine.low %v1907, %v1920
      %v1988 = vunpack.c.l.s4 1983009808
      %v1989 = vunpack.c.0.s8 %v1988
      %v1990 = vlaneseq
      %v1991 = vshrl.u32 %v1990, 7
      %v1992 = vsub.s32 %v1989, %v1991
      %v1993 = vrot.slane %v1985, %v1992
      %v1995 = vunpack.c.l.s4 1983009808
      %v1996 = vunpack.c.0.s8 %v1995
      %v1997 = vlaneseq
      %v1998 = vshrl.u32 %v1997, 7
      %v1999 = vsub.s32 %v1996, %v1998
      %v2000 = vrot.slane %v1986, %v1999
      %v2001 = vcombine.low %v1993, %v2000
      %v2002 = vcombine.low %v1933, %v1946
      %v2003 = vcombine.low %v1959, %v1972
      %v2005 = vunpack.c.l.s4 1983009808
      %v2006 = vunpack.c.0.s8 %v2005
      %v2007 = vlaneseq
      %v2008 = vshrl.u32 %v2007, 7
      %v2009 = vsub.s32 %v2006, %v2008
      %v2010 = vrot.slane %v2002, %v2009
      %v2012 = vunpack.c.l.s4 1983009808
      %v2013 = vunpack.c.0.s8 %v2012
      %v2014 = vlaneseq
      %v2015 = vshrl.u32 %v2014, 7
      %v2016 = vsub.s32 %v2013, %v2015
      %v2017 = vrot.slane %v2003, %v2016
      %v2018 = vcombine.low %v2010, %v2017
      %vm2019 = vcmask 1044484
      %v2020 = vsel %vm2019, %v2001, %v2001
      %vm2021 = vcmask 1046534
      %v2022 = vsel %vm2021, %v2001, %v2020
      %v2023 = vrot.slane %v2018, 7
      %vm2024 = vcmask 1041409
      %v2025 = vsel %vm2024, %v2023, %v2022
      %vm2026 = vcmask 1043459
      %v2027 = vsel %vm2026, %v2023, %v2025
      %vm2028 = vcmask 1045509
      %v2029 = vsel %vm2028, %v2023, %v2027
      %vm2030 = vcmask 1047559
      %v2031 = vsel %vm2030, %v2023, %v2029
      %2033 = vst [vmem:[%s11] sm:$0xff] %v2031
    $region89: #{autoencoder_forward.2} parent=1 // pred_fallthru
      _
    %p2034 = scmp.gt.s32.totalorder 0, 0
    // Predicated region
    $region90: #{autoencoder_forward.2} parent=1 // pred_check
      %p2035 = pneg %p2034
    $region91: #{autoencoder_forward.2} parent=1 // pred_check_branch
      %2037 = sbr.rel (%p2035) target = $region93
    $region92: #{autoencoder_forward.2} parent=1 // pred_region
      %v2038 = vld [vmem:[%s11] sm:$0xff]
      %v2047 = vcombine.low %v1881, %v1894
      %v2048 = vcombine.low %v1907, %v1920
      %v2050 = vunpack.c.l.s4 1983009808
      %v2051 = vunpack.c.0.s8 %v2050
      %v2052 = vlaneseq
      %v2053 = vshrl.u32 %v2052, 7
      %v2054 = vsub.s32 %v2051, %v2053
      %v2055 = vrot.slane %v2047, %v2054
      %v2057 = vunpack.c.l.s4 1983009808
      %v2058 = vunpack.c.0.s8 %v2057
      %v2059 = vlaneseq
      %v2060 = vshrl.u32 %v2059, 7
      %v2061 = vsub.s32 %v2058, %v2060
      %v2062 = vrot.slane %v2048, %v2061
      %v2063 = vcombine.low %v2055, %v2062
      %v2064 = vcombine.low %v1933, %v1946
      %v2065 = vcombine.low %v1959, %v1972
      %v2067 = vunpack.c.l.s4 1983009808
      %v2068 = vunpack.c.0.s8 %v2067
      %v2069 = vlaneseq
      %v2070 = vshrl.u32 %v2069, 7
      %v2071 = vsub.s32 %v2068, %v2070
      %v2072 = vrot.slane %v2064, %v2071
      %v2074 = vunpack.c.l.s4 1983009808
      %v2075 = vunpack.c.0.s8 %v2074
      %v2076 = vlaneseq
      %v2077 = vshrl.u32 %v2076, 7
      %v2078 = vsub.s32 %v2075, %v2077
      %v2079 = vrot.slane %v2065, %v2078
      %v2080 = vcombine.low %v2072, %v2079
      %vm2081 = vcmask 1044484
      %v2082 = vsel %vm2081, %v2063, %v2063
      %vm2083 = vcmask 1046534
      %v2084 = vsel %vm2083, %v2063, %v2082
      %v2085 = vrot.slane %v2080, 7
      %vm2086 = vcmask 1041409
      %v2087 = vsel %vm2086, %v2085, %v2084
      %vm2088 = vcmask 1043459
      %v2089 = vsel %vm2088, %v2085, %v2087
      %vm2090 = vcmask 1045509
      %v2091 = vsel %vm2090, %v2085, %v2089
      %vm2092 = vcmask 1047559
      %v2093 = vsel %vm2092, %v2085, %v2091
      %v2095 = vmax.f32 %v2038, %v2093
      %2096 = vst [vmem:[%s11] sm:$0xff] %v2095
    $region93: #{autoencoder_forward.2} parent=1 // pred_fallthru
      _
    // Predicated region
    $region94: #{autoencoder_forward.2} parent=1 // pred_check
      _
    $region95: #{autoencoder_forward.2} parent=1 // pred_check_branch
      %2098 = sbr.rel (0) target = $region97
    $region96: #{autoencoder_forward.2} parent=1 // pred_region
      _
    $region97: #{autoencoder_forward.2} parent=1 // pred_fallthru
      _
    // Predicated region
    $region98: #{autoencoder_forward.2} parent=1 // pred_check
      _
    $region99: #{autoencoder_forward.2} parent=1 // pred_check_branch
      %2100 = sbr.rel (0) target = $region101
    $region100: #{autoencoder_forward.2} parent=1 // pred_region
      _
    $region101: #{autoencoder_forward.2} parent=1 // pred_fallthru
      _
    %2101 = vsyncpa [#allocation3], 1
    %2102 = vsyncpa [#allocation5], 1
    %2103 = vsyncpa [#allocation8], 1
    %2104 = vsyncpa [#allocation11], 1
    %2105 = vsyncpa [#allocation14], 1
    %2106 = vsyncpa [#allocation17], 1

</llo_original>
